<compile_context>
chip_gen: v7x
topology: tpu7x:2x2x1
jax: 0.10.0
libtpu: 0.0.40
codegen_flags: <defaults>
</compile_context>

<pallas_src>
import numpy as np
import jax
import jax.numpy as jnp
from jax.experimental import pallas as pl
from jax.experimental.pallas import tpu as pltpu


# ---------------- deterministic weight construction (mirrors _ClassicScaler) ----------

def kernel_cubic(zoom, phase, length=None):
    assert zoom > 0
    lower_bound = np.ceil(-2 * zoom - phase)
    higher_bound = np.floor(2 * zoom - phase)
    anchor = max(abs(lower_bound), abs(higher_bound))
    index = np.arange(-anchor + 1, anchor + 1)
    if length is not None:
        assert length >= 2 * anchor
        anchor = np.ceil(length / 2)
        index = np.arange(-anchor + 1, length - anchor + 1)
    pos = abs(index + phase) / zoom
    kernel = np.zeros(np.size(pos))
    idx = pos < 2
    kernel[idx] = -0.5 * pos[idx] ** 3 + 2.5 * pos[idx] ** 2 - 4 * pos[idx] + 2
    idx = pos < 1
    kernel[idx] = 1.5 * pos[idx] ** 3 - 2.5 * pos[idx] ** 2 + 1
    kernel = kernel * zoom / np.sum(kernel)
    return kernel


def build_weight(channels, stride):
    # Faithful to the original module (shift uses stride[0] for both axes).
    shift = (-stride[0] / 2 + 0.5, -stride[0] / 2 + 0.5)
    fh = np.asarray([kernel_cubic(stride[1], shift[1])]) / stride[1]
    fv = np.asarray([kernel_cubic(stride[0], shift[0])]) / stride[0]
    f2d = fh * fv.T
    f = np.zeros([channels, 1, f2d.shape[0] + 1, f2d.shape[1] + 1])
    for c in range(channels):
        f[c, 0, 1:, 1:] = f2d
    return f.astype(np.float32)


def _separable_taps(stride):
    """1-D vertical/horizontal taps of wfactor*weight (weight[a,b] = wv[a]*wh[b]/(sh*sw))."""
    sh, sw = int(stride[0]), int(stride[1])
    # Faithful to the module: shift uses stride[0] for BOTH axes.
    shift = (-stride[0] / 2 + 0.5, -stride[0] / 2 + 0.5)
    fv = kernel_cubic(sh, shift[0]) / sh
    fh = kernel_cubic(sw, shift[1]) / sw
    wv = np.concatenate([[0.0], sh * fv])          # length kh = weight.shape[2]
    wh = np.concatenate([[0.0], sw * fh])          # length kw = weight.shape[3]
    return wv, wh


def _band_matrix(out_len, in_len, stride, taps, crop_lo):
    """M[o, i] = taps[o + crop_lo - i*stride]  (0 outside the tap support)."""
    o = np.arange(out_len)[:, None]
    i = np.arange(in_len)[None, :]
    a = o + crop_lo - i * stride
    valid = (a >= 0) & (a < taps.size)
    return np.where(valid, taps[np.clip(a, 0, taps.size - 1)], 0.0).astype(np.float32)


def _geometry(H, W, stride):
    sh, sw = int(stride[0]), int(stride[1])
    wv, wh = _separable_taps(stride)
    kh, kw = wv.size, wh.size
    Hp, Wp = H + 2, W + 2
    vL = (2 * sh + kh) // 2
    vR = vL - sh + 1
    hU = (2 * sw + kw) // 2
    hB = hU - sw + 1
    OH = (Hp - 1) * sh + kh - vL - vR
    OW = (Wp - 1) * sw + kw - hU - hB
    V = _band_matrix(OH, Hp, sh, wv, vL)               # (OH, Hp)
    Ht = _band_matrix(OW, Wp, sw, wh, hU).T.copy()     # (Wp, OW)
    return dict(sh=sh, sw=sw, kh=kh, kw=kw, Hp=Hp, Wp=Wp, vL=vL,
                OH=OH, OW=OW, V=V, Ht=Ht)


# -------------------------------- tiling helpers ---------------------------------------

def _round_up(a, m):
    return ((a + m - 1) // m) * m


def _row_windows(OH_pad, TR, sh, kh, vL, Hp, Hp_pad):
    """KV and the 8-aligned per-row-tile input-row window starts for the vertical pass."""
    nRT = OH_pad // TR
    step = TR // sh                                    # multiple of 8 (TR % (8*sh) == 0)
    c0 = -((-(vL - kh + 1)) // sh)                     # ceil((vL - kh + 1)/sh)
    c0a = (c0 // 8) * 8                                # floor to multiple of 8
    kv_need = 8
    for it in range(nRT):
        r0 = max(0, it * step + c0a)
        imax = min(Hp - 1, (it * TR + TR - 1 + vL) // sh)
        kv_need = max(kv_need, imax - r0 + 1)
    KV = min(Hp_pad, _round_up(kv_need, 8))
    starts = np.clip(np.arange(nRT) * step + c0a, 0, Hp_pad - KV).astype(np.int64)
    return KV, starts, step, c0a


def _vmem_need(B, TR, TC, KV, Hp_pad, Wp_pad, in_bytes, tap_bytes, out_bytes):
    return (2 * B * Hp_pad * Wp_pad * in_bytes        # input plane block (double-buffered)
            + 2 * Wp_pad * TC * tap_bytes             # horizontal tap slab
            + 2 * TR * KV * tap_bytes                 # banded vertical taps
            + 2 * B * TR * TC * out_bytes             # output tile
            + Hp_pad * B * TC * 4)                    # f32 horizontal-pass scratch


def _vmem_capacity_bytes():
    try:
        info = pltpu.get_tpu_info()
        cap = getattr(info, "vmem_capacity_bytes", None)
        if cap:
            return int(cap)
    except Exception:
        pass
    return 64 << 20   # conservative default (v7x per-TensorCore VMEM)


def _pick_tiles(NC, OH, OW, Hp, Hp_pad, Wp_pad, sh, kh, vL,
                in_bytes, tap_bytes, out_bytes, budget):
    ra = 8 * sh                                        # keeps the scratch row window 8-aligned
    tr_hi = min(_round_up(OH, ra), _round_up(512, ra))
    tr_opts = list(range(ra, tr_hi + 1, ra))
    if OW <= 128:
        tc_opts = [OW]                                 # block last dim == full array dim
    else:
        tc_hi = min(_round_up(OW, 128), 1024)
        tc_opts = list(range(128, tc_hi + 1, 128))
    b_opts = [b for b in range(1, min(NC, 8) + 1) if NC % b == 0]

    best = None
    for b in b_opts:
        # v7x has two TensorCores: prefer >= 2 points on the parallel plane-block axis.
        pen = 0 if (NC == 1 or NC // b >= 2) else 1
        for tc in tc_opts:
            ow_pad = _round_up(OW, tc)
            for tr in tr_opts:
                oh_pad = _round_up(OH, tr)
                kv, _, _, _ = _row_windows(oh_pad, tr, sh, kh, vL, Hp, Hp_pad)
                need = _vmem_need(b, tr, tc, kv, Hp_pad, Wp_pad,
                                  in_bytes, tap_bytes, out_bytes)
                if need > budget:
                    continue
                steps = (NC // b) * (ow_pad // tc) * (oh_pad // tr)
                key = (pen, oh_pad * ow_pad, steps, -(b * tr * tc), need)
                if best is None or key < best[0]:
                    best = (key, (b, tr, tc))
    if best is not None:
        return best[1]
    # Fallback: smallest tiles (input plane block may still exceed the budget).
    # TODO(synk): row/column-window the input plane so 4K+ frames fit v7x's 64 MiB VMEM.
    return 1, ra, (OW if OW <= 128 else 128)


# -------------------------------- Pallas implementation --------------------------------

def classic_upscale_pallas(x, channels, stride, padding=True,
                           precision=jax.lax.Precision.DEFAULT, tiles=None):
    """Pallas-TPU equivalent of ClassicUpscale(channels, stride).forward(x, padding)."""
    N, C, H, W = x.shape
    assert C == channels
    g = _geometry(H, W, stride)
    sh, kh, vL = g["sh"], g["kh"], g["vL"]
    Hp, Wp, OH, OW = g["Hp"], g["Wp"], g["OH"], g["OW"]
    NC = N * C

    Hp_pad = _round_up(Hp, 8)       # sublane-aligned K dim of the horizontal pass
    Wp_pad = _round_up(Wp, 128)     # lane-dense input rows

    in_bytes = x.dtype.itemsize
    out_bytes = in_bytes
    tap_dtype = jnp.bfloat16 if x.dtype == jnp.bfloat16 else jnp.float32
    tap_bytes = np.dtype(tap_dtype).itemsize

    cap = _vmem_capacity_bytes()
    budget = min(max(cap // 3, 16 << 20), 48 << 20)    # ~21 MiB on v7x, ~42 MiB on v5e/v6e

    if tiles is not None:
        B, TR, TC = tiles
        assert NC % B == 0 and TR % (8 * sh) == 0 and (TC % 128 == 0 or TC >= OW)
    else:
        B, TR, TC = _pick_tiles(NC, OH, OW, Hp, Hp_pad, Wp_pad, sh, kh, vL,
                                in_bytes, tap_bytes, out_bytes, budget)

    OH_pad = _round_up(OH, TR)
    OW_pad = _round_up(OW, TC)
    KV, starts, STEP, C0A = _row_windows(OH_pad, TR, sh, kh, vL, Hp, Hp_pad)
    nRT, nCT = OH_pad // TR, OW_pad // TC
    need = _vmem_need(B, TR, TC, KV, Hp_pad, Wp_pad, in_bytes, tap_bytes, out_bytes)
    vmem_limit = int(min(int(0.9 * cap), max(32 << 20, 2 * need + (4 << 20))))

    # ---- host-side glue: 1px replication/zero pad (ReplicationPad2d / ZeroPad2d) ------
    pad_mode = "edge" if padding else "constant"
    xpad = jnp.pad(x, ((0, 0), (0, 0), (1, 1), (1, 1)), mode=pad_mode)
    xpad = jnp.pad(xpad, ((0, 0), (0, 0), (0, Hp_pad - Hp), (0, Wp_pad - Wp)))
    x2 = xpad.reshape(NC, Hp_pad, Wp_pad)

    # ---- tap matrices (alignment padding rows/cols are exactly zero) ------------------
    ht_pad = np.zeros((Wp_pad, OW_pad), dtype=np.float32)
    ht_pad[:Wp, :OW] = g["Ht"]
    v_pad = np.zeros((OH_pad, Hp_pad), dtype=np.float32)
    v_pad[:OH, :Hp] = g["V"]
    v_band = np.zeros((nRT, TR, KV), dtype=np.float32)
    for it in range(nRT):
        s = int(starts[it])
        rows = v_pad[it * TR:(it + 1) * TR]
        outside = np.ones(Hp_pad, dtype=bool)
        outside[s:s + KV] = False
        assert not np.any(rows[:, outside]), "vertical band window misses nonzero taps"
        v_band[it] = rows[:, s:s + KV]
    ht = jnp.asarray(ht_pad, dtype=tap_dtype)
    vb = jnp.asarray(v_band, dtype=tap_dtype)

    HI = Hp_pad - KV

    def upscale_kernel(x_ref, ht_ref, vb_ref, o_ref, t_ref):
        # x_ref : (B, Hp_pad, Wp_pad)   input planes (original dtype, no astype pass)
        # ht_ref: (Wp_pad, TC)          horizontal taps for this column tile
        # vb_ref: (1, TR, KV)           banded vertical taps for this row tile
        # o_ref : (B, TR, TC)           output tile
        # t_ref : (Hp_pad, B*TC) f32    horizontal-pass scratch, cached across row tiles
        it = pl.program_id(2)

        @pl.when(it == 0)      # new (plane block, column tile): redo the horizontal pass
        def _():
            hmat = ht_ref[...]
            for b in range(B):
                t_ref[:, b * TC:(b + 1) * TC] = jnp.dot(
                    x_ref[b], hmat,
                    preferred_element_type=jnp.float32, precision=precision)

        # Vertical pass: banded taps, ONE fused (TR, KV) @ (KV, B*TC) MXU matmul.
        if KV == Hp_pad:
            tw = t_ref[...]
        else:
            rstart = jnp.clip(it * STEP + C0A, 0, HI)
            rstart = pl.multiple_of(rstart, 8)
            tw = t_ref[pl.ds(rstart, KV), :]
        out = jnp.dot(vb_ref[0], tw,
                      preferred_element_type=jnp.float32, precision=precision)
        for b in range(B):
            o_ref[b] = out[:, b * TC:(b + 1) * TC].astype(o_ref.dtype)

    flops = 2 * NC * (Hp_pad * Wp_pad * OW_pad + OH_pad * KV * OW_pad)
    bytes_accessed = (NC * Hp_pad * Wp_pad * in_bytes
                      + NC * OH_pad * OW_pad * out_bytes
                      + Wp_pad * OW_pad * tap_bytes + nRT * TR * KV * tap_bytes)
    cost = pl.CostEstimate(flops=int(flops), transcendentals=0,
                           bytes_accessed=int(bytes_accessed))

    grid = (NC // B, nCT, nRT)
    out = pl.pallas_call(
        upscale_kernel,
        out_shape=jax.ShapeDtypeStruct((NC, OH_pad, OW_pad), x.dtype),
        grid_spec=pltpu.PrefetchScalarGridSpec(
            num_scalar_prefetch=0,
            grid=grid,
            in_specs=[
                pl.BlockSpec((B, Hp_pad, Wp_pad), lambda ib, ic, it: (ib, 0, 0)),
                pl.BlockSpec((Wp_pad, TC), lambda ib, ic, it: (0, ic)),
                pl.BlockSpec((1, TR, KV), lambda ib, ic, it: (it, 0, 0)),
            ],
            out_specs=pl.BlockSpec((B, TR, TC), lambda ib, ic, it: (ib, it, ic)),
            scratch_shapes=[pltpu.VMEM((Hp_pad, B * TC), jnp.float32)],
        ),
        compiler_params=pltpu.CompilerParams(
            dimension_semantics=("parallel", "parallel", "arbitrary"),
            vmem_limit_bytes=vmem_limit,
        ),
        cost_estimate=cost,
    )(x2, ht, vb)
    return out[:, :OH, :OW].reshape(N, C, OH, OW)


# -------------------------- pure-JAX reference (for verification) ----------------------

def classic_upscale_ref(x, channels, stride, padding=True):
    N, C, H, W = x.shape
    sh, sw = int(stride[0]), int(stride[1])
    f = jnp.asarray(build_weight(channels, stride))
    kh, kw = f.shape[2], f.shape[3]
    vL = (2 * sh + kh) // 2
    vR = vL - sh + 1
    hU = (2 * sw + kw) // 2
    hB = hU - sw + 1
    wfactor = float(sh * sw)
    pad_mode = "edge" if padding else "constant"
    xpad = jnp.pad(x, ((0, 0), (0, 0), (1, 1), (1, 1)), mode=pad_mode)
    wf = (wfactor * f)[:, :, ::-1, ::-1]
    out = jax.lax.conv_general_dilated(
        xpad, wf,
        window_strides=(1, 1),
        padding=[(kh - 1, kh - 1), (kw - 1, kw - 1)],
        lhs_dilation=(sh, sw),
        rhs_dilation=(1, 1),
        dimension_numbers=("NCHW", "OIHW", "NCHW"),
        feature_group_count=C,
        precision=jax.lax.Precision.HIGHEST,
    )
    return out[:, :, vL:out.shape[2] - vR, hU:out.shape[3] - hB]


if __name__ == "__main__":
    key = jax.random.PRNGKey(0)
    DEF = jax.lax.Precision.DEFAULT
    HIGH = jax.lax.Precision.HIGHEST

    def check(y, y_ref, atol, rtol):
        assert y.shape == y_ref.shape, (y.shape, y_ref.shape)
        err = float(jnp.max(jnp.abs(y - y_ref)))
        assert bool(jnp.allclose(y, y_ref, atol=atol, rtol=rtol)), err

    k1, k2, k3 = jax.random.split(key, 3)

    # --- Test A: small frame, symmetric stride, both padding modes -----------------
    N, C, H, W = 2, 4, 16, 16
    stride = (2, 2)
    x = jax.random.uniform(k1, (N, C, H, W), dtype=jnp.float32)
    yr_t = classic_upscale_ref(x, C, stride, True)
    yr_f = classic_upscale_ref(x, C, stride, False)
    # structural check at full MXU precision
    y = jax.block_until_ready(classic_upscale_pallas(x, C, stride, True, precision=HIGH))
    check(y, yr_t, 1e-3, 1e-3)
    # perf configuration: single-pass bf16 MXU rounding expected -> looser tolerance
    y = jax.block_until_ready(classic_upscale_pallas(x, C, stride, True, precision=DEF))
    check(y, yr_t, 3e-2, 3e-2)
    assert float(jnp.mean(jnp.abs(y - yr_t))) < 5e-3
    y = jax.block_until_ready(classic_upscale_pallas(x, C, stride, False, precision=DEF))
    check(y, yr_f, 3e-2, 3e-2)
    assert y.shape == (N, C, H * stride[0], W * stride[1])

    # --- Test B: asymmetric stride ---------------------------------------------------
    stride = (3, 2)
    x = jax.random.uniform(k2, (1, 2, 20, 24), dtype=jnp.float32)
    y = jax.block_until_ready(classic_upscale_pallas(x, 2, stride, True, precision=DEF))
    check(y, classic_upscale_ref(x, 2, stride, True), 3e-2, 3e-2)
    assert y.shape == (1, 2, 60, 48)

    # --- Test C: multi row/col tiles, padded+cropped output, banded vertical window --
    stride = (2, 2)
    x = jax.random.uniform(k3, (1, 1, 72, 300), dtype=jnp.float32)
    yr = classic_upscale_ref(x, 1, stride, True)
    y = jax.block_until_ready(
        classic_upscale_pallas(x, 1, stride, True, precision=HIGH, tiles=(1, 64, 256)))
    check(y, yr, 1e-3, 1e-3)
    y = jax.block_until_ready(
        classic_upscale_pallas(x, 1, stride, True, precision=DEF, tiles=(1, 64, 256)))
    check(y, yr, 3e-2, 3e-2)

    print("KERNEL_OK")
</pallas_src>

<mosaic_0001>
module attributes {stable_mosaic.version = 11 : i64} {
  func.func @upscale_kernel(%arg0: i32, %arg1: i32, %arg2: i32, %arg3: memref<4x24x128xf32, #tpu.memory_space<vmem>>, %arg4: memref<128x32xf32, #tpu.memory_space<vmem>>, %arg5: memref<1x32x24xf32, #tpu.memory_space<vmem>>, %arg6: memref<4x32x32xf32, #tpu.memory_space<vmem>>, %arg7: memref<24x128xf32, #tpu.memory_space<vmem>>) attributes {dimension_semantics = [#tpu.dimension_semantics<parallel>, #tpu.dimension_semantics<parallel>, #tpu.dimension_semantics<arbitrary>], iteration_bounds = array<i64: 2, 1, 1>, scalar_prefetch = 0 : i64, scratch_operands = 1 : i64, tpu.core_type = #tpu.core_type<tc>, window_params = [{transform_indices = @transform_0, window_bounds = array<i64: 4, 24, 128>}, {transform_indices = @transform_1, window_bounds = array<i64: 128, 32>}, {transform_indices = @transform_2, window_bounds = array<i64: 1, 32, 24>}, {transform_indices = @transform_3, window_bounds = array<i64: 4, 32, 32>}]} {
    %c0_i32 = arith.constant 0 : i32
    %0 = arith.cmpi eq, %arg2, %c0_i32 : i32
    %1 = arith.extui %0 : i1 to i32
    %c0_i32_0 = arith.constant 0 : i32
    %2 = arith.cmpi ne, %1, %c0_i32_0 : i32
    scf.if %2 {
      %c0_14 = arith.constant 0 : index
      %c0_15 = arith.constant 0 : index
      %23 = vector.load %arg4[%c0_14, %c0_15] : memref<128x32xf32, #tpu.memory_space<vmem>>, vector<128x32xf32>
      %c0_16 = arith.constant 0 : index
      %c0_17 = arith.constant 0 : index
      %c0_18 = arith.constant 0 : index
      %24 = vector.load %arg3[%c0_16, %c0_17, %c0_18] : memref<4x24x128xf32, #tpu.memory_space<vmem>>, vector<1x24x128xf32>
      %25 = vector.shape_cast %24 : vector<1x24x128xf32> to vector<24x128xf32>
      %cst_19 = arith.constant dense<0.000000e+00> : vector<24x32xf32>
      %26 = tpu.matmul %25, %23, %cst_19 {dimension_numbers = #tpu.dot_dimension_numbers<[1], [0], [0], [1], [0, 0, 1, 1], [], []>, precision = #tpu.contract_precision<fp32>} : vector<24x128xf32>, vector<128x32xf32>, vector<24x32xf32> -> vector<24x32xf32>
      %c0_20 = arith.constant 0 : index
      %c0_21 = arith.constant 0 : index
      %27 = vector.load %arg7[%c0_20, %c0_21] : memref<24x128xf32, #tpu.memory_space<vmem>>, vector<24x32xf32>
      tpu.vector_store %arg7[%c0_20, %c0_21], %26 {strides = array<i32>} : memref<24x128xf32, #tpu.memory_space<vmem>>, vector<24x32xf32>,
      %c1_22 = arith.constant 1 : index
      %c0_23 = arith.constant 0 : index
      %c0_24 = arith.constant 0 : index
      %28 = vector.load %arg3[%c1_22, %c0_23, %c0_24] : memref<4x24x128xf32, #tpu.memory_space<vmem>>, vector<1x24x128xf32>
      %29 = vector.shape_cast %28 : vector<1x24x128xf32> to vector<24x128xf32>
      %cst_25 = arith.constant dense<0.000000e+00> : vector<24x32xf32>
      %30 = tpu.matmul %29, %23, %cst_25 {dimension_numbers = #tpu.dot_dimension_numbers<[1], [0], [0], [1], [0, 0, 1, 1], [], []>, precision = #tpu.contract_precision<fp32>} : vector<24x128xf32>, vector<128x32xf32>, vector<24x32xf32> -> vector<24x32xf32>
      %c0_26 = arith.constant 0 : index
      %c32 = arith.constant 32 : index
      %31 = vector.load %arg7[%c0_26, %c32] : memref<24x128xf32, #tpu.memory_space<vmem>>, vector<24x32xf32>
      tpu.vector_store %arg7[%c0_26, %c32], %30 {strides = array<i32>} : memref<24x128xf32, #tpu.memory_space<vmem>>, vector<24x32xf32>,
      %c2_27 = arith.constant 2 : index
      %c0_28 = arith.constant 0 : index
      %c0_29 = arith.constant 0 : index
      %32 = vector.load %arg3[%c2_27, %c0_28, %c0_29] : memref<4x24x128xf32, #tpu.memory_space<vmem>>, vector<1x24x128xf32>
      %33 = vector.shape_cast %32 : vector<1x24x128xf32> to vector<24x128xf32>
      %cst_30 = arith.constant dense<0.000000e+00> : vector<24x32xf32>
      %34 = tpu.matmul %33, %23, %cst_30 {dimension_numbers = #tpu.dot_dimension_numbers<[1], [0], [0], [1], [0, 0, 1, 1], [], []>, precision = #tpu.contract_precision<fp32>} : vector<24x128xf32>, vector<128x32xf32>, vector<24x32xf32> -> vector<24x32xf32>
      %c0_31 = arith.constant 0 : index
      %c64 = arith.constant 64 : index
      %35 = vector.load %arg7[%c0_31, %c64] : memref<24x128xf32, #tpu.memory_space<vmem>>, vector<24x32xf32>
      tpu.vector_store %arg7[%c0_31, %c64], %34 {strides = array<i32>} : memref<24x128xf32, #tpu.memory_space<vmem>>, vector<24x32xf32>,
      %c3_32 = arith.constant 3 : index
      %c0_33 = arith.constant 0 : index
      %c0_34 = arith.constant 0 : index
      %36 = vector.load %arg3[%c3_32, %c0_33, %c0_34] : memref<4x24x128xf32, #tpu.memory_space<vmem>>, vector<1x24x128xf32>
      %37 = vector.shape_cast %36 : vector<1x24x128xf32> to vector<24x128xf32>
      %cst_35 = arith.constant dense<0.000000e+00> : vector<24x32xf32>
      %38 = tpu.matmul %37, %23, %cst_35 {dimension_numbers = #tpu.dot_dimension_numbers<[1], [0], [0], [1], [0, 0, 1, 1], [], []>, precision = #tpu.contract_precision<fp32>} : vector<24x128xf32>, vector<128x32xf32>, vector<24x32xf32> -> vector<24x32xf32>
      %c0_36 = arith.constant 0 : index
      %c96 = arith.constant 96 : index
      %39 = vector.load %arg7[%c0_36, %c96] : memref<24x128xf32, #tpu.memory_space<vmem>>, vector<24x32xf32>
      tpu.vector_store %arg7[%c0_36, %c96], %38 {strides = array<i32>} : memref<24x128xf32, #tpu.memory_space<vmem>>, vector<24x32xf32>,
    } else {
    }
    %c0 = arith.constant 0 : index
    %c0_1 = arith.constant 0 : index
    %3 = vector.load %arg7[%c0, %c0_1] : memref<24x128xf32, #tpu.memory_space<vmem>>, vector<24x128xf32>
    %c0_2 = arith.constant 0 : index
    %c0_3 = arith.constant 0 : index
    %c0_4 = arith.constant 0 : index
    %4 = vector.load %arg5[%c0_2, %c0_3, %c0_4] : memref<1x32x24xf32, #tpu.memory_space<vmem>>, vector<1x32x24xf32>
    %5 = vector.shape_cast %4 : vector<1x32x24xf32> to vector<32x24xf32>
    %cst = arith.constant dense<0.000000e+00> : vector<32x128xf32>
    %6 = tpu.matmul %5, %3, %cst {dimension_numbers = #tpu.dot_dimension_numbers<[1], [0], [0], [1], [0, 0, 1, 1], [], []>, precision = #tpu.contract_precision<fp32>} : vector<32x24xf32>, vector<24x128xf32>, vector<32x128xf32> -> vector<32x128xf32>
    %7 = vector.extract_strided_slice %6 {offsets = [0, 0], sizes = [32, 32], strides = [1, 1]} : vector<32x128xf32> to vector<32x32xf32>
    %c0_5 = arith.constant 0 : index
    %c0_6 = arith.constant 0 : index
    %c0_7 = arith.constant 0 : index
    %8 = vector.load %arg6[%c0_5, %c0_6, %c0_7] : memref<4x32x32xf32, #tpu.memory_space<vmem>>, vector<1x32x32xf32>
    %9 = vector.shape_cast %8 : vector<1x32x32xf32> to vector<32x32xf32>
    %10 = vector.shape_cast %7 : vector<32x32xf32> to vector<1x32x32xf32>
    tpu.vector_store %arg6[%c0_5, %c0_6, %c0_7], %10 {strides = array<i32>} : memref<4x32x32xf32, #tpu.memory_space<vmem>>, vector<1x32x32xf32>,
    %11 = vector.extract_strided_slice %6 {offsets = [0, 32], sizes = [32, 32], strides = [1, 1]} : vector<32x128xf32> to vector<32x32xf32>
    %c1 = arith.constant 1 : index
    %c0_8 = arith.constant 0 : index
    %c0_9 = arith.constant 0 : index
    %12 = vector.load %arg6[%c1, %c0_8, %c0_9] : memref<4x32x32xf32, #tpu.memory_space<vmem>>, vector<1x32x32xf32>
    %13 = vector.shape_cast %12 : vector<1x32x32xf32> to vector<32x32xf32>
    %14 = vector.shape_cast %11 : vector<32x32xf32> to vector<1x32x32xf32>
    tpu.vector_store %arg6[%c1, %c0_8, %c0_9], %14 {strides = array<i32>} : memref<4x32x32xf32, #tpu.memory_space<vmem>>, vector<1x32x32xf32>,
    %15 = vector.extract_strided_slice %6 {offsets = [0, 64], sizes = [32, 32], strides = [1, 1]} : vector<32x128xf32> to vector<32x32xf32>
    %c2 = arith.constant 2 : index
    %c0_10 = arith.constant 0 : index
    %c0_11 = arith.constant 0 : index
    %16 = vector.load %arg6[%c2, %c0_10, %c0_11] : memref<4x32x32xf32, #tpu.memory_space<vmem>>, vector<1x32x32xf32>
    %17 = vector.shape_cast %16 : vector<1x32x32xf32> to vector<32x32xf32>
    %18 = vector.shape_cast %15 : vector<32x32xf32> to vector<1x32x32xf32>
    tpu.vector_store %arg6[%c2, %c0_10, %c0_11], %18 {strides = array<i32>} : memref<4x32x32xf32, #tpu.memory_space<vmem>>, vector<1x32x32xf32>,
    %19 = vector.extract_strided_slice %6 {offsets = [0, 96], sizes = [32, 32], strides = [1, 1]} : vector<32x128xf32> to vector<32x32xf32>
    %c3 = arith.constant 3 : index
    %c0_12 = arith.constant 0 : index
    %c0_13 = arith.constant 0 : index
    %20 = vector.load %arg6[%c3, %c0_12, %c0_13] : memref<4x32x32xf32, #tpu.memory_space<vmem>>, vector<1x32x32xf32>
    %21 = vector.shape_cast %20 : vector<1x32x32xf32> to vector<32x32xf32>
    %22 = vector.shape_cast %19 : vector<32x32xf32> to vector<1x32x32xf32>
    tpu.vector_store %arg6[%c3, %c0_12, %c0_13], %22 {strides = array<i32>} : memref<4x32x32xf32, #tpu.memory_space<vmem>>, vector<1x32x32xf32>,
    return
  }
  func.func @transform_0(%arg0: i32, %arg1: i32, %arg2: i32) -> (i32, i32, i32) {
    %c0_i32 = arith.constant 0 : i32
    %c0_i32_0 = arith.constant 0 : i32
    %c0_i32_1 = arith.constant 0 : i32
    return %arg0, %c0_i32, %c0_i32_0 : i32, i32, i32
  }
  func.func @transform_1(%arg0: i32, %arg1: i32, %arg2: i32) -> (i32, i32) {
    %c0_i32 = arith.constant 0 : i32
    %c0_i32_0 = arith.constant 0 : i32
    return %c0_i32, %arg1 : i32, i32
  }
  func.func @transform_2(%arg0: i32, %arg1: i32, %arg2: i32) -> (i32, i32, i32) {
    %c0_i32 = arith.constant 0 : i32
    %c0_i32_0 = arith.constant 0 : i32
    %c0_i32_1 = arith.constant 0 : i32
    return %arg2, %c0_i32, %c0_i32_0 : i32, i32, i32
  }
  func.func @transform_3(%arg0: i32, %arg1: i32, %arg2: i32) -> (i32, i32, i32) {
    %c0_i32 = arith.constant 0 : i32
    return %arg0, %arg2, %arg1 : i32, i32, i32
  }
}

</mosaic_0001>

<llo_original>
// kernel: tpu_custom_call.1
$region0: #{tpu_custom_call.1}
  #allocation0 [shape = 'u32[]', space=smem, size = 0x4, offset = 0x4, fixed_abs, tag = 'smem constant byte address 0x4 - core index']
  #allocation1 [shape = 'u32[144,128]{1,0:T(1,128)}', space=vmem, size = 0x12000, scoped, tag = 'internal scratch']
  #allocation2 [shape = 'f32[24,128]{1,0:T(8,128)}', space=vmem, size = 0x3000, scoped, tag = 'scratch operand']
  %s0 = inlined_call_operand.vmem [shape: f32[8,24,128], index: 0, kind: input, shape index: {}]
  %s1 = inlined_call_operand.vmem [shape: f32[128,32], index: 1, kind: input, shape index: {}]
  %s2 = inlined_call_operand.vmem [shape: f32[1,32,24], index: 2, kind: input, shape index: {}]
  %s3 = inlined_call_operand.hbm [shape: f32[8,32,32], index: 3, kind: output, shape index: {}]
  %s4 = sld [smem:[#allocation0]]
  $region49: #{tpu_custom_call.1} parent=0
    _
  %s6 = ssub.s32 1, %s4
  %s7 = scalar_select 0, %s6, %s4
  $region1: #{tpu_custom_call.1} parent=0
    #allocation3 [shape = 'u8[131072]{0}', space=vmem, size = 0x20000, scoped, tag = 'output window, operand 0']
    #allocation4 [shape = 's32[2]{0}', space=sflag, size = 0x8, scoped, tag = 'scoped memory for tpu_custom_call.1']
    %8 = vsyncpa [#allocation4], 0
    %s9 = scalar_lea.sflag [#allocation4], 1
    %10 = vsyncpa %s9, 0
    loop: start=0, step=1, limit=4
    $region2: #{tpu_custom_call.1} parent=1 // loop_pre_header
      _
    $region3: #{tpu_custom_call.1} parent=1 // loop_header
      %s12 = sphi 0, %s16
      %p13 = scmp.ge.s32.totalorder %s12, 4
      %s19 = sphi 0, %s38
      %s20 = sphi 0, %s34
      %s21 = sphi 0, %s30
      %s22 = sphi 0, %s19
      %s23 = sphi 0, %s20
      %s24 = sphi 0, %s21
      %s25 = sphi 0, %s22
      %s26 = sphi 0, %s23
      %s27 = sphi 0, %s24
      %s41 = sphi 0, %s43
      %s44 = sphi 0, %s41
      %s45 = sphi 0, %s44
      %s61 = sphi 0, %s45
      %s67 = sphi 0, %s69
      %s70 = sphi 0, %s67
      %s71 = sphi 0, %s70
      %s87 = sphi 0, %s71
      %s93 = sphi 0, %s95
      %s96 = sphi 0, %s93
      %s97 = sphi 0, %s96
      %s113 = sphi 0, %s97
      %s123 = sphi 0, %s125
      %s126 = sphi 0, %s123
      %s127 = sphi 0, %s126
      %s143 = sphi 0, %s127
    $region4: #{tpu_custom_call.1} parent=1 // loop_header_branch
      %15 = sbr.rel (%p13) target = $region8
    $region5: #{tpu_custom_call.1} parent=1 // loop_body
      %s17 = ssub.s32 %s12, 1
      %s18 = ssub.s32 %s12, 2
      %s28 = sadd.s32 1, %s21
      %p29 = scmp.ge.s32.totalorder %s28, 1
      %s30 = scalar_select %p29, 0, %s28
      %s31 = sadd.s32 1, %s20
      %s32 = scalar_select %p29, %s31, %s20
      %p33 = scmp.ge.s32.totalorder %s32, 1
      %s34 = scalar_select %p33, 0, %s32
      %s35 = sadd.s32 1, %s19
      %s36 = scalar_select %p33, %s35, %s19
      %p37 = scmp.ge.s32.totalorder %s36, 2
      %s38 = scalar_select %p37, 0, %s36
      %s39 = ssub.s32 %s19, %s38
      %p40 = scmp.eq.s32.totalorder %s39, 0
      %s42 = sadd.s32 %s41, 1
      %s43 = scalar_select %p40, %s41, %s42
      %p46 = pneg %p40
      %p47 = scmp.eq.s32.totalorder %s12, 1
      %p48 = por %p46, %p47
      %p49 = scmp.ne.s32.totalorder %s41, %s44
      %p50 = scmp.eq.s32.totalorder %s12, 0
      %p51 = por %p49, %p50
      %p52 = scmp.ne.s32.totalorder %s41, %s44
      %p53 = scmp.eq.s32.totalorder %s17, 1
      %p54 = por %p52, %p53
      %p55 = scmp.ne.s32.totalorder %s44, %s45
      %p56 = scmp.eq.s32.totalorder %s17, 0
      %p57 = por %p55, %p56
      %p58 = scmp.ne.s32.totalorder %s44, %s45
      %p59 = scmp.eq.s32.totalorder %s18, 1
      %p60 = por %p58, %p59
      %p62 = scmp.ne.s32.totalorder %s45, %s61
      %p63 = scmp.eq.s32.totalorder %s18, 0
      %p64 = por %p62, %p63
      %s65 = ssub.s32 %s20, %s34
      %p66 = scmp.eq.s32.totalorder %s65, 0
      %s68 = sadd.s32 %s67, 1
      %s69 = scalar_select %p66, %s67, %s68
      %p72 = pneg %p66
      %p73 = scmp.eq.s32.totalorder %s12, 1
      %p74 = por %p72, %p73
      %p75 = scmp.ne.s32.totalorder %s67, %s70
      %p76 = scmp.eq.s32.totalorder %s12, 0
      %p77 = por %p75, %p76
      %p78 = scmp.ne.s32.totalorder %s67, %s70
      %p79 = scmp.eq.s32.totalorder %s17, 1
      %p80 = por %p78, %p79
      %p81 = scmp.ne.s32.totalorder %s70, %s71
      %p82 = scmp.eq.s32.totalorder %s17, 0
      %p83 = por %p81, %p82
      %p84 = scmp.ne.s32.totalorder %s70, %s71
      %p85 = scmp.eq.s32.totalorder %s18, 1
      %p86 = por %p84, %p85
      %p88 = scmp.ne.s32.totalorder %s71, %s87
      %p89 = scmp.eq.s32.totalorder %s18, 0
      %p90 = por %p88, %p89
      %s91 = ssub.s32 %s21, %s30
      %p92 = scmp.eq.s32.totalorder %s91, 0
      %s94 = sadd.s32 %s93, 1
      %s95 = scalar_select %p92, %s93, %s94
      %p98 = pneg %p92
      %p99 = scmp.eq.s32.totalorder %s12, 1
      %p100 = por %p98, %p99
      %p101 = scmp.ne.s32.totalorder %s93, %s96
      %p102 = scmp.eq.s32.totalorder %s12, 0
      %p103 = por %p101, %p102
      %p104 = scmp.ne.s32.totalorder %s93, %s96
      %p105 = scmp.eq.s32.totalorder %s17, 1
      %p106 = por %p104, %p105
      %p107 = scmp.ne.s32.totalorder %s96, %s97
      %p108 = scmp.eq.s32.totalorder %s17, 0
      %p109 = por %p107, %p108
      %p110 = scmp.ne.s32.totalorder %s96, %s97
      %p111 = scmp.eq.s32.totalorder %s18, 1
      %p112 = por %p110, %p111
      %p114 = scmp.ne.s32.totalorder %s97, %s113
      %p115 = scmp.eq.s32.totalorder %s18, 0
      %p116 = por %p114, %p115
      %s117 = ssub.s32 %s19, %s38
      %s118 = ssub.s32 %s21, %s30
      %s119 = sor.u32 %s117, %s118
      %s120 = ssub.s32 %s20, %s34
      %s121 = sor.u32 %s119, %s120
      %p122 = scmp.eq.s32.totalorder %s121, 0
      %s124 = sadd.s32 %s123, 1
      %s125 = scalar_select %p122, %s123, %s124
      %p128 = pneg %p122
      %p129 = scmp.eq.s32.totalorder %s12, 1
      %p130 = por %p128, %p129
      %p131 = scmp.ne.s32.totalorder %s123, %s126
      %p132 = scmp.eq.s32.totalorder %s12, 0
      %p133 = por %p131, %p132
      %p134 = scmp.ne.s32.totalorder %s123, %s126
      %p135 = scmp.eq.s32.totalorder %s17, 1
      %p136 = por %p134, %p135
      %p137 = scmp.ne.s32.totalorder %s126, %s127
      %p138 = scmp.eq.s32.totalorder %s17, 0
      %p139 = por %p137, %p138
      %p140 = scmp.ne.s32.totalorder %s126, %s127
      %p141 = scmp.eq.s32.totalorder %s18, 1
      %p142 = por %p140, %p141
      %p144 = scmp.ne.s32.totalorder %s127, %s143
      %p145 = scmp.eq.s32.totalorder %s18, 0
      %p146 = por %p144, %p145
      %p147 = scmp.le.s32.totalorder 1, %s12
      %p148 = scmp.lt.s32.totalorder %s12, 3
      %p149 = pnand %p147, %p148
      %p150 = pneg %p149
      // Predicated region
      $region9: #{tpu_custom_call.1} parent=5 // pred_check
        _
      $region10: #{tpu_custom_call.1} parent=5 // pred_check_branch
        %152 = sbr.rel (%p149) target = $region12
      $region11: #{tpu_custom_call.1} parent=5 // pred_region
        %s153 = ssub.s32 %s12, 1
        // Predicated region
        $region13: #{tpu_custom_call.1} parent=11 // pred_check
          %p154 = pneg %p83
        $region14: #{tpu_custom_call.1} parent=11 // pred_check_branch
          %156 = sbr.rel (%p154) target = $region16
        $region15: #{tpu_custom_call.1} parent=11 // pred_region
          %p157 = scmp.lt.s32.totalorder %s23, 0
          %s158 = scalar_select %p157, %s23, 0
          %s159 = smul.addr %s158, 8
          %s160 = scalar_lea.vmem %s1, %s159
        $region16: #{tpu_custom_call.1} parent=11 // pred_fallthru
          _
        // Predicated region
        $region17: #{tpu_custom_call.1} parent=11 // pred_check
          %p161 = pneg %p109
        $region18: #{tpu_custom_call.1} parent=11 // pred_check_branch
          %163 = sbr.rel (%p161) target = $region20
        $region19: #{tpu_custom_call.1} parent=11 // pred_region
          %p164 = scmp.lt.s32.totalorder %s24, 0
          %s165 = scalar_select %p164, %s24, 0
          %s166 = smul.addr %s165, 4
          %s167 = smul.addr %s166, 8
          %s168 = scalar_lea.vmem %s2, %s167
        $region20: #{tpu_custom_call.1} parent=11 // pred_fallthru
          _
      $region12: #{tpu_custom_call.1} parent=5 // pred_fallthru
        _
      %p169 = scmp.lt.s32.totalorder %s12, 2
      // Predicated region
      $region21: #{tpu_custom_call.1} parent=5 // pred_check
        %p170 = pneg %p169
      $region22: #{tpu_custom_call.1} parent=5 // pred_check_branch
        %172 = sbr.rel (%p170) target = $region24
      $region23: #{tpu_custom_call.1} parent=5 // pred_region
        // Predicated region
        $region25: #{tpu_custom_call.1} parent=23 // pred_check
          %p173 = pneg %p51
        $region26: #{tpu_custom_call.1} parent=23 // pred_check_branch
          %175 = sbr.rel (%p173) target = $region28
        $region27: #{tpu_custom_call.1} parent=23 // pred_region
          %s176 = smul.u32 4, %s19
          %p177 = scmp.lt.s32.totalorder %s176, 7
          %s178 = scalar_select %p177, %s176, 7
          %s179 = smul.addr %s178, 3
          %s180 = smul.addr %s179, 8
          %s181 = scalar_lea.vmem %s0, %s180
          %s182 = smul.u32 4, %s19
        $region28: #{tpu_custom_call.1} parent=23 // pred_fallthru
          _
      $region24: #{tpu_custom_call.1} parent=5 // pred_fallthru
        _
      %p183 = scmp.le.s32.totalorder 1, %s12
      %p184 = scmp.lt.s32.totalorder %s12, 3
      %p185 = pnand %p183, %p184
      %p186 = pneg %p185
      // Predicated region
      $region29: #{tpu_custom_call.1} parent=5 // pred_check
        _
      $region30: #{tpu_custom_call.1} parent=5 // pred_check_branch
        %188 = sbr.rel (%p185) target = $region32
      $region31: #{tpu_custom_call.1} parent=5 // pred_region
        %s189 = ssub.s32 %s12, 1
        %s190 = smul.u32 4, %s22
        %p191 = scmp.lt.s32.totalorder %s190, 7
        %s192 = scalar_select %p191, %s190, 7
        %s193 = smul.addr %s192, 3
        %s194 = smul.addr %s193, 8
        %s195 = scalar_lea.vmem %s0, %s194
        %p196 = pneg %p57
        %p197 = pneg %p54
        %p198 = scmp.lt.s32.totalorder %s23, 0
        %s199 = scalar_select %p198, %s23, 0
        %s200 = smul.addr %s199, 8
        %s201 = scalar_lea.vmem %s1, %s200
        %p202 = pneg %p83
        %p203 = pneg %p80
        %p204 = scmp.lt.s32.totalorder %s24, 0
        %s205 = scalar_select %p204, %s24, 0
        %s206 = smul.addr %s205, 4
        %s207 = smul.addr %s206, 8
        %s208 = scalar_lea.vmem %s2, %s207
        %p209 = pneg %p109
        %p210 = pneg %p106
        %p211 = pneg %p139
        %p212 = pneg %p136
        %s213 = sand.u32 %s126, 1
        %s214 = scalar_lea.sflag [#allocation4], %s213
        %s215 = sand.u32 %s126, 1
        %s216 = smul.addr %s215, 128
        %s217 = scalar_lea.vmem [#allocation3], %s216
        %s218 = smul.u32 4, %s22
        %p219 = scmp.lt.s32.totalorder %s218, 7
        %s220 = scalar_select %p219, %s218, 7
        %s221 = smul.addr %s220, 3
        %s222 = smul.addr %s221, 8
        %s223 = scalar_lea.vmem %s0, %s222
        %s224 = smul.u32 4, %s22
        %p225 = scmp.lt.s32.totalorder %s23, 0
        %s226 = scalar_select %p225, %s23, 0
        %s227 = smul.addr %s226, 8
        %s228 = scalar_lea.vmem %s1, %s227
        %p229 = scmp.lt.s32.totalorder %s24, 0
        %s230 = scalar_select %p229, %s24, 0
        %s231 = smul.addr %s230, 4
        %s232 = smul.addr %s231, 8
        %s233 = scalar_lea.vmem %s2, %s232
        %s234 = smul.u32 4, %s22
        %s235 = smul.u32 4, %s24
        %p236 = scmp.eq.s32.totalorder %s24, 0
        // Predicated region
        $region33: #{tpu_custom_call.1} parent=31 // pred_check
          %p237 = pneg %p236
        $region34: #{tpu_custom_call.1} parent=31 // pred_check_branch
          %239 = sbr.rel (%p237) target = $region36
        $region35: #{tpu_custom_call.1} parent=31 // pred_region
          %v240 = vld [vmem:[%s228] sm:$0xff]
          %v241 = vld [vmem:[%s228 + $0x8] sm:$0xff]
          %v242 = vld [vmem:[%s228 + $0x10] sm:$0xff]
          %v243 = vld [vmem:[%s228 + $0x18] sm:$0xff]
          %v244 = vld [vmem:[%s228 + $0x20] sm:$0xff]
          %v245 = vld [vmem:[%s228 + $0x28] sm:$0xff]
          %v246 = vld [vmem:[%s228 + $0x30] sm:$0xff]
          %v247 = vld [vmem:[%s228 + $0x38] sm:$0xff]
          %v248 = vld [vmem:[%s228 + $0x40] sm:$0xff]
          %v249 = vld [vmem:[%s228 + $0x48] sm:$0xff]
          %v250 = vld [vmem:[%s228 + $0x50] sm:$0xff]
          %v251 = vld [vmem:[%s228 + $0x58] sm:$0xff]
          %v252 = vld [vmem:[%s228 + $0x60] sm:$0xff]
          %v253 = vld [vmem:[%s228 + $0x68] sm:$0xff]
          %v254 = vld [vmem:[%s228 + $0x70] sm:$0xff]
          %v255 = vld [vmem:[%s228 + $0x78] sm:$0xff]
          %v256 = vld [vmem:[%s223] sm:$0xff]
          %v257 = vld [vmem:[%s223 + $0x8] sm:$0xff]
          %v258 = vld [vmem:[%s223 + $0x10] sm:$0xff]
          %259 = vmatprep.subr.mxu0 0.0
          %v260 = vand.u32 %v240, 4294901760
          %261 = vmatpush1.msra.mxu0 %v260
          %262 = vmatprep.subr.mxu0 0.0
          %v263 = vand.u32 %v241, 4294901760
          %264 = vmatpush1.msra.mxu0 %v263
          %265 = vmatprep.subr.mxu0 0.0
          %v266 = vand.u32 %v242, 4294901760
          %267 = vmatpush1.msra.mxu0 %v266
          %268 = vmatprep.subr.mxu0 0.0
          %v269 = vand.u32 %v243, 4294901760
          %270 = vmatpush1.msra.mxu0 %v269
          %271 = vmatprep.subr.mxu0 0.0
          %v272 = vand.u32 %v244, 4294901760
          %273 = vmatpush1.msra.mxu0 %v272
          %274 = vmatprep.subr.mxu0 0.0
          %v275 = vand.u32 %v245, 4294901760
          %276 = vmatpush1.msra.mxu0 %v275
          %277 = vmatprep.subr.mxu0 0.0
          %v278 = vand.u32 %v246, 4294901760
          %279 = vmatpush1.msra.mxu0 %v278
          %280 = vmatprep.subr.mxu0 0.0
          %v281 = vand.u32 %v247, 4294901760
          %282 = vmatpush1.msra.mxu0 %v281
          %283 = vmatprep.subr.mxu0 0.0
          %v284 = vand.u32 %v248, 4294901760
          %285 = vmatpush1.msra.mxu0 %v284
          %286 = vmatprep.subr.mxu0 0.0
          %v287 = vand.u32 %v249, 4294901760
          %288 = vmatpush1.msra.mxu0 %v287
          %289 = vmatprep.subr.mxu0 0.0
          %v290 = vand.u32 %v250, 4294901760
          %291 = vmatpush1.msra.mxu0 %v290
          %292 = vmatprep.subr.mxu0 0.0
          %v293 = vand.u32 %v251, 4294901760
          %294 = vmatpush1.msra.mxu0 %v293
          %295 = vmatprep.subr.mxu0 0.0
          %v296 = vand.u32 %v252, 4294901760
          %297 = vmatpush1.msra.mxu0 %v296
          %298 = vmatprep.subr.mxu0 0.0
          %v299 = vand.u32 %v253, 4294901760
          %300 = vmatpush1.msra.mxu0 %v299
          %301 = vmatprep.subr.mxu0 0.0
          %v302 = vand.u32 %v254, 4294901760
          %303 = vmatpush1.msra.mxu0 %v302
          %304 = vmatprep.subr.mxu0 0.0
          %v305 = vand.u32 %v255, 4294901760
          %306 = vmatpush1.msra.mxu0 %v305
          %307 = vmatprep.subr.mxu0 0.0
          %308 = vmatpush1.msra.mxu0 0.0
          %309 = vmatprep.subr.mxu0 0.0
          %310 = vmatpush1.msra.mxu0 0.0
          %311 = vmatprep.subr.mxu0 0.0
          %312 = vmatpush1.msra.mxu0 0.0
          %313 = vmatprep.subr.mxu0 0.0
          %314 = vmatpush1.msra.mxu0 0.0
          %315 = vmatprep.subr.mxu0 0.0
          %316 = vmatpush1.msra.mxu0 0.0
          %317 = vmatprep.subr.mxu0 0.0
          %318 = vmatpush1.msra.mxu0 0.0
          %319 = vmatprep.subr.mxu0 0.0
          %320 = vmatpush1.msra.mxu0 0.0
          %321 = vmatprep.subr.mxu0 0.0
          %322 = vmatpush1.msra.mxu0 0.0
          %323 = vmatprep.subr.mxu0 0.0
          %324 = vmatpush1.msra.mxu0 0.0
          %325 = vmatprep.subr.mxu0 0.0
          %326 = vmatpush1.msra.mxu0 0.0
          %327 = vmatprep.subr.mxu0 0.0
          %328 = vmatpush1.msra.mxu0 0.0
          %329 = vmatprep.subr.mxu0 0.0
          %330 = vmatpush1.msra.mxu0 0.0
          %331 = vmatprep.subr.mxu0 0.0
          %332 = vmatpush1.msra.mxu0 0.0
          %333 = vmatprep.subr.mxu0 0.0
          %334 = vmatpush1.msra.mxu0 0.0
          %335 = vmatprep.subr.mxu0 0.0
          %336 = vmatpush1.msra.mxu0 0.0
          %337 = vmatprep.subr.mxu0 0.0
          %338 = vmatpush1.msra.mxu0 0.0
          %339 = vmatprep.mubr.f32.mxu0 0.0
          %v340 = vand.u32 %v256, 4294901760
          %v341 = vsub.f32 %v256, %v340
          %v342 = vand.u32 %v341, 4294901760
          %v343 = vsub.f32 %v341, %v342
          %v344 = vand.u32 %v343, 4294901760
          %345 = vmatmul.mubr.f32.gmra.mrb[0].mxu0 %v344
          %v346 = vpop.f32.mrb[0].mxu0
          %v347 = vadd.f32 0.0, %v346
          %v348 = vpop.f32.mrb[0].mxu0
          %349 = vmatprep.mubr.f32.mxu0 0.0
          %v350 = vand.u32 %v257, 4294901760
          %v351 = vsub.f32 %v257, %v350
          %v352 = vand.u32 %v351, 4294901760
          %v353 = vsub.f32 %v351, %v352
          %v354 = vand.u32 %v353, 4294901760
          %355 = vmatmul.mubr.f32.gmra.mrb[0].mxu0 %v354
          %v356 = vpop.f32.mrb[0].mxu0
          %v357 = vadd.f32 0.0, %v356
          %v358 = vpop.f32.mrb[0].mxu0
          %359 = vmatprep.mubr.f32.mxu0 0.0
          %v360 = vand.u32 %v258, 4294901760
          %v361 = vsub.f32 %v258, %v360
          %v362 = vand.u32 %v361, 4294901760
          %v363 = vsub.f32 %v361, %v362
          %v364 = vand.u32 %v363, 4294901760
          %365 = vmatmul.mubr.f32.gmra.mrb[0].mxu0 %v364
          %v366 = vpop.f32.mrb[0].mxu0
          %v367 = vadd.f32 0.0, %v366
          %v368 = vpop.f32.mrb[0].mxu0
          %369 = vdwg.mxu0
          %370 = vmatprep.subr.mxu0 0.0
          %v371 = vand.u32 %v240, 4294901760
          %v372 = vsub.f32 %v240, %v371
          %v373 = vand.u32 %v372, 4294901760
          %v374 = vsub.f32 %v372, %v373
          %v375 = vand.u32 %v374, 4294901760
          %376 = vmatpush1.msra.mxu0 %v375
          %377 = vmatprep.subr.mxu0 0.0
          %v378 = vand.u32 %v241, 4294901760
          %v379 = vsub.f32 %v241, %v378
          %v380 = vand.u32 %v379, 4294901760
          %v381 = vsub.f32 %v379, %v380
          %v382 = vand.u32 %v381, 4294901760
          %383 = vmatpush1.msra.mxu0 %v382
          %384 = vmatprep.subr.mxu0 0.0
          %v385 = vand.u32 %v242, 4294901760
          %v386 = vsub.f32 %v242, %v385
          %v387 = vand.u32 %v386, 4294901760
          %v388 = vsub.f32 %v386, %v387
          %v389 = vand.u32 %v388, 4294901760
          %390 = vmatpush1.msra.mxu0 %v389
          %391 = vmatprep.subr.mxu0 0.0
          %v392 = vand.u32 %v243, 4294901760
          %v393 = vsub.f32 %v243, %v392
          %v394 = vand.u32 %v393, 4294901760
          %v395 = vsub.f32 %v393, %v394
          %v396 = vand.u32 %v395, 4294901760
          %397 = vmatpush1.msra.mxu0 %v396
          %398 = vmatprep.subr.mxu0 0.0
          %v399 = vand.u32 %v244, 4294901760
          %v400 = vsub.f32 %v244, %v399
          %v401 = vand.u32 %v400, 4294901760
          %v402 = vsub.f32 %v400, %v401
          %v403 = vand.u32 %v402, 4294901760
          %404 = vmatpush1.msra.mxu0 %v403
          %405 = vmatprep.subr.mxu0 0.0
          %v406 = vand.u32 %v245, 4294901760
          %v407 = vsub.f32 %v245, %v406
          %v408 = vand.u32 %v407, 4294901760
          %v409 = vsub.f32 %v407, %v408
          %v410 = vand.u32 %v409, 4294901760
          %411 = vmatpush1.msra.mxu0 %v410
          %412 = vmatprep.subr.mxu0 0.0
          %v413 = vand.u32 %v246, 4294901760
          %v414 = vsub.f32 %v246, %v413
          %v415 = vand.u32 %v414, 4294901760
          %v416 = vsub.f32 %v414, %v415
          %v417 = vand.u32 %v416, 4294901760
          %418 = vmatpush1.msra.mxu0 %v417
          %419 = vmatprep.subr.mxu0 0.0
          %v420 = vand.u32 %v247, 4294901760
          %v421 = vsub.f32 %v247, %v420
          %v422 = vand.u32 %v421, 4294901760
          %v423 = vsub.f32 %v421, %v422
          %v424 = vand.u32 %v423, 4294901760
          %425 = vmatpush1.msra.mxu0 %v424
          %426 = vmatprep.subr.mxu0 0.0
          %v427 = vand.u32 %v248, 4294901760
          %v428 = vsub.f32 %v248, %v427
          %v429 = vand.u32 %v428, 4294901760
          %v430 = vsub.f32 %v428, %v429
          %v431 = vand.u32 %v430, 4294901760
          %432 = vmatpush1.msra.mxu0 %v431
          %433 = vmatprep.subr.mxu0 0.0
          %v434 = vand.u32 %v249, 4294901760
          %v435 = vsub.f32 %v249, %v434
          %v436 = vand.u32 %v435, 4294901760
          %v437 = vsub.f32 %v435, %v436
          %v438 = vand.u32 %v437, 4294901760
          %439 = vmatpush1.msra.mxu0 %v438
          %440 = vmatprep.subr.mxu0 0.0
          %v441 = vand.u32 %v250, 4294901760
          %v442 = vsub.f32 %v250, %v441
          %v443 = vand.u32 %v442, 4294901760
          %v444 = vsub.f32 %v442, %v443
          %v445 = vand.u32 %v444, 4294901760
          %446 = vmatpush1.msra.mxu0 %v445
          %447 = vmatprep.subr.mxu0 0.0
          %v448 = vand.u32 %v251, 4294901760
          %v449 = vsub.f32 %v251, %v448
          %v450 = vand.u32 %v449, 4294901760
          %v451 = vsub.f32 %v449, %v450
          %v452 = vand.u32 %v451, 4294901760
          %453 = vmatpush1.msra.mxu0 %v452
          %454 = vmatprep.subr.mxu0 0.0
          %v455 = vand.u32 %v252, 4294901760
          %v456 = vsub.f32 %v252, %v455
          %v457 = vand.u32 %v456, 4294901760
          %v458 = vsub.f32 %v456, %v457
          %v459 = vand.u32 %v458, 4294901760
          %460 = vmatpush1.msra.mxu0 %v459
          %461 = vmatprep.subr.mxu0 0.0
          %v462 = vand.u32 %v253, 4294901760
          %v463 = vsub.f32 %v253, %v462
          %v464 = vand.u32 %v463, 4294901760
          %v465 = vsub.f32 %v463, %v464
          %v466 = vand.u32 %v465, 4294901760
          %467 = vmatpush1.msra.mxu0 %v466
          %468 = vmatprep.subr.mxu0 0.0
          %v469 = vand.u32 %v254, 4294901760
          %v470 = vsub.f32 %v254, %v469
          %v471 = vand.u32 %v470, 4294901760
          %v472 = vsub.f32 %v470, %v471
          %v473 = vand.u32 %v472, 4294901760
          %474 = vmatpush1.msra.mxu0 %v473
          %475 = vmatprep.subr.mxu0 0.0
          %v476 = vand.u32 %v255, 4294901760
          %v477 = vsub.f32 %v255, %v476
          %v478 = vand.u32 %v477, 4294901760
          %v479 = vsub.f32 %v477, %v478
          %v480 = vand.u32 %v479, 4294901760
          %481 = vmatpush1.msra.mxu0 %v480
          %482 = vmatprep.subr.mxu0 0.0
          %483 = vmatpush1.msra.mxu0 0.0
          %484 = vmatprep.subr.mxu0 0.0
          %485 = vmatpush1.msra.mxu0 0.0
          %486 = vmatprep.subr.mxu0 0.0
          %487 = vmatpush1.msra.mxu0 0.0
          %488 = vmatprep.subr.mxu0 0.0
          %489 = vmatpush1.msra.mxu0 0.0
          %490 = vmatprep.subr.mxu0 0.0
          %491 = vmatpush1.msra.mxu0 0.0
          %492 = vmatprep.subr.mxu0 0.0
          %493 = vmatpush1.msra.mxu0 0.0
          %494 = vmatprep.subr.mxu0 0.0
          %495 = vmatpush1.msra.mxu0 0.0
          %496 = vmatprep.subr.mxu0 0.0
          %497 = vmatpush1.msra.mxu0 0.0
          %498 = vmatprep.subr.mxu0 0.0
          %499 = vmatpush1.msra.mxu0 0.0
          %500 = vmatprep.subr.mxu0 0.0
          %501 = vmatpush1.msra.mxu0 0.0
          %502 = vmatprep.subr.mxu0 0.0
          %503 = vmatpush1.msra.mxu0 0.0
          %504 = vmatprep.subr.mxu0 0.0
          %505 = vmatpush1.msra.mxu0 0.0
          %506 = vmatprep.subr.mxu0 0.0
          %507 = vmatpush1.msra.mxu0 0.0
          %508 = vmatprep.subr.mxu0 0.0
          %509 = vmatpush1.msra.mxu0 0.0
          %510 = vmatprep.subr.mxu0 0.0
          %511 = vmatpush1.msra.mxu0 0.0
          %512 = vmatprep.subr.mxu0 0.0
          %513 = vmatpush1.msra.mxu0 0.0
          %514 = vmatprep.mubr.f32.mxu0 0.0
          %v515 = vand.u32 %v256, 4294901760
          %516 = vmatmul.mubr.f32.gmra.mrb[0].mxu0 %v515
          %v517 = vpop.f32.mrb[0].mxu0
          %v518 = vadd.f32 %v347, %v517
          %v519 = vpop.f32.mrb[0].mxu0
          %520 = vmatprep.mubr.f32.mxu0 0.0
          %v521 = vand.u32 %v257, 4294901760
          %522 = vmatmul.mubr.f32.gmra.mrb[0].mxu0 %v521
          %v523 = vpop.f32.mrb[0].mxu0
          %v524 = vadd.f32 %v357, %v523
          %v525 = vpop.f32.mrb[0].mxu0
          %526 = vmatprep.mubr.f32.mxu0 0.0
          %v527 = vand.u32 %v258, 4294901760
          %528 = vmatmul.mubr.f32.gmra.mrb[0].mxu0 %v527
          %v529 = vpop.f32.mrb[0].mxu0
          %v530 = vadd.f32 %v367, %v529
          %v531 = vpop.f32.mrb[0].mxu0
          %532 = vdwg.mxu0
          %533 = vmatprep.subr.mxu0 0.0
          %v534 = vand.u32 %v240, 4294901760
          %v535 = vsub.f32 %v240, %v534
          %536 = vmatpush1.msra.mxu0 %v535
          %537 = vmatprep.subr.mxu0 0.0
          %v538 = vand.u32 %v241, 4294901760
          %v539 = vsub.f32 %v241, %v538
          %540 = vmatpush1.msra.mxu0 %v539
          %541 = vmatprep.subr.mxu0 0.0
          %v542 = vand.u32 %v242, 4294901760
          %v543 = vsub.f32 %v242, %v542
          %544 = vmatpush1.msra.mxu0 %v543
          %545 = vmatprep.subr.mxu0 0.0
          %v546 = vand.u32 %v243, 4294901760
          %v547 = vsub.f32 %v243, %v546
          %548 = vmatpush1.msra.mxu0 %v547
          %549 = vmatprep.subr.mxu0 0.0
          %v550 = vand.u32 %v244, 4294901760
          %v551 = vsub.f32 %v244, %v550
          %552 = vmatpush1.msra.mxu0 %v551
          %553 = vmatprep.subr.mxu0 0.0
          %v554 = vand.u32 %v245, 4294901760
          %v555 = vsub.f32 %v245, %v554
          %556 = vmatpush1.msra.mxu0 %v555
          %557 = vmatprep.subr.mxu0 0.0
          %v558 = vand.u32 %v246, 4294901760
          %v559 = vsub.f32 %v246, %v558
          %560 = vmatpush1.msra.mxu0 %v559
          %561 = vmatprep.subr.mxu0 0.0
          %v562 = vand.u32 %v247, 4294901760
          %v563 = vsub.f32 %v247, %v562
          %564 = vmatpush1.msra.mxu0 %v563
          %565 = vmatprep.subr.mxu0 0.0
          %v566 = vand.u32 %v248, 4294901760
          %v567 = vsub.f32 %v248, %v566
          %568 = vmatpush1.msra.mxu0 %v567
          %569 = vmatprep.subr.mxu0 0.0
          %v570 = vand.u32 %v249, 4294901760
          %v571 = vsub.f32 %v249, %v570
          %572 = vmatpush1.msra.mxu0 %v571
          %573 = vmatprep.subr.mxu0 0.0
          %v574 = vand.u32 %v250, 4294901760
          %v575 = vsub.f32 %v250, %v574
          %576 = vmatpush1.msra.mxu0 %v575
          %577 = vmatprep.subr.mxu0 0.0
          %v578 = vand.u32 %v251, 4294901760
          %v579 = vsub.f32 %v251, %v578
          %580 = vmatpush1.msra.mxu0 %v579
          %581 = vmatprep.subr.mxu0 0.0
          %v582 = vand.u32 %v252, 4294901760
          %v583 = vsub.f32 %v252, %v582
          %584 = vmatpush1.msra.mxu0 %v583
          %585 = vmatprep.subr.mxu0 0.0
          %v586 = vand.u32 %v253, 4294901760
          %v587 = vsub.f32 %v253, %v586
          %588 = vmatpush1.msra.mxu0 %v587
          %589 = vmatprep.subr.mxu0 0.0
          %v590 = vand.u32 %v254, 4294901760
          %v591 = vsub.f32 %v254, %v590
          %592 = vmatpush1.msra.mxu0 %v591
          %593 = vmatprep.subr.mxu0 0.0
          %v594 = vand.u32 %v255, 4294901760
          %v595 = vsub.f32 %v255, %v594
          %596 = vmatpush1.msra.mxu0 %v595
          %597 = vmatprep.subr.mxu0 0.0
          %598 = vmatpush1.msra.mxu0 0.0
          %599 = vmatprep.subr.mxu0 0.0
          %600 = vmatpush1.msra.mxu0 0.0
          %601 = vmatprep.subr.mxu0 0.0
          %602 = vmatpush1.msra.mxu0 0.0
          %603 = vmatprep.subr.mxu0 0.0
          %604 = vmatpush1.msra.mxu0 0.0
          %605 = vmatprep.subr.mxu0 0.0
          %606 = vmatpush1.msra.mxu0 0.0
          %607 = vmatprep.subr.mxu0 0.0
          %608 = vmatpush1.msra.mxu0 0.0
          %609 = vmatprep.subr.mxu0 0.0
          %610 = vmatpush1.msra.mxu0 0.0
          %611 = vmatprep.subr.mxu0 0.0
          %612 = vmatpush1.msra.mxu0 0.0
          %613 = vmatprep.subr.mxu0 0.0
          %614 = vmatpush1.msra.mxu0 0.0
          %615 = vmatprep.subr.mxu0 0.0
          %616 = vmatpush1.msra.mxu0 0.0
          %617 = vmatprep.subr.mxu0 0.0
          %618 = vmatpush1.msra.mxu0 0.0
          %619 = vmatprep.subr.mxu0 0.0
          %620 = vmatpush1.msra.mxu0 0.0
          %621 = vmatprep.subr.mxu0 0.0
          %622 = vmatpush1.msra.mxu0 0.0
          %623 = vmatprep.subr.mxu0 0.0
          %624 = vmatpush1.msra.mxu0 0.0
          %625 = vmatprep.subr.mxu0 0.0
          %626 = vmatpush1.msra.mxu0 0.0
          %627 = vmatprep.subr.mxu0 0.0
          %628 = vmatpush1.msra.mxu0 0.0
          %629 = vmatprep.mubr.f32.mxu0 0.0
          %v630 = vand.u32 %v256, 4294901760
          %v631 = vsub.f32 %v256, %v630
          %632 = vmatmul.mubr.f32.gmra.mrb[0].mxu0 %v631
          %v633 = vpop.f32.mrb[0].mxu0
          %v634 = vadd.f32 %v518, %v633
          %v635 = vpop.f32.mrb[0].mxu0
          %636 = vmatprep.mubr.f32.mxu0 0.0
          %v637 = vand.u32 %v257, 4294901760
          %v638 = vsub.f32 %v257, %v637
          %639 = vmatmul.mubr.f32.gmra.mrb[0].mxu0 %v638
          %v640 = vpop.f32.mrb[0].mxu0
          %v641 = vadd.f32 %v524, %v640
          %v642 = vpop.f32.mrb[0].mxu0
          %643 = vmatprep.mubr.f32.mxu0 0.0
          %v644 = vand.u32 %v258, 4294901760
          %v645 = vsub.f32 %v258, %v644
          %646 = vmatmul.mubr.f32.gmra.mrb[0].mxu0 %v645
          %v647 = vpop.f32.mrb[0].mxu0
          %v648 = vadd.f32 %v530, %v647
          %v649 = vpop.f32.mrb[0].mxu0
          %650 = vdwg.mxu0
          %651 = vmatprep.subr.mxu0 0.0
          %v652 = vand.u32 %v240, 4294901760
          %653 = vmatpush1.msra.mxu0 %v652
          %654 = vmatprep.subr.mxu0 0.0
          %v655 = vand.u32 %v241, 4294901760
          %656 = vmatpush1.msra.mxu0 %v655
          %657 = vmatprep.subr.mxu0 0.0
          %v658 = vand.u32 %v242, 4294901760
          %659 = vmatpush1.msra.mxu0 %v658
          %660 = vmatprep.subr.mxu0 0.0
          %v661 = vand.u32 %v243, 4294901760
          %662 = vmatpush1.msra.mxu0 %v661
          %663 = vmatprep.subr.mxu0 0.0
          %v664 = vand.u32 %v244, 4294901760
          %665 = vmatpush1.msra.mxu0 %v664
          %666 = vmatprep.subr.mxu0 0.0
          %v667 = vand.u32 %v245, 4294901760
          %668 = vmatpush1.msra.mxu0 %v667
          %669 = vmatprep.subr.mxu0 0.0
          %v670 = vand.u32 %v246, 4294901760
          %671 = vmatpush1.msra.mxu0 %v670
          %672 = vmatprep.subr.mxu0 0.0
          %v673 = vand.u32 %v247, 4294901760
          %674 = vmatpush1.msra.mxu0 %v673
          %675 = vmatprep.subr.mxu0 0.0
          %v676 = vand.u32 %v248, 4294901760
          %677 = vmatpush1.msra.mxu0 %v676
          %678 = vmatprep.subr.mxu0 0.0
          %v679 = vand.u32 %v249, 4294901760
          %680 = vmatpush1.msra.mxu0 %v679
          %681 = vmatprep.subr.mxu0 0.0
          %v682 = vand.u32 %v250, 4294901760
          %683 = vmatpush1.msra.mxu0 %v682
          %684 = vmatprep.subr.mxu0 0.0
          %v685 = vand.u32 %v251, 4294901760
          %686 = vmatpush1.msra.mxu0 %v685
          %687 = vmatprep.subr.mxu0 0.0
          %v688 = vand.u32 %v252, 4294901760
          %689 = vmatpush1.msra.mxu0 %v688
          %690 = vmatprep.subr.mxu0 0.0
          %v691 = vand.u32 %v253, 4294901760
          %692 = vmatpush1.msra.mxu0 %v691
          %693 = vmatprep.subr.mxu0 0.0
          %v694 = vand.u32 %v254, 4294901760
          %695 = vmatpush1.msra.mxu0 %v694
          %696 = vmatprep.subr.mxu0 0.0
          %v697 = vand.u32 %v255, 4294901760
          %698 = vmatpush1.msra.mxu0 %v697
          %699 = vmatprep.subr.mxu0 0.0
          %700 = vmatpush1.msra.mxu0 0.0
          %701 = vmatprep.subr.mxu0 0.0
          %702 = vmatpush1.msra.mxu0 0.0
          %703 = vmatprep.subr.mxu0 0.0
          %704 = vmatpush1.msra.mxu0 0.0
          %705 = vmatprep.subr.mxu0 0.0
          %706 = vmatpush1.msra.mxu0 0.0
          %707 = vmatprep.subr.mxu0 0.0
          %708 = vmatpush1.msra.mxu0 0.0
          %709 = vmatprep.subr.mxu0 0.0
          %710 = vmatpush1.msra.mxu0 0.0
          %711 = vmatprep.subr.mxu0 0.0
          %712 = vmatpush1.msra.mxu0 0.0
          %713 = vmatprep.subr.mxu0 0.0
          %714 = vmatpush1.msra.mxu0 0.0
          %715 = vmatprep.subr.mxu0 0.0
          %716 = vmatpush1.msra.mxu0 0.0
          %717 = vmatprep.subr.mxu0 0.0
          %718 = vmatpush1.msra.mxu0 0.0
          %719 = vmatprep.subr.mxu0 0.0
          %720 = vmatpush1.msra.mxu0 0.0
          %721 = vmatprep.subr.mxu0 0.0
          %722 = vmatpush1.msra.mxu0 0.0
          %723 = vmatprep.subr.mxu0 0.0
          %724 = vmatpush1.msra.mxu0 0.0
          %725 = vmatprep.subr.mxu0 0.0
          %726 = vmatpush1.msra.mxu0 0.0
          %727 = vmatprep.subr.mxu0 0.0
          %728 = vmatpush1.msra.mxu0 0.0
          %729 = vmatprep.subr.mxu0 0.0
          %730 = vmatpush1.msra.mxu0 0.0
          %731 = vmatprep.mubr.f32.mxu0 0.0
          %v732 = vand.u32 %v256, 4294901760
          %v733 = vsub.f32 %v256, %v732
          %v734 = vand.u32 %v733, 4294901760
          %735 = vmatmul.mubr.f32.gmra.mrb[0].mxu0 %v734
          %v736 = vpop.f32.mrb[0].mxu0
          %v737 = vadd.f32 %v634, %v736
          %v738 = vpop.f32.mrb[0].mxu0
          %739 = vmatprep.mubr.f32.mxu0 0.0
          %v740 = vand.u32 %v257, 4294901760
          %v741 = vsub.f32 %v257, %v740
          %v742 = vand.u32 %v741, 4294901760
          %743 = vmatmul.mubr.f32.gmra.mrb[0].mxu0 %v742
          %v744 = vpop.f32.mrb[0].mxu0
          %v745 = vadd.f32 %v641, %v744
          %v746 = vpop.f32.mrb[0].mxu0
          %747 = vmatprep.mubr.f32.mxu0 0.0
          %v748 = vand.u32 %v258, 4294901760
          %v749 = vsub.f32 %v258, %v748
          %v750 = vand.u32 %v749, 4294901760
          %751 = vmatmul.mubr.f32.gmra.mrb[0].mxu0 %v750
          %v752 = vpop.f32.mrb[0].mxu0
          %v753 = vadd.f32 %v648, %v752
          %v754 = vpop.f32.mrb[0].mxu0
          %755 = vdwg.mxu0
          %756 = vmatprep.subr.mxu0 0.0
          %v757 = vand.u32 %v240, 4294901760
          %v758 = vsub.f32 %v240, %v757
          %v759 = vand.u32 %v758, 4294901760
          %760 = vmatpush1.msra.mxu0 %v759
          %761 = vmatprep.subr.mxu0 0.0
          %v762 = vand.u32 %v241, 4294901760
          %v763 = vsub.f32 %v241, %v762
          %v764 = vand.u32 %v763, 4294901760
          %765 = vmatpush1.msra.mxu0 %v764
          %766 = vmatprep.subr.mxu0 0.0
          %v767 = vand.u32 %v242, 4294901760
          %v768 = vsub.f32 %v242, %v767
          %v769 = vand.u32 %v768, 4294901760
          %770 = vmatpush1.msra.mxu0 %v769
          %771 = vmatprep.subr.mxu0 0.0
          %v772 = vand.u32 %v243, 4294901760
          %v773 = vsub.f32 %v243, %v772
          %v774 = vand.u32 %v773, 4294901760
          %775 = vmatpush1.msra.mxu0 %v774
          %776 = vmatprep.subr.mxu0 0.0
          %v777 = vand.u32 %v244, 4294901760
          %v778 = vsub.f32 %v244, %v777
          %v779 = vand.u32 %v778, 4294901760
          %780 = vmatpush1.msra.mxu0 %v779
          %781 = vmatprep.subr.mxu0 0.0
          %v782 = vand.u32 %v245, 4294901760
          %v783 = vsub.f32 %v245, %v782
          %v784 = vand.u32 %v783, 4294901760
          %785 = vmatpush1.msra.mxu0 %v784
          %786 = vmatprep.subr.mxu0 0.0
          %v787 = vand.u32 %v246, 4294901760
          %v788 = vsub.f32 %v246, %v787
          %v789 = vand.u32 %v788, 4294901760
          %790 = vmatpush1.msra.mxu0 %v789
          %791 = vmatprep.subr.mxu0 0.0
          %v792 = vand.u32 %v247, 4294901760
          %v793 = vsub.f32 %v247, %v792
          %v794 = vand.u32 %v793, 4294901760
          %795 = vmatpush1.msra.mxu0 %v794
          %796 = vmatprep.subr.mxu0 0.0
          %v797 = vand.u32 %v248, 4294901760
          %v798 = vsub.f32 %v248, %v797
          %v799 = vand.u32 %v798, 4294901760
          %800 = vmatpush1.msra.mxu0 %v799
          %801 = vmatprep.subr.mxu0 0.0
          %v802 = vand.u32 %v249, 4294901760
          %v803 = vsub.f32 %v249, %v802
          %v804 = vand.u32 %v803, 4294901760
          %805 = vmatpush1.msra.mxu0 %v804
          %806 = vmatprep.subr.mxu0 0.0
          %v807 = vand.u32 %v250, 4294901760
          %v808 = vsub.f32 %v250, %v807
          %v809 = vand.u32 %v808, 4294901760
          %810 = vmatpush1.msra.mxu0 %v809
          %811 = vmatprep.subr.mxu0 0.0
          %v812 = vand.u32 %v251, 4294901760
          %v813 = vsub.f32 %v251, %v812
          %v814 = vand.u32 %v813, 4294901760
          %815 = vmatpush1.msra.mxu0 %v814
          %816 = vmatprep.subr.mxu0 0.0
          %v817 = vand.u32 %v252, 4294901760
          %v818 = vsub.f32 %v252, %v817
          %v819 = vand.u32 %v818, 4294901760
          %820 = vmatpush1.msra.mxu0 %v819
          %821 = vmatprep.subr.mxu0 0.0
          %v822 = vand.u32 %v253, 4294901760
          %v823 = vsub.f32 %v253, %v822
          %v824 = vand.u32 %v823, 4294901760
          %825 = vmatpush1.msra.mxu0 %v824
          %826 = vmatprep.subr.mxu0 0.0
          %v827 = vand.u32 %v254, 4294901760
          %v828 = vsub.f32 %v254, %v827
          %v829 = vand.u32 %v828, 4294901760
          %830 = vmatpush1.msra.mxu0 %v829
          %831 = vmatprep.subr.mxu0 0.0
          %v832 = vand.u32 %v255, 4294901760
          %v833 = vsub.f32 %v255, %v832
          %v834 = vand.u32 %v833, 4294901760
          %835 = vmatpush1.msra.mxu0 %v834
          %836 = vmatprep.subr.mxu0 0.0
          %837 = vmatpush1.msra.mxu0 0.0
          %838 = vmatprep.subr.mxu0 0.0
          %839 = vmatpush1.msra.mxu0 0.0
          %840 = vmatprep.subr.mxu0 0.0
          %841 = vmatpush1.msra.mxu0 0.0
          %842 = vmatprep.subr.mxu0 0.0
          %843 = vmatpush1.msra.mxu0 0.0
          %844 = vmatprep.subr.mxu0 0.0
          %845 = vmatpush1.msra.mxu0 0.0
          %846 = vmatprep.subr.mxu0 0.0
          %847 = vmatpush1.msra.mxu0 0.0
          %848 = vmatprep.subr.mxu0 0.0
          %849 = vmatpush1.msra.mxu0 0.0
          %850 = vmatprep.subr.mxu0 0.0
          %851 = vmatpush1.msra.mxu0 0.0
          %852 = vmatprep.subr.mxu0 0.0
          %853 = vmatpush1.msra.mxu0 0.0
          %854 = vmatprep.subr.mxu0 0.0
          %855 = vmatpush1.msra.mxu0 0.0
          %856 = vmatprep.subr.mxu0 0.0
          %857 = vmatpush1.msra.mxu0 0.0
          %858 = vmatprep.subr.mxu0 0.0
          %859 = vmatpush1.msra.mxu0 0.0
          %860 = vmatprep.subr.mxu0 0.0
          %861 = vmatpush1.msra.mxu0 0.0
          %862 = vmatprep.subr.mxu0 0.0
          %863 = vmatpush1.msra.mxu0 0.0
          %864 = vmatprep.subr.mxu0 0.0
          %865 = vmatpush1.msra.mxu0 0.0
          %866 = vmatprep.subr.mxu0 0.0
          %867 = vmatpush1.msra.mxu0 0.0
          %868 = vmatprep.mubr.f32.mxu0 0.0
          %v869 = vand.u32 %v256, 4294901760
          %870 = vmatmul.mubr.f32.gmra.mrb[0].mxu0 %v869
          %v871 = vpop.f32.mrb[0].mxu0
          %v872 = vadd.f32 %v737, %v871
          %v873 = vpop.f32.mrb[0].mxu0
          %874 = vmatprep.mubr.f32.mxu0 0.0
          %v875 = vand.u32 %v257, 4294901760
          %876 = vmatmul.mubr.f32.gmra.mrb[0].mxu0 %v875
          %v877 = vpop.f32.mrb[0].mxu0
          %v878 = vadd.f32 %v745, %v877
          %v879 = vpop.f32.mrb[0].mxu0
          %880 = vmatprep.mubr.f32.mxu0 0.0
          %v881 = vand.u32 %v258, 4294901760
          %882 = vmatmul.mubr.f32.gmra.mrb[0].mxu0 %v881
          %v883 = vpop.f32.mrb[0].mxu0
          %v884 = vadd.f32 %v753, %v883
          %v885 = vpop.f32.mrb[0].mxu0
          %886 = vdwg.mxu0
          %887 = vmatprep.subr.mxu0 0.0
          %v888 = vand.u32 %v240, 4294901760
          %889 = vmatpush1.msra.mxu0 %v888
          %890 = vmatprep.subr.mxu0 0.0
          %v891 = vand.u32 %v241, 4294901760
          %892 = vmatpush1.msra.mxu0 %v891
          %893 = vmatprep.subr.mxu0 0.0
          %v894 = vand.u32 %v242, 4294901760
          %895 = vmatpush1.msra.mxu0 %v894
          %896 = vmatprep.subr.mxu0 0.0
          %v897 = vand.u32 %v243, 4294901760
          %898 = vmatpush1.msra.mxu0 %v897
          %899 = vmatprep.subr.mxu0 0.0
          %v900 = vand.u32 %v244, 4294901760
          %901 = vmatpush1.msra.mxu0 %v900
          %902 = vmatprep.subr.mxu0 0.0
          %v903 = vand.u32 %v245, 4294901760
          %904 = vmatpush1.msra.mxu0 %v903
          %905 = vmatprep.subr.mxu0 0.0
          %v906 = vand.u32 %v246, 4294901760
          %907 = vmatpush1.msra.mxu0 %v906
          %908 = vmatprep.subr.mxu0 0.0
          %v909 = vand.u32 %v247, 4294901760
          %910 = vmatpush1.msra.mxu0 %v909
          %911 = vmatprep.subr.mxu0 0.0
          %v912 = vand.u32 %v248, 4294901760
          %913 = vmatpush1.msra.mxu0 %v912
          %914 = vmatprep.subr.mxu0 0.0
          %v915 = vand.u32 %v249, 4294901760
          %916 = vmatpush1.msra.mxu0 %v915
          %917 = vmatprep.subr.mxu0 0.0
          %v918 = vand.u32 %v250, 4294901760
          %919 = vmatpush1.msra.mxu0 %v918
          %920 = vmatprep.subr.mxu0 0.0
          %v921 = vand.u32 %v251, 4294901760
          %922 = vmatpush1.msra.mxu0 %v921
          %923 = vmatprep.subr.mxu0 0.0
          %v924 = vand.u32 %v252, 4294901760
          %925 = vmatpush1.msra.mxu0 %v924
          %926 = vmatprep.subr.mxu0 0.0
          %v927 = vand.u32 %v253, 4294901760
          %928 = vmatpush1.msra.mxu0 %v927
          %929 = vmatprep.subr.mxu0 0.0
          %v930 = vand.u32 %v254, 4294901760
          %931 = vmatpush1.msra.mxu0 %v930
          %932 = vmatprep.subr.mxu0 0.0
          %v933 = vand.u32 %v255, 4294901760
          %934 = vmatpush1.msra.mxu0 %v933
          %935 = vmatprep.subr.mxu0 0.0
          %936 = vmatpush1.msra.mxu0 0.0
          %937 = vmatprep.subr.mxu0 0.0
          %938 = vmatpush1.msra.mxu0 0.0
          %939 = vmatprep.subr.mxu0 0.0
          %940 = vmatpush1.msra.mxu0 0.0
          %941 = vmatprep.subr.mxu0 0.0
          %942 = vmatpush1.msra.mxu0 0.0
          %943 = vmatprep.subr.mxu0 0.0
          %944 = vmatpush1.msra.mxu0 0.0
          %945 = vmatprep.subr.mxu0 0.0
          %946 = vmatpush1.msra.mxu0 0.0
          %947 = vmatprep.subr.mxu0 0.0
          %948 = vmatpush1.msra.mxu0 0.0
          %949 = vmatprep.subr.mxu0 0.0
          %950 = vmatpush1.msra.mxu0 0.0
          %951 = vmatprep.subr.mxu0 0.0
          %952 = vmatpush1.msra.mxu0 0.0
          %953 = vmatprep.subr.mxu0 0.0
          %954 = vmatpush1.msra.mxu0 0.0
          %955 = vmatprep.subr.mxu0 0.0
          %956 = vmatpush1.msra.mxu0 0.0
          %957 = vmatprep.subr.mxu0 0.0
          %958 = vmatpush1.msra.mxu0 0.0
          %959 = vmatprep.subr.mxu0 0.0
          %960 = vmatpush1.msra.mxu0 0.0
          %961 = vmatprep.subr.mxu0 0.0
          %962 = vmatpush1.msra.mxu0 0.0
          %963 = vmatprep.subr.mxu0 0.0
          %964 = vmatpush1.msra.mxu0 0.0
          %965 = vmatprep.subr.mxu0 0.0
          %966 = vmatpush1.msra.mxu0 0.0
          %967 = vmatprep.mubr.f32.mxu0 0.0
          %v968 = vand.u32 %v256, 4294901760
          %969 = vmatmul.mubr.f32.gmra.mrb[0].mxu0 %v968
          %v970 = vpop.f32.mrb[0].mxu0
          %v971 = vadd.f32 %v872, %v970
          %v972 = vpop.f32.mrb[0].mxu0
          %973 = vmatprep.mubr.f32.mxu0 0.0
          %v974 = vand.u32 %v257, 4294901760
          %975 = vmatmul.mubr.f32.gmra.mrb[0].mxu0 %v974
          %v976 = vpop.f32.mrb[0].mxu0
          %v977 = vadd.f32 %v878, %v976
          %v978 = vpop.f32.mrb[0].mxu0
          %979 = vmatprep.mubr.f32.mxu0 0.0
          %v980 = vand.u32 %v258, 4294901760
          %981 = vmatmul.mubr.f32.gmra.mrb[0].mxu0 %v980
          %v982 = vpop.f32.mrb[0].mxu0
          %v983 = vadd.f32 %v884, %v982
          %v984 = vpop.f32.mrb[0].mxu0
          %985 = vdwg.mxu0
          %vm986 = vcmask 261120
          %987 = vst.msk [vmem:[#allocation2] sm:$0xff] %vm986, %v971
          %988 = vst.msk [vmem:[#allocation2 + $0x8] sm:$0xff] %vm986, %v977
          %989 = vst.msk [vmem:[#allocation2 + $0x10] sm:$0xff] %vm986, %v983
          %s990 = scalar_lea.vmem %s223, 24
          %v991 = vld [vmem:[%s990] sm:$0xff]
          %v992 = vld [vmem:[%s990 + $0x8] sm:$0xff]
          %v993 = vld [vmem:[%s990 + $0x10] sm:$0xff]
          %994 = vmatprep.subr.mxu0 0.0
          %v995 = vand.u32 %v240, 4294901760
          %996 = vmatpush1.msra.mxu0 %v995
          %997 = vmatprep.subr.mxu0 0.0
          %v998 = vand.u32 %v241, 4294901760
          %999 = vmatpush1.msra.mxu0 %v998
          %1000 = vmatprep.subr.mxu0 0.0
          %v1001 = vand.u32 %v242, 4294901760
          %1002 = vmatpush1.msra.mxu0 %v1001
          %1003 = vmatprep.subr.mxu0 0.0
          %v1004 = vand.u32 %v243, 4294901760
          %1005 = vmatpush1.msra.mxu0 %v1004
          %1006 = vmatprep.subr.mxu0 0.0
          %v1007 = vand.u32 %v244, 4294901760
          %1008 = vmatpush1.msra.mxu0 %v1007
          %1009 = vmatprep.subr.mxu0 0.0
          %v1010 = vand.u32 %v245, 4294901760
          %1011 = vmatpush1.msra.mxu0 %v1010
          %1012 = vmatprep.subr.mxu0 0.0
          %v1013 = vand.u32 %v246, 4294901760
          %1014 = vmatpush1.msra.mxu0 %v1013
          %1015 = vmatprep.subr.mxu0 0.0
          %v1016 = vand.u32 %v247, 4294901760
          %1017 = vmatpush1.msra.mxu0 %v1016
          %1018 = vmatprep.subr.mxu0 0.0
          %v1019 = vand.u32 %v248, 4294901760
          %1020 = vmatpush1.msra.mxu0 %v1019
          %1021 = vmatprep.subr.mxu0 0.0
          %v1022 = vand.u32 %v249, 4294901760
          %1023 = vmatpush1.msra.mxu0 %v1022
          %1024 = vmatprep.subr.mxu0 0.0
          %v1025 = vand.u32 %v250, 4294901760
          %1026 = vmatpush1.msra.mxu0 %v1025
          %1027 = vmatprep.subr.mxu0 0.0
          %v1028 = vand.u32 %v251, 4294901760
          %1029 = vmatpush1.msra.mxu0 %v1028
          %1030 = vmatprep.subr.mxu0 0.0
          %v1031 = vand.u32 %v252, 4294901760
          %1032 = vmatpush1.msra.mxu0 %v1031
          %1033 = vmatprep.subr.mxu0 0.0
          %v1034 = vand.u32 %v253, 4294901760
          %1035 = vmatpush1.msra.mxu0 %v1034
          %1036 = vmatprep.subr.mxu0 0.0
          %v1037 = vand.u32 %v254, 4294901760
          %1038 = vmatpush1.msra.mxu0 %v1037
          %1039 = vmatprep.subr.mxu0 0.0
          %v1040 = vand.u32 %v255, 4294901760
          %1041 = vmatpush1.msra.mxu0 %v1040
          %1042 = vmatprep.subr.mxu0 0.0
          %1043 = vmatpush1.msra.mxu0 0.0
          %1044 = vmatprep.subr.mxu0 0.0
          %1045 = vmatpush1.msra.mxu0 0.0
          %1046 = vmatprep.subr.mxu0 0.0
          %1047 = vmatpush1.msra.mxu0 0.0
          %1048 = vmatprep.subr.mxu0 0.0
          %1049 = vmatpush1.msra.mxu0 0.0
          %1050 = vmatprep.subr.mxu0 0.0
          %1051 = vmatpush1.msra.mxu0 0.0
          %1052 = vmatprep.subr.mxu0 0.0
          %1053 = vmatpush1.msra.mxu0 0.0
          %1054 = vmatprep.subr.mxu0 0.0
          %1055 = vmatpush1.msra.mxu0 0.0
          %1056 = vmatprep.subr.mxu0 0.0
          %1057 = vmatpush1.msra.mxu0 0.0
          %1058 = vmatprep.subr.mxu0 0.0
          %1059 = vmatpush1.msra.mxu0 0.0
          %1060 = vmatprep.subr.mxu0 0.0
          %1061 = vmatpush1.msra.mxu0 0.0
          %1062 = vmatprep.subr.mxu0 0.0
          %1063 = vmatpush1.msra.mxu0 0.0
          %1064 = vmatprep.subr.mxu0 0.0
          %1065 = vmatpush1.msra.mxu0 0.0
          %1066 = vmatprep.subr.mxu0 0.0
          %1067 = vmatpush1.msra.mxu0 0.0
          %1068 = vmatprep.subr.mxu0 0.0
          %1069 = vmatpush1.msra.mxu0 0.0
          %1070 = vmatprep.subr.mxu0 0.0
          %1071 = vmatpush1.msra.mxu0 0.0
          %1072 = vmatprep.subr.mxu0 0.0
          %1073 = vmatpush1.msra.mxu0 0.0
          %1074 = vmatprep.mubr.f32.mxu0 0.0
          %v1075 = vand.u32 %v991, 4294901760
          %v1076 = vsub.f32 %v991, %v1075
          %v1077 = vand.u32 %v1076, 4294901760
          %v1078 = vsub.f32 %v1076, %v1077
          %v1079 = vand.u32 %v1078, 4294901760
          %1080 = vmatmul.mubr.f32.gmra.mrb[0].mxu0 %v1079
          %v1081 = vpop.f32.mrb[0].mxu0
          %v1082 = vadd.f32 0.0, %v1081
          %v1083 = vpop.f32.mrb[0].mxu0
          %1084 = vmatprep.mubr.f32.mxu0 0.0
          %v1085 = vand.u32 %v992, 4294901760
          %v1086 = vsub.f32 %v992, %v1085
          %v1087 = vand.u32 %v1086, 4294901760
          %v1088 = vsub.f32 %v1086, %v1087
          %v1089 = vand.u32 %v1088, 4294901760
          %1090 = vmatmul.mubr.f32.gmra.mrb[0].mxu0 %v1089
          %v1091 = vpop.f32.mrb[0].mxu0
          %v1092 = vadd.f32 0.0, %v1091
          %v1093 = vpop.f32.mrb[0].mxu0
          %1094 = vmatprep.mubr.f32.mxu0 0.0
          %v1095 = vand.u32 %v993, 4294901760
          %v1096 = vsub.f32 %v993, %v1095
          %v1097 = vand.u32 %v1096, 4294901760
          %v1098 = vsub.f32 %v1096, %v1097
          %v1099 = vand.u32 %v1098, 4294901760
          %1100 = vmatmul.mubr.f32.gmra.mrb[0].mxu0 %v1099
          %v1101 = vpop.f32.mrb[0].mxu0
          %v1102 = vadd.f32 0.0, %v1101
          %v1103 = vpop.f32.mrb[0].mxu0
          %1104 = vdwg.mxu0
          %1105 = vmatprep.subr.mxu0 0.0
          %v1106 = vand.u32 %v240, 4294901760
          %v1107 = vsub.f32 %v240, %v1106
          %v1108 = vand.u32 %v1107, 4294901760
          %v1109 = vsub.f32 %v1107, %v1108
          %v1110 = vand.u32 %v1109, 4294901760
          %1111 = vmatpush1.msra.mxu0 %v1110
          %1112 = vmatprep.subr.mxu0 0.0
          %v1113 = vand.u32 %v241, 4294901760
          %v1114 = vsub.f32 %v241, %v1113
          %v1115 = vand.u32 %v1114, 4294901760
          %v1116 = vsub.f32 %v1114, %v1115
          %v1117 = vand.u32 %v1116, 4294901760
          %1118 = vmatpush1.msra.mxu0 %v1117
          %1119 = vmatprep.subr.mxu0 0.0
          %v1120 = vand.u32 %v242, 4294901760
          %v1121 = vsub.f32 %v242, %v1120
          %v1122 = vand.u32 %v1121, 4294901760
          %v1123 = vsub.f32 %v1121, %v1122
          %v1124 = vand.u32 %v1123, 4294901760
          %1125 = vmatpush1.msra.mxu0 %v1124
          %1126 = vmatprep.subr.mxu0 0.0
          %v1127 = vand.u32 %v243, 4294901760
          %v1128 = vsub.f32 %v243, %v1127
          %v1129 = vand.u32 %v1128, 4294901760
          %v1130 = vsub.f32 %v1128, %v1129
          %v1131 = vand.u32 %v1130, 4294901760
          %1132 = vmatpush1.msra.mxu0 %v1131
          %1133 = vmatprep.subr.mxu0 0.0
          %v1134 = vand.u32 %v244, 4294901760
          %v1135 = vsub.f32 %v244, %v1134
          %v1136 = vand.u32 %v1135, 4294901760
          %v1137 = vsub.f32 %v1135, %v1136
          %v1138 = vand.u32 %v1137, 4294901760
          %1139 = vmatpush1.msra.mxu0 %v1138
          %1140 = vmatprep.subr.mxu0 0.0
          %v1141 = vand.u32 %v245, 4294901760
          %v1142 = vsub.f32 %v245, %v1141
          %v1143 = vand.u32 %v1142, 4294901760
          %v1144 = vsub.f32 %v1142, %v1143
          %v1145 = vand.u32 %v1144, 4294901760
          %1146 = vmatpush1.msra.mxu0 %v1145
          %1147 = vmatprep.subr.mxu0 0.0
          %v1148 = vand.u32 %v246, 4294901760
          %v1149 = vsub.f32 %v246, %v1148
          %v1150 = vand.u32 %v1149, 4294901760
          %v1151 = vsub.f32 %v1149, %v1150
          %v1152 = vand.u32 %v1151, 4294901760
          %1153 = vmatpush1.msra.mxu0 %v1152
          %1154 = vmatprep.subr.mxu0 0.0
          %v1155 = vand.u32 %v247, 4294901760
          %v1156 = vsub.f32 %v247, %v1155
          %v1157 = vand.u32 %v1156, 4294901760
          %v1158 = vsub.f32 %v1156, %v1157
          %v1159 = vand.u32 %v1158, 4294901760
          %1160 = vmatpush1.msra.mxu0 %v1159
          %1161 = vmatprep.subr.mxu0 0.0
          %v1162 = vand.u32 %v248, 4294901760
          %v1163 = vsub.f32 %v248, %v1162
          %v1164 = vand.u32 %v1163, 4294901760
          %v1165 = vsub.f32 %v1163, %v1164
          %v1166 = vand.u32 %v1165, 4294901760
          %1167 = vmatpush1.msra.mxu0 %v1166
          %1168 = vmatprep.subr.mxu0 0.0
          %v1169 = vand.u32 %v249, 4294901760
          %v1170 = vsub.f32 %v249, %v1169
          %v1171 = vand.u32 %v1170, 4294901760
          %v1172 = vsub.f32 %v1170, %v1171
          %v1173 = vand.u32 %v1172, 4294901760
          %1174 = vmatpush1.msra.mxu0 %v1173
          %1175 = vmatprep.subr.mxu0 0.0
          %v1176 = vand.u32 %v250, 4294901760
          %v1177 = vsub.f32 %v250, %v1176
          %v1178 = vand.u32 %v1177, 4294901760
          %v1179 = vsub.f32 %v1177, %v1178
          %v1180 = vand.u32 %v1179, 4294901760
          %1181 = vmatpush1.msra.mxu0 %v1180
          %1182 = vmatprep.subr.mxu0 0.0
          %v1183 = vand.u32 %v251, 4294901760
          %v1184 = vsub.f32 %v251, %v1183
          %v1185 = vand.u32 %v1184, 4294901760
          %v1186 = vsub.f32 %v1184, %v1185
          %v1187 = vand.u32 %v1186, 4294901760
          %1188 = vmatpush1.msra.mxu0 %v1187
          %1189 = vmatprep.subr.mxu0 0.0
          %v1190 = vand.u32 %v252, 4294901760
          %v1191 = vsub.f32 %v252, %v1190
          %v1192 = vand.u32 %v1191, 4294901760
          %v1193 = vsub.f32 %v1191, %v1192
          %v1194 = vand.u32 %v1193, 4294901760
          %1195 = vmatpush1.msra.mxu0 %v1194
          %1196 = vmatprep.subr.mxu0 0.0
          %v1197 = vand.u32 %v253, 4294901760
          %v1198 = vsub.f32 %v253, %v1197
          %v1199 = vand.u32 %v1198, 4294901760
          %v1200 = vsub.f32 %v1198, %v1199
          %v1201 = vand.u32 %v1200, 4294901760
          %1202 = vmatpush1.msra.mxu0 %v1201
          %1203 = vmatprep.subr.mxu0 0.0
          %v1204 = vand.u32 %v254, 4294901760
          %v1205 = vsub.f32 %v254, %v1204
          %v1206 = vand.u32 %v1205, 4294901760
          %v1207 = vsub.f32 %v1205, %v1206
          %v1208 = vand.u32 %v1207, 4294901760
          %1209 = vmatpush1.msra.mxu0 %v1208
          %1210 = vmatprep.subr.mxu0 0.0
          %v1211 = vand.u32 %v255, 4294901760
          %v1212 = vsub.f32 %v255, %v1211
          %v1213 = vand.u32 %v1212, 4294901760
          %v1214 = vsub.f32 %v1212, %v1213
          %v1215 = vand.u32 %v1214, 4294901760
          %1216 = vmatpush1.msra.mxu0 %v1215
          %1217 = vmatprep.subr.mxu0 0.0
          %1218 = vmatpush1.msra.mxu0 0.0
          %1219 = vmatprep.subr.mxu0 0.0
          %1220 = vmatpush1.msra.mxu0 0.0
          %1221 = vmatprep.subr.mxu0 0.0
          %1222 = vmatpush1.msra.mxu0 0.0
          %1223 = vmatprep.subr.mxu0 0.0
          %1224 = vmatpush1.msra.mxu0 0.0
          %1225 = vmatprep.subr.mxu0 0.0
          %1226 = vmatpush1.msra.mxu0 0.0
          %1227 = vmatprep.subr.mxu0 0.0
          %1228 = vmatpush1.msra.mxu0 0.0
          %1229 = vmatprep.subr.mxu0 0.0
          %1230 = vmatpush1.msra.mxu0 0.0
          %1231 = vmatprep.subr.mxu0 0.0
          %1232 = vmatpush1.msra.mxu0 0.0
          %1233 = vmatprep.subr.mxu0 0.0
          %1234 = vmatpush1.msra.mxu0 0.0
          %1235 = vmatprep.subr.mxu0 0.0
          %1236 = vmatpush1.msra.mxu0 0.0
          %1237 = vmatprep.subr.mxu0 0.0
          %1238 = vmatpush1.msra.mxu0 0.0
          %1239 = vmatprep.subr.mxu0 0.0
          %1240 = vmatpush1.msra.mxu0 0.0
          %1241 = vmatprep.subr.mxu0 0.0
          %1242 = vmatpush1.msra.mxu0 0.0
          %1243 = vmatprep.subr.mxu0 0.0
          %1244 = vmatpush1.msra.mxu0 0.0
          %1245 = vmatprep.subr.mxu0 0.0
          %1246 = vmatpush1.msra.mxu0 0.0
          %1247 = vmatprep.subr.mxu0 0.0
          %1248 = vmatpush1.msra.mxu0 0.0
          %1249 = vmatprep.mubr.f32.mxu0 0.0
          %v1250 = vand.u32 %v991, 4294901760
          %1251 = vmatmul.mubr.f32.gmra.mrb[0].mxu0 %v1250
          %v1252 = vpop.f32.mrb[0].mxu0
          %v1253 = vadd.f32 %v1082, %v1252
          %v1254 = vpop.f32.mrb[0].mxu0
          %1255 = vmatprep.mubr.f32.mxu0 0.0
          %v1256 = vand.u32 %v992, 4294901760
          %1257 = vmatmul.mubr.f32.gmra.mrb[0].mxu0 %v1256
          %v1258 = vpop.f32.mrb[0].mxu0
          %v1259 = vadd.f32 %v1092, %v1258
          %v1260 = vpop.f32.mrb[0].mxu0
          %1261 = vmatprep.mubr.f32.mxu0 0.0
          %v1262 = vand.u32 %v993, 4294901760
          %1263 = vmatmul.mubr.f32.gmra.mrb[0].mxu0 %v1262
          %v1264 = vpop.f32.mrb[0].mxu0
          %v1265 = vadd.f32 %v1102, %v1264
          %v1266 = vpop.f32.mrb[0].mxu0
          %1267 = vdwg.mxu0
          %1268 = vmatprep.subr.mxu0 0.0
          %v1269 = vand.u32 %v240, 4294901760
          %v1270 = vsub.f32 %v240, %v1269
          %1271 = vmatpush1.msra.mxu0 %v1270
          %1272 = vmatprep.subr.mxu0 0.0
          %v1273 = vand.u32 %v241, 4294901760
          %v1274 = vsub.f32 %v241, %v1273
          %1275 = vmatpush1.msra.mxu0 %v1274
          %1276 = vmatprep.subr.mxu0 0.0
          %v1277 = vand.u32 %v242, 4294901760
          %v1278 = vsub.f32 %v242, %v1277
          %1279 = vmatpush1.msra.mxu0 %v1278
          %1280 = vmatprep.subr.mxu0 0.0
          %v1281 = vand.u32 %v243, 4294901760
          %v1282 = vsub.f32 %v243, %v1281
          %1283 = vmatpush1.msra.mxu0 %v1282
          %1284 = vmatprep.subr.mxu0 0.0
          %v1285 = vand.u32 %v244, 4294901760
          %v1286 = vsub.f32 %v244, %v1285
          %1287 = vmatpush1.msra.mxu0 %v1286
          %1288 = vmatprep.subr.mxu0 0.0
          %v1289 = vand.u32 %v245, 4294901760
          %v1290 = vsub.f32 %v245, %v1289
          %1291 = vmatpush1.msra.mxu0 %v1290
          %1292 = vmatprep.subr.mxu0 0.0
          %v1293 = vand.u32 %v246, 4294901760
          %v1294 = vsub.f32 %v246, %v1293
          %1295 = vmatpush1.msra.mxu0 %v1294
          %1296 = vmatprep.subr.mxu0 0.0
          %v1297 = vand.u32 %v247, 4294901760
          %v1298 = vsub.f32 %v247, %v1297
          %1299 = vmatpush1.msra.mxu0 %v1298
          %1300 = vmatprep.subr.mxu0 0.0
          %v1301 = vand.u32 %v248, 4294901760
          %v1302 = vsub.f32 %v248, %v1301
          %1303 = vmatpush1.msra.mxu0 %v1302
          %1304 = vmatprep.subr.mxu0 0.0
          %v1305 = vand.u32 %v249, 4294901760
          %v1306 = vsub.f32 %v249, %v1305
          %1307 = vmatpush1.msra.mxu0 %v1306
          %1308 = vmatprep.subr.mxu0 0.0
          %v1309 = vand.u32 %v250, 4294901760
          %v1310 = vsub.f32 %v250, %v1309
          %1311 = vmatpush1.msra.mxu0 %v1310
          %1312 = vmatprep.subr.mxu0 0.0
          %v1313 = vand.u32 %v251, 4294901760
          %v1314 = vsub.f32 %v251, %v1313
          %1315 = vmatpush1.msra.mxu0 %v1314
          %1316 = vmatprep.subr.mxu0 0.0
          %v1317 = vand.u32 %v252, 4294901760
          %v1318 = vsub.f32 %v252, %v1317
          %1319 = vmatpush1.msra.mxu0 %v1318
          %1320 = vmatprep.subr.mxu0 0.0
          %v1321 = vand.u32 %v253, 4294901760
          %v1322 = vsub.f32 %v253, %v1321
          %1323 = vmatpush1.msra.mxu0 %v1322
          %1324 = vmatprep.subr.mxu0 0.0
          %v1325 = vand.u32 %v254, 4294901760
          %v1326 = vsub.f32 %v254, %v1325
          %1327 = vmatpush1.msra.mxu0 %v1326
          %1328 = vmatprep.subr.mxu0 0.0
          %v1329 = vand.u32 %v255, 4294901760
          %v1330 = vsub.f32 %v255, %v1329
          %1331 = vmatpush1.msra.mxu0 %v1330
          %1332 = vmatprep.subr.mxu0 0.0
          %1333 = vmatpush1.msra.mxu0 0.0
          %1334 = vmatprep.subr.mxu0 0.0
          %1335 = vmatpush1.msra.mxu0 0.0
          %1336 = vmatprep.subr.mxu0 0.0
          %1337 = vmatpush1.msra.mxu0 0.0
          %1338 = vmatprep.subr.mxu0 0.0
          %1339 = vmatpush1.msra.mxu0 0.0
          %1340 = vmatprep.subr.mxu0 0.0
          %1341 = vmatpush1.msra.mxu0 0.0
          %1342 = vmatprep.subr.mxu0 0.0
          %1343 = vmatpush1.msra.mxu0 0.0
          %1344 = vmatprep.subr.mxu0 0.0
          %1345 = vmatpush1.msra.mxu0 0.0
          %1346 = vmatprep.subr.mxu0 0.0
          %1347 = vmatpush1.msra.mxu0 0.0
          %1348 = vmatprep.subr.mxu0 0.0
          %1349 = vmatpush1.msra.mxu0 0.0
          %1350 = vmatprep.subr.mxu0 0.0
          %1351 = vmatpush1.msra.mxu0 0.0
          %1352 = vmatprep.subr.mxu0 0.0
          %1353 = vmatpush1.msra.mxu0 0.0
          %1354 = vmatprep.subr.mxu0 0.0
          %1355 = vmatpush1.msra.mxu0 0.0
          %1356 = vmatprep.subr.mxu0 0.0
          %1357 = vmatpush1.msra.mxu0 0.0
          %1358 = vmatprep.subr.mxu0 0.0
          %1359 = vmatpush1.msra.mxu0 0.0
          %1360 = vmatprep.subr.mxu0 0.0
          %1361 = vmatpush1.msra.mxu0 0.0
          %1362 = vmatprep.subr.mxu0 0.0
          %1363 = vmatpush1.msra.mxu0 0.0
          %1364 = vmatprep.mubr.f32.mxu0 0.0
          %v1365 = vand.u32 %v991, 4294901760
          %v1366 = vsub.f32 %v991, %v1365
          %1367 = vmatmul.mubr.f32.gmra.mrb[0].mxu0 %v1366
          %v1368 = vpop.f32.mrb[0].mxu0
          %v1369 = vadd.f32 %v1253, %v1368
          %v1370 = vpop.f32.mrb[0].mxu0
          %1371 = vmatprep.mubr.f32.mxu0 0.0
          %v1372 = vand.u32 %v992, 4294901760
          %v1373 = vsub.f32 %v992, %v1372
          %1374 = vmatmul.mubr.f32.gmra.mrb[0].mxu0 %v1373
          %v1375 = vpop.f32.mrb[0].mxu0
          %v1376 = vadd.f32 %v1259, %v1375
          %v1377 = vpop.f32.mrb[0].mxu0
          %1378 = vmatprep.mubr.f32.mxu0 0.0
          %v1379 = vand.u32 %v993, 4294901760
          %v1380 = vsub.f32 %v993, %v1379
          %1381 = vmatmul.mubr.f32.gmra.mrb[0].mxu0 %v1380
          %v1382 = vpop.f32.mrb[0].mxu0
          %v1383 = vadd.f32 %v1265, %v1382
          %v1384 = vpop.f32.mrb[0].mxu0
          %1385 = vdwg.mxu0
          %1386 = vmatprep.subr.mxu0 0.0
          %v1387 = vand.u32 %v240, 4294901760
          %1388 = vmatpush1.msra.mxu0 %v1387
          %1389 = vmatprep.subr.mxu0 0.0
          %v1390 = vand.u32 %v241, 4294901760
          %1391 = vmatpush1.msra.mxu0 %v1390
          %1392 = vmatprep.subr.mxu0 0.0
          %v1393 = vand.u32 %v242, 4294901760
          %1394 = vmatpush1.msra.mxu0 %v1393
          %1395 = vmatprep.subr.mxu0 0.0
          %v1396 = vand.u32 %v243, 4294901760
          %1397 = vmatpush1.msra.mxu0 %v1396
          %1398 = vmatprep.subr.mxu0 0.0
          %v1399 = vand.u32 %v244, 4294901760
          %1400 = vmatpush1.msra.mxu0 %v1399
          %1401 = vmatprep.subr.mxu0 0.0
          %v1402 = vand.u32 %v245, 4294901760
          %1403 = vmatpush1.msra.mxu0 %v1402
          %1404 = vmatprep.subr.mxu0 0.0
          %v1405 = vand.u32 %v246, 4294901760
          %1406 = vmatpush1.msra.mxu0 %v1405
          %1407 = vmatprep.subr.mxu0 0.0
          %v1408 = vand.u32 %v247, 4294901760
          %1409 = vmatpush1.msra.mxu0 %v1408
          %1410 = vmatprep.subr.mxu0 0.0
          %v1411 = vand.u32 %v248, 4294901760
          %1412 = vmatpush1.msra.mxu0 %v1411
          %1413 = vmatprep.subr.mxu0 0.0
          %v1414 = vand.u32 %v249, 4294901760
          %1415 = vmatpush1.msra.mxu0 %v1414
          %1416 = vmatprep.subr.mxu0 0.0
          %v1417 = vand.u32 %v250, 4294901760
          %1418 = vmatpush1.msra.mxu0 %v1417
          %1419 = vmatprep.subr.mxu0 0.0
          %v1420 = vand.u32 %v251, 4294901760
          %1421 = vmatpush1.msra.mxu0 %v1420
          %1422 = vmatprep.subr.mxu0 0.0
          %v1423 = vand.u32 %v252, 4294901760
          %1424 = vmatpush1.msra.mxu0 %v1423
          %1425 = vmatprep.subr.mxu0 0.0
          %v1426 = vand.u32 %v253, 4294901760
          %1427 = vmatpush1.msra.mxu0 %v1426
          %1428 = vmatprep.subr.mxu0 0.0
          %v1429 = vand.u32 %v254, 4294901760
          %1430 = vmatpush1.msra.mxu0 %v1429
          %1431 = vmatprep.subr.mxu0 0.0
          %v1432 = vand.u32 %v255, 4294901760
          %1433 = vmatpush1.msra.mxu0 %v1432
          %1434 = vmatprep.subr.mxu0 0.0
          %1435 = vmatpush1.msra.mxu0 0.0
          %1436 = vmatprep.subr.mxu0 0.0
          %1437 = vmatpush1.msra.mxu0 0.0
          %1438 = vmatprep.subr.mxu0 0.0
          %1439 = vmatpush1.msra.mxu0 0.0
          %1440 = vmatprep.subr.mxu0 0.0
          %1441 = vmatpush1.msra.mxu0 0.0
          %1442 = vmatprep.subr.mxu0 0.0
          %1443 = vmatpush1.msra.mxu0 0.0
          %1444 = vmatprep.subr.mxu0 0.0
          %1445 = vmatpush1.msra.mxu0 0.0
          %1446 = vmatprep.subr.mxu0 0.0
          %1447 = vmatpush1.msra.mxu0 0.0
          %1448 = vmatprep.subr.mxu0 0.0
          %1449 = vmatpush1.msra.mxu0 0.0
          %1450 = vmatprep.subr.mxu0 0.0
          %1451 = vmatpush1.msra.mxu0 0.0
          %1452 = vmatprep.subr.mxu0 0.0
          %1453 = vmatpush1.msra.mxu0 0.0
          %1454 = vmatprep.subr.mxu0 0.0
          %1455 = vmatpush1.msra.mxu0 0.0
          %1456 = vmatprep.subr.mxu0 0.0
          %1457 = vmatpush1.msra.mxu0 0.0
          %1458 = vmatprep.subr.mxu0 0.0
          %1459 = vmatpush1.msra.mxu0 0.0
          %1460 = vmatprep.subr.mxu0 0.0
          %1461 = vmatpush1.msra.mxu0 0.0
          %1462 = vmatprep.subr.mxu0 0.0
          %1463 = vmatpush1.msra.mxu0 0.0
          %1464 = vmatprep.subr.mxu0 0.0
          %1465 = vmatpush1.msra.mxu0 0.0
          %1466 = vmatprep.mubr.f32.mxu0 0.0
          %v1467 = vand.u32 %v991, 4294901760
          %v1468 = vsub.f32 %v991, %v1467
          %v1469 = vand.u32 %v1468, 4294901760
          %1470 = vmatmul.mubr.f32.gmra.mrb[0].mxu0 %v1469
          %v1471 = vpop.f32.mrb[0].mxu0
          %v1472 = vadd.f32 %v1369, %v1471
          %v1473 = vpop.f32.mrb[0].mxu0
          %1474 = vmatprep.mubr.f32.mxu0 0.0
          %v1475 = vand.u32 %v992, 4294901760
          %v1476 = vsub.f32 %v992, %v1475
          %v1477 = vand.u32 %v1476, 4294901760
          %1478 = vmatmul.mubr.f32.gmra.mrb[0].mxu0 %v1477
          %v1479 = vpop.f32.mrb[0].mxu0
          %v1480 = vadd.f32 %v1376, %v1479
          %v1481 = vpop.f32.mrb[0].mxu0
          %1482 = vmatprep.mubr.f32.mxu0 0.0
          %v1483 = vand.u32 %v993, 4294901760
          %v1484 = vsub.f32 %v993, %v1483
          %v1485 = vand.u32 %v1484, 4294901760
          %1486 = vmatmul.mubr.f32.gmra.mrb[0].mxu0 %v1485
          %v1487 = vpop.f32.mrb[0].mxu0
          %v1488 = vadd.f32 %v1383, %v1487
          %v1489 = vpop.f32.mrb[0].mxu0
          %1490 = vdwg.mxu0
          %1491 = vmatprep.subr.mxu0 0.0
          %v1492 = vand.u32 %v240, 4294901760
          %v1493 = vsub.f32 %v240, %v1492
          %v1494 = vand.u32 %v1493, 4294901760
          %1495 = vmatpush1.msra.mxu0 %v1494
          %1496 = vmatprep.subr.mxu0 0.0
          %v1497 = vand.u32 %v241, 4294901760
          %v1498 = vsub.f32 %v241, %v1497
          %v1499 = vand.u32 %v1498, 4294901760
          %1500 = vmatpush1.msra.mxu0 %v1499
          %1501 = vmatprep.subr.mxu0 0.0
          %v1502 = vand.u32 %v242, 4294901760
          %v1503 = vsub.f32 %v242, %v1502
          %v1504 = vand.u32 %v1503, 4294901760
          %1505 = vmatpush1.msra.mxu0 %v1504
          %1506 = vmatprep.subr.mxu0 0.0
          %v1507 = vand.u32 %v243, 4294901760
          %v1508 = vsub.f32 %v243, %v1507
          %v1509 = vand.u32 %v1508, 4294901760
          %1510 = vmatpush1.msra.mxu0 %v1509
          %1511 = vmatprep.subr.mxu0 0.0
          %v1512 = vand.u32 %v244, 4294901760
          %v1513 = vsub.f32 %v244, %v1512
          %v1514 = vand.u32 %v1513, 4294901760
          %1515 = vmatpush1.msra.mxu0 %v1514
          %1516 = vmatprep.subr.mxu0 0.0
          %v1517 = vand.u32 %v245, 4294901760
          %v1518 = vsub.f32 %v245, %v1517
          %v1519 = vand.u32 %v1518, 4294901760
          %1520 = vmatpush1.msra.mxu0 %v1519
          %1521 = vmatprep.subr.mxu0 0.0
          %v1522 = vand.u32 %v246, 4294901760
          %v1523 = vsub.f32 %v246, %v1522
          %v1524 = vand.u32 %v1523, 4294901760
          %1525 = vmatpush1.msra.mxu0 %v1524
          %1526 = vmatprep.subr.mxu0 0.0
          %v1527 = vand.u32 %v247, 4294901760
          %v1528 = vsub.f32 %v247, %v1527
          %v1529 = vand.u32 %v1528, 4294901760
          %1530 = vmatpush1.msra.mxu0 %v1529
          %1531 = vmatprep.subr.mxu0 0.0
          %v1532 = vand.u32 %v248, 4294901760
          %v1533 = vsub.f32 %v248, %v1532
          %v1534 = vand.u32 %v1533, 4294901760
          %1535 = vmatpush1.msra.mxu0 %v1534
          %1536 = vmatprep.subr.mxu0 0.0
          %v1537 = vand.u32 %v249, 4294901760
          %v1538 = vsub.f32 %v249, %v1537
          %v1539 = vand.u32 %v1538, 4294901760
          %1540 = vmatpush1.msra.mxu0 %v1539
          %1541 = vmatprep.subr.mxu0 0.0
          %v1542 = vand.u32 %v250, 4294901760
          %v1543 = vsub.f32 %v250, %v1542
          %v1544 = vand.u32 %v1543, 4294901760
          %1545 = vmatpush1.msra.mxu0 %v1544
          %1546 = vmatprep.subr.mxu0 0.0
          %v1547 = vand.u32 %v251, 4294901760
          %v1548 = vsub.f32 %v251, %v1547
          %v1549 = vand.u32 %v1548, 4294901760
          %1550 = vmatpush1.msra.mxu0 %v1549
          %1551 = vmatprep.subr.mxu0 0.0
          %v1552 = vand.u32 %v252, 4294901760
          %v1553 = vsub.f32 %v252, %v1552
          %v1554 = vand.u32 %v1553, 4294901760
          %1555 = vmatpush1.msra.mxu0 %v1554
          %1556 = vmatprep.subr.mxu0 0.0
          %v1557 = vand.u32 %v253, 4294901760
          %v1558 = vsub.f32 %v253, %v1557
          %v1559 = vand.u32 %v1558, 4294901760
          %1560 = vmatpush1.msra.mxu0 %v1559
          %1561 = vmatprep.subr.mxu0 0.0
          %v1562 = vand.u32 %v254, 4294901760
          %v1563 = vsub.f32 %v254, %v1562
          %v1564 = vand.u32 %v1563, 4294901760
          %1565 = vmatpush1.msra.mxu0 %v1564
          %1566 = vmatprep.subr.mxu0 0.0
          %v1567 = vand.u32 %v255, 4294901760
          %v1568 = vsub.f32 %v255, %v1567
          %v1569 = vand.u32 %v1568, 4294901760
          %1570 = vmatpush1.msra.mxu0 %v1569
          %1571 = vmatprep.subr.mxu0 0.0
          %1572 = vmatpush1.msra.mxu0 0.0
          %1573 = vmatprep.subr.mxu0 0.0
          %1574 = vmatpush1.msra.mxu0 0.0
          %1575 = vmatprep.subr.mxu0 0.0
          %1576 = vmatpush1.msra.mxu0 0.0
          %1577 = vmatprep.subr.mxu0 0.0
          %1578 = vmatpush1.msra.mxu0 0.0
          %1579 = vmatprep.subr.mxu0 0.0
          %1580 = vmatpush1.msra.mxu0 0.0
          %1581 = vmatprep.subr.mxu0 0.0
          %1582 = vmatpush1.msra.mxu0 0.0
          %1583 = vmatprep.subr.mxu0 0.0
          %1584 = vmatpush1.msra.mxu0 0.0
          %1585 = vmatprep.subr.mxu0 0.0
          %1586 = vmatpush1.msra.mxu0 0.0
          %1587 = vmatprep.subr.mxu0 0.0
          %1588 = vmatpush1.msra.mxu0 0.0
          %1589 = vmatprep.subr.mxu0 0.0
          %1590 = vmatpush1.msra.mxu0 0.0
          %1591 = vmatprep.subr.mxu0 0.0
          %1592 = vmatpush1.msra.mxu0 0.0
          %1593 = vmatprep.subr.mxu0 0.0
          %1594 = vmatpush1.msra.mxu0 0.0
          %1595 = vmatprep.subr.mxu0 0.0
          %1596 = vmatpush1.msra.mxu0 0.0
          %1597 = vmatprep.subr.mxu0 0.0
          %1598 = vmatpush1.msra.mxu0 0.0
          %1599 = vmatprep.subr.mxu0 0.0
          %1600 = vmatpush1.msra.mxu0 0.0
          %1601 = vmatprep.subr.mxu0 0.0
          %1602 = vmatpush1.msra.mxu0 0.0
          %1603 = vmatprep.mubr.f32.mxu0 0.0
          %v1604 = vand.u32 %v991, 4294901760
          %1605 = vmatmul.mubr.f32.gmra.mrb[0].mxu0 %v1604
          %v1606 = vpop.f32.mrb[0].mxu0
          %v1607 = vadd.f32 %v1472, %v1606
          %v1608 = vpop.f32.mrb[0].mxu0
          %1609 = vmatprep.mubr.f32.mxu0 0.0
          %v1610 = vand.u32 %v992, 4294901760
          %1611 = vmatmul.mubr.f32.gmra.mrb[0].mxu0 %v1610
          %v1612 = vpop.f32.mrb[0].mxu0
          %v1613 = vadd.f32 %v1480, %v1612
          %v1614 = vpop.f32.mrb[0].mxu0
          %1615 = vmatprep.mubr.f32.mxu0 0.0
          %v1616 = vand.u32 %v993, 4294901760
          %1617 = vmatmul.mubr.f32.gmra.mrb[0].mxu0 %v1616
          %v1618 = vpop.f32.mrb[0].mxu0
          %v1619 = vadd.f32 %v1488, %v1618
          %v1620 = vpop.f32.mrb[0].mxu0
          %1621 = vdwg.mxu0
          %1622 = vmatprep.subr.mxu0 0.0
          %v1623 = vand.u32 %v240, 4294901760
          %1624 = vmatpush1.msra.mxu0 %v1623
          %1625 = vmatprep.subr.mxu0 0.0
          %v1626 = vand.u32 %v241, 4294901760
          %1627 = vmatpush1.msra.mxu0 %v1626
          %1628 = vmatprep.subr.mxu0 0.0
          %v1629 = vand.u32 %v242, 4294901760
          %1630 = vmatpush1.msra.mxu0 %v1629
          %1631 = vmatprep.subr.mxu0 0.0
          %v1632 = vand.u32 %v243, 4294901760
          %1633 = vmatpush1.msra.mxu0 %v1632
          %1634 = vmatprep.subr.mxu0 0.0
          %v1635 = vand.u32 %v244, 4294901760
          %1636 = vmatpush1.msra.mxu0 %v1635
          %1637 = vmatprep.subr.mxu0 0.0
          %v1638 = vand.u32 %v245, 4294901760
          %1639 = vmatpush1.msra.mxu0 %v1638
          %1640 = vmatprep.subr.mxu0 0.0
          %v1641 = vand.u32 %v246, 4294901760
          %1642 = vmatpush1.msra.mxu0 %v1641
          %1643 = vmatprep.subr.mxu0 0.0
          %v1644 = vand.u32 %v247, 4294901760
          %1645 = vmatpush1.msra.mxu0 %v1644
          %1646 = vmatprep.subr.mxu0 0.0
          %v1647 = vand.u32 %v248, 4294901760
          %1648 = vmatpush1.msra.mxu0 %v1647
          %1649 = vmatprep.subr.mxu0 0.0
          %v1650 = vand.u32 %v249, 4294901760
          %1651 = vmatpush1.msra.mxu0 %v1650
          %1652 = vmatprep.subr.mxu0 0.0
          %v1653 = vand.u32 %v250, 4294901760
          %1654 = vmatpush1.msra.mxu0 %v1653
          %1655 = vmatprep.subr.mxu0 0.0
          %v1656 = vand.u32 %v251, 4294901760
          %1657 = vmatpush1.msra.mxu0 %v1656
          %1658 = vmatprep.subr.mxu0 0.0
          %v1659 = vand.u32 %v252, 4294901760
          %1660 = vmatpush1.msra.mxu0 %v1659
          %1661 = vmatprep.subr.mxu0 0.0
          %v1662 = vand.u32 %v253, 4294901760
          %1663 = vmatpush1.msra.mxu0 %v1662
          %1664 = vmatprep.subr.mxu0 0.0
          %v1665 = vand.u32 %v254, 4294901760
          %1666 = vmatpush1.msra.mxu0 %v1665
          %1667 = vmatprep.subr.mxu0 0.0
          %v1668 = vand.u32 %v255, 4294901760
          %1669 = vmatpush1.msra.mxu0 %v1668
          %1670 = vmatprep.subr.mxu0 0.0
          %1671 = vmatpush1.msra.mxu0 0.0
          %1672 = vmatprep.subr.mxu0 0.0
          %1673 = vmatpush1.msra.mxu0 0.0
          %1674 = vmatprep.subr.mxu0 0.0
          %1675 = vmatpush1.msra.mxu0 0.0
          %1676 = vmatprep.subr.mxu0 0.0
          %1677 = vmatpush1.msra.mxu0 0.0
          %1678 = vmatprep.subr.mxu0 0.0
          %1679 = vmatpush1.msra.mxu0 0.0
          %1680 = vmatprep.subr.mxu0 0.0
          %1681 = vmatpush1.msra.mxu0 0.0
          %1682 = vmatprep.subr.mxu0 0.0
          %1683 = vmatpush1.msra.mxu0 0.0
          %1684 = vmatprep.subr.mxu0 0.0
          %1685 = vmatpush1.msra.mxu0 0.0
          %1686 = vmatprep.subr.mxu0 0.0
          %1687 = vmatpush1.msra.mxu0 0.0
          %1688 = vmatprep.subr.mxu0 0.0
          %1689 = vmatpush1.msra.mxu0 0.0
          %1690 = vmatprep.subr.mxu0 0.0
          %1691 = vmatpush1.msra.mxu0 0.0
          %1692 = vmatprep.subr.mxu0 0.0
          %1693 = vmatpush1.msra.mxu0 0.0
          %1694 = vmatprep.subr.mxu0 0.0
          %1695 = vmatpush1.msra.mxu0 0.0
          %1696 = vmatprep.subr.mxu0 0.0
          %1697 = vmatpush1.msra.mxu0 0.0
          %1698 = vmatprep.subr.mxu0 0.0
          %1699 = vmatpush1.msra.mxu0 0.0
          %1700 = vmatprep.subr.mxu0 0.0
          %1701 = vmatpush1.msra.mxu0 0.0
          %1702 = vmatprep.mubr.f32.mxu0 0.0
          %v1703 = vand.u32 %v991, 4294901760
          %1704 = vmatmul.mubr.f32.gmra.mrb[0].mxu0 %v1703
          %v1705 = vpop.f32.mrb[0].mxu0
          %v1706 = vadd.f32 %v1607, %v1705
          %v1707 = vpop.f32.mrb[0].mxu0
          %1708 = vmatprep.mubr.f32.mxu0 0.0
          %v1709 = vand.u32 %v992, 4294901760
          %1710 = vmatmul.mubr.f32.gmra.mrb[0].mxu0 %v1709
          %v1711 = vpop.f32.mrb[0].mxu0
          %v1712 = vadd.f32 %v1613, %v1711
          %v1713 = vpop.f32.mrb[0].mxu0
          %1714 = vmatprep.mubr.f32.mxu0 0.0
          %v1715 = vand.u32 %v993, 4294901760
          %1716 = vmatmul.mubr.f32.gmra.mrb[0].mxu0 %v1715
          %v1717 = vpop.f32.mrb[0].mxu0
          %v1718 = vadd.f32 %v1619, %v1717
          %v1719 = vpop.f32.mrb[0].mxu0
          %1720 = vdwg.mxu0
          %1724 = vrot.lane.b32.xlu0 %v1706, 32
          %v1725 = vpop.permute.xlu0 %1724
          %1726 = vrot.lane.b32.xlu0 %v1712, 32
          %v1727 = vpop.permute.xlu0 %1726
          %1728 = vrot.lane.b32.xlu0 %v1718, 32
          %v1729 = vpop.permute.xlu0 %1728
          %vm1733 = vcmask 523520
          %1734 = vst.msk [vmem:[#allocation2] sm:$0xff] %vm1733, %v1725
          %1735 = vst.msk [vmem:[#allocation2 + $0x8] sm:$0xff] %vm1733, %v1727
          %1736 = vst.msk [vmem:[#allocation2 + $0x10] sm:$0xff] %vm1733, %v1729
          %s1737 = scalar_lea.vmem %s223, 48
          %v1738 = vld [vmem:[%s1737] sm:$0xff]
          %v1739 = vld [vmem:[%s1737 + $0x8] sm:$0xff]
          %v1740 = vld [vmem:[%s1737 + $0x10] sm:$0xff]
          %1741 = vmatprep.subr.mxu0 0.0
          %v1742 = vand.u32 %v240, 4294901760
          %1743 = vmatpush1.msra.mxu0 %v1742
          %1744 = vmatprep.subr.mxu0 0.0
          %v1745 = vand.u32 %v241, 4294901760
          %1746 = vmatpush1.msra.mxu0 %v1745
          %1747 = vmatprep.subr.mxu0 0.0
          %v1748 = vand.u32 %v242, 4294901760
          %1749 = vmatpush1.msra.mxu0 %v1748
          %1750 = vmatprep.subr.mxu0 0.0
          %v1751 = vand.u32 %v243, 4294901760
          %1752 = vmatpush1.msra.mxu0 %v1751
          %1753 = vmatprep.subr.mxu0 0.0
          %v1754 = vand.u32 %v244, 4294901760
          %1755 = vmatpush1.msra.mxu0 %v1754
          %1756 = vmatprep.subr.mxu0 0.0
          %v1757 = vand.u32 %v245, 4294901760
          %1758 = vmatpush1.msra.mxu0 %v1757
          %1759 = vmatprep.subr.mxu0 0.0
          %v1760 = vand.u32 %v246, 4294901760
          %1761 = vmatpush1.msra.mxu0 %v1760
          %1762 = vmatprep.subr.mxu0 0.0
          %v1763 = vand.u32 %v247, 4294901760
          %1764 = vmatpush1.msra.mxu0 %v1763
          %1765 = vmatprep.subr.mxu0 0.0
          %v1766 = vand.u32 %v248, 4294901760
          %1767 = vmatpush1.msra.mxu0 %v1766
          %1768 = vmatprep.subr.mxu0 0.0
          %v1769 = vand.u32 %v249, 4294901760
          %1770 = vmatpush1.msra.mxu0 %v1769
          %1771 = vmatprep.subr.mxu0 0.0
          %v1772 = vand.u32 %v250, 4294901760
          %1773 = vmatpush1.msra.mxu0 %v1772
          %1774 = vmatprep.subr.mxu0 0.0
          %v1775 = vand.u32 %v251, 4294901760
          %1776 = vmatpush1.msra.mxu0 %v1775
          %1777 = vmatprep.subr.mxu0 0.0
          %v1778 = vand.u32 %v252, 4294901760
          %1779 = vmatpush1.msra.mxu0 %v1778
          %1780 = vmatprep.subr.mxu0 0.0
          %v1781 = vand.u32 %v253, 4294901760
          %1782 = vmatpush1.msra.mxu0 %v1781
          %1783 = vmatprep.subr.mxu0 0.0
          %v1784 = vand.u32 %v254, 4294901760
          %1785 = vmatpush1.msra.mxu0 %v1784
          %1786 = vmatprep.subr.mxu0 0.0
          %v1787 = vand.u32 %v255, 4294901760
          %1788 = vmatpush1.msra.mxu0 %v1787
          %1789 = vmatprep.subr.mxu0 0.0
          %1790 = vmatpush1.msra.mxu0 0.0
          %1791 = vmatprep.subr.mxu0 0.0
          %1792 = vmatpush1.msra.mxu0 0.0
          %1793 = vmatprep.subr.mxu0 0.0
          %1794 = vmatpush1.msra.mxu0 0.0
          %1795 = vmatprep.subr.mxu0 0.0
          %1796 = vmatpush1.msra.mxu0 0.0
          %1797 = vmatprep.subr.mxu0 0.0
          %1798 = vmatpush1.msra.mxu0 0.0
          %1799 = vmatprep.subr.mxu0 0.0
          %1800 = vmatpush1.msra.mxu0 0.0
          %1801 = vmatprep.subr.mxu0 0.0
          %1802 = vmatpush1.msra.mxu0 0.0
          %1803 = vmatprep.subr.mxu0 0.0
          %1804 = vmatpush1.msra.mxu0 0.0
          %1805 = vmatprep.subr.mxu0 0.0
          %1806 = vmatpush1.msra.mxu0 0.0
          %1807 = vmatprep.subr.mxu0 0.0
          %1808 = vmatpush1.msra.mxu0 0.0
          %1809 = vmatprep.subr.mxu0 0.0
          %1810 = vmatpush1.msra.mxu0 0.0
          %1811 = vmatprep.subr.mxu0 0.0
          %1812 = vmatpush1.msra.mxu0 0.0
          %1813 = vmatprep.subr.mxu0 0.0
          %1814 = vmatpush1.msra.mxu0 0.0
          %1815 = vmatprep.subr.mxu0 0.0
          %1816 = vmatpush1.msra.mxu0 0.0
          %1817 = vmatprep.subr.mxu0 0.0
          %1818 = vmatpush1.msra.mxu0 0.0
          %1819 = vmatprep.subr.mxu0 0.0
          %1820 = vmatpush1.msra.mxu0 0.0
          %1821 = vmatprep.mubr.f32.mxu0 0.0
          %v1822 = vand.u32 %v1738, 4294901760
          %v1823 = vsub.f32 %v1738, %v1822
          %v1824 = vand.u32 %v1823, 4294901760
          %v1825 = vsub.f32 %v1823, %v1824
          %v1826 = vand.u32 %v1825, 4294901760
          %1827 = vmatmul.mubr.f32.gmra.mrb[0].mxu0 %v1826
          %v1828 = vpop.f32.mrb[0].mxu0
          %v1829 = vadd.f32 0.0, %v1828
          %v1830 = vpop.f32.mrb[0].mxu0
          %1831 = vmatprep.mubr.f32.mxu0 0.0
          %v1832 = vand.u32 %v1739, 4294901760
          %v1833 = vsub.f32 %v1739, %v1832
          %v1834 = vand.u32 %v1833, 4294901760
          %v1835 = vsub.f32 %v1833, %v1834
          %v1836 = vand.u32 %v1835, 4294901760
          %1837 = vmatmul.mubr.f32.gmra.mrb[0].mxu0 %v1836
          %v1838 = vpop.f32.mrb[0].mxu0
          %v1839 = vadd.f32 0.0, %v1838
          %v1840 = vpop.f32.mrb[0].mxu0
          %1841 = vmatprep.mubr.f32.mxu0 0.0
          %v1842 = vand.u32 %v1740, 4294901760
          %v1843 = vsub.f32 %v1740, %v1842
          %v1844 = vand.u32 %v1843, 4294901760
          %v1845 = vsub.f32 %v1843, %v1844
          %v1846 = vand.u32 %v1845, 4294901760
          %1847 = vmatmul.mubr.f32.gmra.mrb[0].mxu0 %v1846
          %v1848 = vpop.f32.mrb[0].mxu0
          %v1849 = vadd.f32 0.0, %v1848
          %v1850 = vpop.f32.mrb[0].mxu0
          %1851 = vdwg.mxu0
          %1852 = vmatprep.subr.mxu0 0.0
          %v1853 = vand.u32 %v240, 4294901760
          %v1854 = vsub.f32 %v240, %v1853
          %v1855 = vand.u32 %v1854, 4294901760
          %v1856 = vsub.f32 %v1854, %v1855
          %v1857 = vand.u32 %v1856, 4294901760
          %1858 = vmatpush1.msra.mxu0 %v1857
          %1859 = vmatprep.subr.mxu0 0.0
          %v1860 = vand.u32 %v241, 4294901760
          %v1861 = vsub.f32 %v241, %v1860
          %v1862 = vand.u32 %v1861, 4294901760
          %v1863 = vsub.f32 %v1861, %v1862
          %v1864 = vand.u32 %v1863, 4294901760
          %1865 = vmatpush1.msra.mxu0 %v1864
          %1866 = vmatprep.subr.mxu0 0.0
          %v1867 = vand.u32 %v242, 4294901760
          %v1868 = vsub.f32 %v242, %v1867
          %v1869 = vand.u32 %v1868, 4294901760
          %v1870 = vsub.f32 %v1868, %v1869
          %v1871 = vand.u32 %v1870, 4294901760
          %1872 = vmatpush1.msra.mxu0 %v1871
          %1873 = vmatprep.subr.mxu0 0.0
          %v1874 = vand.u32 %v243, 4294901760
          %v1875 = vsub.f32 %v243, %v1874
          %v1876 = vand.u32 %v1875, 4294901760
          %v1877 = vsub.f32 %v1875, %v1876
          %v1878 = vand.u32 %v1877, 4294901760
          %1879 = vmatpush1.msra.mxu0 %v1878
          %1880 = vmatprep.subr.mxu0 0.0
          %v1881 = vand.u32 %v244, 4294901760
          %v1882 = vsub.f32 %v244, %v1881
          %v1883 = vand.u32 %v1882, 4294901760
          %v1884 = vsub.f32 %v1882, %v1883
          %v1885 = vand.u32 %v1884, 4294901760
          %1886 = vmatpush1.msra.mxu0 %v1885
          %1887 = vmatprep.subr.mxu0 0.0
          %v1888 = vand.u32 %v245, 4294901760
          %v1889 = vsub.f32 %v245, %v1888
          %v1890 = vand.u32 %v1889, 4294901760
          %v1891 = vsub.f32 %v1889, %v1890
          %v1892 = vand.u32 %v1891, 4294901760
          %1893 = vmatpush1.msra.mxu0 %v1892
          %1894 = vmatprep.subr.mxu0 0.0
          %v1895 = vand.u32 %v246, 4294901760
          %v1896 = vsub.f32 %v246, %v1895
          %v1897 = vand.u32 %v1896, 4294901760
          %v1898 = vsub.f32 %v1896, %v1897
          %v1899 = vand.u32 %v1898, 4294901760
          %1900 = vmatpush1.msra.mxu0 %v1899
          %1901 = vmatprep.subr.mxu0 0.0
          %v1902 = vand.u32 %v247, 4294901760
          %v1903 = vsub.f32 %v247, %v1902
          %v1904 = vand.u32 %v1903, 4294901760
          %v1905 = vsub.f32 %v1903, %v1904
          %v1906 = vand.u32 %v1905, 4294901760
          %1907 = vmatpush1.msra.mxu0 %v1906
          %1908 = vmatprep.subr.mxu0 0.0
          %v1909 = vand.u32 %v248, 4294901760
          %v1910 = vsub.f32 %v248, %v1909
          %v1911 = vand.u32 %v1910, 4294901760
          %v1912 = vsub.f32 %v1910, %v1911
          %v1913 = vand.u32 %v1912, 4294901760
          %1914 = vmatpush1.msra.mxu0 %v1913
          %1915 = vmatprep.subr.mxu0 0.0
          %v1916 = vand.u32 %v249, 4294901760
          %v1917 = vsub.f32 %v249, %v1916
          %v1918 = vand.u32 %v1917, 4294901760
          %v1919 = vsub.f32 %v1917, %v1918
          %v1920 = vand.u32 %v1919, 4294901760
          %1921 = vmatpush1.msra.mxu0 %v1920
          %1922 = vmatprep.subr.mxu0 0.0
          %v1923 = vand.u32 %v250, 4294901760
          %v1924 = vsub.f32 %v250, %v1923
          %v1925 = vand.u32 %v1924, 4294901760
          %v1926 = vsub.f32 %v1924, %v1925
          %v1927 = vand.u32 %v1926, 4294901760
          %1928 = vmatpush1.msra.mxu0 %v1927
          %1929 = vmatprep.subr.mxu0 0.0
          %v1930 = vand.u32 %v251, 4294901760
          %v1931 = vsub.f32 %v251, %v1930
          %v1932 = vand.u32 %v1931, 4294901760
          %v1933 = vsub.f32 %v1931, %v1932
          %v1934 = vand.u32 %v1933, 4294901760
          %1935 = vmatpush1.msra.mxu0 %v1934
          %1936 = vmatprep.subr.mxu0 0.0
          %v1937 = vand.u32 %v252, 4294901760
          %v1938 = vsub.f32 %v252, %v1937
          %v1939 = vand.u32 %v1938, 4294901760
          %v1940 = vsub.f32 %v1938, %v1939
          %v1941 = vand.u32 %v1940, 4294901760
          %1942 = vmatpush1.msra.mxu0 %v1941
          %1943 = vmatprep.subr.mxu0 0.0
          %v1944 = vand.u32 %v253, 4294901760
          %v1945 = vsub.f32 %v253, %v1944
          %v1946 = vand.u32 %v1945, 4294901760
          %v1947 = vsub.f32 %v1945, %v1946
          %v1948 = vand.u32 %v1947, 4294901760
          %1949 = vmatpush1.msra.mxu0 %v1948
          %1950 = vmatprep.subr.mxu0 0.0
          %v1951 = vand.u32 %v254, 4294901760
          %v1952 = vsub.f32 %v254, %v1951
          %v1953 = vand.u32 %v1952, 4294901760
          %v1954 = vsub.f32 %v1952, %v1953
          %v1955 = vand.u32 %v1954, 4294901760
          %1956 = vmatpush1.msra.mxu0 %v1955
          %1957 = vmatprep.subr.mxu0 0.0
          %v1958 = vand.u32 %v255, 4294901760
          %v1959 = vsub.f32 %v255, %v1958
          %v1960 = vand.u32 %v1959, 4294901760
          %v1961 = vsub.f32 %v1959, %v1960
          %v1962 = vand.u32 %v1961, 4294901760
          %1963 = vmatpush1.msra.mxu0 %v1962
          %1964 = vmatprep.subr.mxu0 0.0
          %1965 = vmatpush1.msra.mxu0 0.0
          %1966 = vmatprep.subr.mxu0 0.0
          %1967 = vmatpush1.msra.mxu0 0.0
          %1968 = vmatprep.subr.mxu0 0.0
          %1969 = vmatpush1.msra.mxu0 0.0
          %1970 = vmatprep.subr.mxu0 0.0
          %1971 = vmatpush1.msra.mxu0 0.0
          %1972 = vmatprep.subr.mxu0 0.0
          %1973 = vmatpush1.msra.mxu0 0.0
          %1974 = vmatprep.subr.mxu0 0.0
          %1975 = vmatpush1.msra.mxu0 0.0
          %1976 = vmatprep.subr.mxu0 0.0
          %1977 = vmatpush1.msra.mxu0 0.0
          %1978 = vmatprep.subr.mxu0 0.0
          %1979 = vmatpush1.msra.mxu0 0.0
          %1980 = vmatprep.subr.mxu0 0.0
          %1981 = vmatpush1.msra.mxu0 0.0
          %1982 = vmatprep.subr.mxu0 0.0
          %1983 = vmatpush1.msra.mxu0 0.0
          %1984 = vmatprep.subr.mxu0 0.0
          %1985 = vmatpush1.msra.mxu0 0.0
          %1986 = vmatprep.subr.mxu0 0.0
          %1987 = vmatpush1.msra.mxu0 0.0
          %1988 = vmatprep.subr.mxu0 0.0
          %1989 = vmatpush1.msra.mxu0 0.0
          %1990 = vmatprep.subr.mxu0 0.0
          %1991 = vmatpush1.msra.mxu0 0.0
          %1992 = vmatprep.subr.mxu0 0.0
          %1993 = vmatpush1.msra.mxu0 0.0
          %1994 = vmatprep.subr.mxu0 0.0
          %1995 = vmatpush1.msra.mxu0 0.0
          %1996 = vmatprep.mubr.f32.mxu0 0.0
          %v1997 = vand.u32 %v1738, 4294901760
          %1998 = vmatmul.mubr.f32.gmra.mrb[0].mxu0 %v1997
          %v1999 = vpop.f32.mrb[0].mxu0
          %v2000 = vadd.f32 %v1829, %v1999
          %v2001 = vpop.f32.mrb[0].mxu0
          %2002 = vmatprep.mubr.f32.mxu0 0.0
          %v2003 = vand.u32 %v1739, 4294901760
          %2004 = vmatmul.mubr.f32.gmra.mrb[0].mxu0 %v2003
          %v2005 = vpop.f32.mrb[0].mxu0
          %v2006 = vadd.f32 %v1839, %v2005
          %v2007 = vpop.f32.mrb[0].mxu0
          %2008 = vmatprep.mubr.f32.mxu0 0.0
          %v2009 = vand.u32 %v1740, 4294901760
          %2010 = vmatmul.mubr.f32.gmra.mrb[0].mxu0 %v2009
          %v2011 = vpop.f32.mrb[0].mxu0
          %v2012 = vadd.f32 %v1849, %v2011
          %v2013 = vpop.f32.mrb[0].mxu0
          %2014 = vdwg.mxu0
          %2015 = vmatprep.subr.mxu0 0.0
          %v2016 = vand.u32 %v240, 4294901760
          %v2017 = vsub.f32 %v240, %v2016
          %2018 = vmatpush1.msra.mxu0 %v2017
          %2019 = vmatprep.subr.mxu0 0.0
          %v2020 = vand.u32 %v241, 4294901760
          %v2021 = vsub.f32 %v241, %v2020
          %2022 = vmatpush1.msra.mxu0 %v2021
          %2023 = vmatprep.subr.mxu0 0.0
          %v2024 = vand.u32 %v242, 4294901760
          %v2025 = vsub.f32 %v242, %v2024
          %2026 = vmatpush1.msra.mxu0 %v2025
          %2027 = vmatprep.subr.mxu0 0.0
          %v2028 = vand.u32 %v243, 4294901760
          %v2029 = vsub.f32 %v243, %v2028
          %2030 = vmatpush1.msra.mxu0 %v2029
          %2031 = vmatprep.subr.mxu0 0.0
          %v2032 = vand.u32 %v244, 4294901760
          %v2033 = vsub.f32 %v244, %v2032
          %2034 = vmatpush1.msra.mxu0 %v2033
          %2035 = vmatprep.subr.mxu0 0.0
          %v2036 = vand.u32 %v245, 4294901760
          %v2037 = vsub.f32 %v245, %v2036
          %2038 = vmatpush1.msra.mxu0 %v2037
          %2039 = vmatprep.subr.mxu0 0.0
          %v2040 = vand.u32 %v246, 4294901760
          %v2041 = vsub.f32 %v246, %v2040
          %2042 = vmatpush1.msra.mxu0 %v2041
          %2043 = vmatprep.subr.mxu0 0.0
          %v2044 = vand.u32 %v247, 4294901760
          %v2045 = vsub.f32 %v247, %v2044
          %2046 = vmatpush1.msra.mxu0 %v2045
          %2047 = vmatprep.subr.mxu0 0.0
          %v2048 = vand.u32 %v248, 4294901760
          %v2049 = vsub.f32 %v248, %v2048
          %2050 = vmatpush1.msra.mxu0 %v2049
          %2051 = vmatprep.subr.mxu0 0.0
          %v2052 = vand.u32 %v249, 4294901760
          %v2053 = vsub.f32 %v249, %v2052
          %2054 = vmatpush1.msra.mxu0 %v2053
          %2055 = vmatprep.subr.mxu0 0.0
          %v2056 = vand.u32 %v250, 4294901760
          %v2057 = vsub.f32 %v250, %v2056
          %2058 = vmatpush1.msra.mxu0 %v2057
          %2059 = vmatprep.subr.mxu0 0.0
          %v2060 = vand.u32 %v251, 4294901760
          %v2061 = vsub.f32 %v251, %v2060
          %2062 = vmatpush1.msra.mxu0 %v2061
          %2063 = vmatprep.subr.mxu0 0.0
          %v2064 = vand.u32 %v252, 4294901760
          %v2065 = vsub.f32 %v252, %v2064
          %2066 = vmatpush1.msra.mxu0 %v2065
          %2067 = vmatprep.subr.mxu0 0.0
          %v2068 = vand.u32 %v253, 4294901760
          %v2069 = vsub.f32 %v253, %v2068
          %2070 = vmatpush1.msra.mxu0 %v2069
          %2071 = vmatprep.subr.mxu0 0.0
          %v2072 = vand.u32 %v254, 4294901760
          %v2073 = vsub.f32 %v254, %v2072
          %2074 = vmatpush1.msra.mxu0 %v2073
          %2075 = vmatprep.subr.mxu0 0.0
          %v2076 = vand.u32 %v255, 4294901760
          %v2077 = vsub.f32 %v255, %v2076
          %2078 = vmatpush1.msra.mxu0 %v2077
          %2079 = vmatprep.subr.mxu0 0.0
          %2080 = vmatpush1.msra.mxu0 0.0
          %2081 = vmatprep.subr.mxu0 0.0
          %2082 = vmatpush1.msra.mxu0 0.0
          %2083 = vmatprep.subr.mxu0 0.0
          %2084 = vmatpush1.msra.mxu0 0.0
          %2085 = vmatprep.subr.mxu0 0.0
          %2086 = vmatpush1.msra.mxu0 0.0
          %2087 = vmatprep.subr.mxu0 0.0
          %2088 = vmatpush1.msra.mxu0 0.0
          %2089 = vmatprep.subr.mxu0 0.0
          %2090 = vmatpush1.msra.mxu0 0.0
          %2091 = vmatprep.subr.mxu0 0.0
          %2092 = vmatpush1.msra.mxu0 0.0
          %2093 = vmatprep.subr.mxu0 0.0
          %2094 = vmatpush1.msra.mxu0 0.0
          %2095 = vmatprep.subr.mxu0 0.0
          %2096 = vmatpush1.msra.mxu0 0.0
          %2097 = vmatprep.subr.mxu0 0.0
          %2098 = vmatpush1.msra.mxu0 0.0
          %2099 = vmatprep.subr.mxu0 0.0
          %2100 = vmatpush1.msra.mxu0 0.0
          %2101 = vmatprep.subr.mxu0 0.0
          %2102 = vmatpush1.msra.mxu0 0.0
          %2103 = vmatprep.subr.mxu0 0.0
          %2104 = vmatpush1.msra.mxu0 0.0
          %2105 = vmatprep.subr.mxu0 0.0
          %2106 = vmatpush1.msra.mxu0 0.0
          %2107 = vmatprep.subr.mxu0 0.0
          %2108 = vmatpush1.msra.mxu0 0.0
          %2109 = vmatprep.subr.mxu0 0.0
          %2110 = vmatpush1.msra.mxu0 0.0
          %2111 = vmatprep.mubr.f32.mxu0 0.0
          %v2112 = vand.u32 %v1738, 4294901760
          %v2113 = vsub.f32 %v1738, %v2112
          %2114 = vmatmul.mubr.f32.gmra.mrb[0].mxu0 %v2113
          %v2115 = vpop.f32.mrb[0].mxu0
          %v2116 = vadd.f32 %v2000, %v2115
          %v2117 = vpop.f32.mrb[0].mxu0
          %2118 = vmatprep.mubr.f32.mxu0 0.0
          %v2119 = vand.u32 %v1739, 4294901760
          %v2120 = vsub.f32 %v1739, %v2119
          %2121 = vmatmul.mubr.f32.gmra.mrb[0].mxu0 %v2120
          %v2122 = vpop.f32.mrb[0].mxu0
          %v2123 = vadd.f32 %v2006, %v2122
          %v2124 = vpop.f32.mrb[0].mxu0
          %2125 = vmatprep.mubr.f32.mxu0 0.0
          %v2126 = vand.u32 %v1740, 4294901760
          %v2127 = vsub.f32 %v1740, %v2126
          %2128 = vmatmul.mubr.f32.gmra.mrb[0].mxu0 %v2127
          %v2129 = vpop.f32.mrb[0].mxu0
          %v2130 = vadd.f32 %v2012, %v2129
          %v2131 = vpop.f32.mrb[0].mxu0
          %2132 = vdwg.mxu0
          %2133 = vmatprep.subr.mxu0 0.0
          %v2134 = vand.u32 %v240, 4294901760
          %2135 = vmatpush1.msra.mxu0 %v2134
          %2136 = vmatprep.subr.mxu0 0.0
          %v2137 = vand.u32 %v241, 4294901760
          %2138 = vmatpush1.msra.mxu0 %v2137
          %2139 = vmatprep.subr.mxu0 0.0
          %v2140 = vand.u32 %v242, 4294901760
          %2141 = vmatpush1.msra.mxu0 %v2140
          %2142 = vmatprep.subr.mxu0 0.0
          %v2143 = vand.u32 %v243, 4294901760
          %2144 = vmatpush1.msra.mxu0 %v2143
          %2145 = vmatprep.subr.mxu0 0.0
          %v2146 = vand.u32 %v244, 4294901760
          %2147 = vmatpush1.msra.mxu0 %v2146
          %2148 = vmatprep.subr.mxu0 0.0
          %v2149 = vand.u32 %v245, 4294901760
          %2150 = vmatpush1.msra.mxu0 %v2149
          %2151 = vmatprep.subr.mxu0 0.0
          %v2152 = vand.u32 %v246, 4294901760
          %2153 = vmatpush1.msra.mxu0 %v2152
          %2154 = vmatprep.subr.mxu0 0.0
          %v2155 = vand.u32 %v247, 4294901760
          %2156 = vmatpush1.msra.mxu0 %v2155
          %2157 = vmatprep.subr.mxu0 0.0
          %v2158 = vand.u32 %v248, 4294901760
          %2159 = vmatpush1.msra.mxu0 %v2158
          %2160 = vmatprep.subr.mxu0 0.0
          %v2161 = vand.u32 %v249, 4294901760
          %2162 = vmatpush1.msra.mxu0 %v2161
          %2163 = vmatprep.subr.mxu0 0.0
          %v2164 = vand.u32 %v250, 4294901760
          %2165 = vmatpush1.msra.mxu0 %v2164
          %2166 = vmatprep.subr.mxu0 0.0
          %v2167 = vand.u32 %v251, 4294901760
          %2168 = vmatpush1.msra.mxu0 %v2167
          %2169 = vmatprep.subr.mxu0 0.0
          %v2170 = vand.u32 %v252, 4294901760
          %2171 = vmatpush1.msra.mxu0 %v2170
          %2172 = vmatprep.subr.mxu0 0.0
          %v2173 = vand.u32 %v253, 4294901760
          %2174 = vmatpush1.msra.mxu0 %v2173
          %2175 = vmatprep.subr.mxu0 0.0
          %v2176 = vand.u32 %v254, 4294901760
          %2177 = vmatpush1.msra.mxu0 %v2176
          %2178 = vmatprep.subr.mxu0 0.0
          %v2179 = vand.u32 %v255, 4294901760
          %2180 = vmatpush1.msra.mxu0 %v2179
          %2181 = vmatprep.subr.mxu0 0.0
          %2182 = vmatpush1.msra.mxu0 0.0
          %2183 = vmatprep.subr.mxu0 0.0
          %2184 = vmatpush1.msra.mxu0 0.0
          %2185 = vmatprep.subr.mxu0 0.0
          %2186 = vmatpush1.msra.mxu0 0.0
          %2187 = vmatprep.subr.mxu0 0.0
          %2188 = vmatpush1.msra.mxu0 0.0
          %2189 = vmatprep.subr.mxu0 0.0
          %2190 = vmatpush1.msra.mxu0 0.0
          %2191 = vmatprep.subr.mxu0 0.0
          %2192 = vmatpush1.msra.mxu0 0.0
          %2193 = vmatprep.subr.mxu0 0.0
          %2194 = vmatpush1.msra.mxu0 0.0
          %2195 = vmatprep.subr.mxu0 0.0
          %2196 = vmatpush1.msra.mxu0 0.0
          %2197 = vmatprep.subr.mxu0 0.0
          %2198 = vmatpush1.msra.mxu0 0.0
          %2199 = vmatprep.subr.mxu0 0.0
          %2200 = vmatpush1.msra.mxu0 0.0
          %2201 = vmatprep.subr.mxu0 0.0
          %2202 = vmatpush1.msra.mxu0 0.0
          %2203 = vmatprep.subr.mxu0 0.0
          %2204 = vmatpush1.msra.mxu0 0.0
          %2205 = vmatprep.subr.mxu0 0.0
          %2206 = vmatpush1.msra.mxu0 0.0
          %2207 = vmatprep.subr.mxu0 0.0
          %2208 = vmatpush1.msra.mxu0 0.0
          %2209 = vmatprep.subr.mxu0 0.0
          %2210 = vmatpush1.msra.mxu0 0.0
          %2211 = vmatprep.subr.mxu0 0.0
          %2212 = vmatpush1.msra.mxu0 0.0
          %2213 = vmatprep.mubr.f32.mxu0 0.0
          %v2214 = vand.u32 %v1738, 4294901760
          %v2215 = vsub.f32 %v1738, %v2214
          %v2216 = vand.u32 %v2215, 4294901760
          %2217 = vmatmul.mubr.f32.gmra.mrb[0].mxu0 %v2216
          %v2218 = vpop.f32.mrb[0].mxu0
          %v2219 = vadd.f32 %v2116, %v2218
          %v2220 = vpop.f32.mrb[0].mxu0
          %2221 = vmatprep.mubr.f32.mxu0 0.0
          %v2222 = vand.u32 %v1739, 4294901760
          %v2223 = vsub.f32 %v1739, %v2222
          %v2224 = vand.u32 %v2223, 4294901760
          %2225 = vmatmul.mubr.f32.gmra.mrb[0].mxu0 %v2224
          %v2226 = vpop.f32.mrb[0].mxu0
          %v2227 = vadd.f32 %v2123, %v2226
          %v2228 = vpop.f32.mrb[0].mxu0
          %2229 = vmatprep.mubr.f32.mxu0 0.0
          %v2230 = vand.u32 %v1740, 4294901760
          %v2231 = vsub.f32 %v1740, %v2230
          %v2232 = vand.u32 %v2231, 4294901760
          %2233 = vmatmul.mubr.f32.gmra.mrb[0].mxu0 %v2232
          %v2234 = vpop.f32.mrb[0].mxu0
          %v2235 = vadd.f32 %v2130, %v2234
          %v2236 = vpop.f32.mrb[0].mxu0
          %2237 = vdwg.mxu0
          %2238 = vmatprep.subr.mxu0 0.0
          %v2239 = vand.u32 %v240, 4294901760
          %v2240 = vsub.f32 %v240, %v2239
          %v2241 = vand.u32 %v2240, 4294901760
          %2242 = vmatpush1.msra.mxu0 %v2241
          %2243 = vmatprep.subr.mxu0 0.0
          %v2244 = vand.u32 %v241, 4294901760
          %v2245 = vsub.f32 %v241, %v2244
          %v2246 = vand.u32 %v2245, 4294901760
          %2247 = vmatpush1.msra.mxu0 %v2246
          %2248 = vmatprep.subr.mxu0 0.0
          %v2249 = vand.u32 %v242, 4294901760
          %v2250 = vsub.f32 %v242, %v2249
          %v2251 = vand.u32 %v2250, 4294901760
          %2252 = vmatpush1.msra.mxu0 %v2251
          %2253 = vmatprep.subr.mxu0 0.0
          %v2254 = vand.u32 %v243, 4294901760
          %v2255 = vsub.f32 %v243, %v2254
          %v2256 = vand.u32 %v2255, 4294901760
          %2257 = vmatpush1.msra.mxu0 %v2256
          %2258 = vmatprep.subr.mxu0 0.0
          %v2259 = vand.u32 %v244, 4294901760
          %v2260 = vsub.f32 %v244, %v2259
          %v2261 = vand.u32 %v2260, 4294901760
          %2262 = vmatpush1.msra.mxu0 %v2261
          %2263 = vmatprep.subr.mxu0 0.0
          %v2264 = vand.u32 %v245, 4294901760
          %v2265 = vsub.f32 %v245, %v2264
          %v2266 = vand.u32 %v2265, 4294901760
          %2267 = vmatpush1.msra.mxu0 %v2266
          %2268 = vmatprep.subr.mxu0 0.0
          %v2269 = vand.u32 %v246, 4294901760
          %v2270 = vsub.f32 %v246, %v2269
          %v2271 = vand.u32 %v2270, 4294901760
          %2272 = vmatpush1.msra.mxu0 %v2271
          %2273 = vmatprep.subr.mxu0 0.0
          %v2274 = vand.u32 %v247, 4294901760
          %v2275 = vsub.f32 %v247, %v2274
          %v2276 = vand.u32 %v2275, 4294901760
          %2277 = vmatpush1.msra.mxu0 %v2276
          %2278 = vmatprep.subr.mxu0 0.0
          %v2279 = vand.u32 %v248, 4294901760
          %v2280 = vsub.f32 %v248, %v2279
          %v2281 = vand.u32 %v2280, 4294901760
          %2282 = vmatpush1.msra.mxu0 %v2281
          %2283 = vmatprep.subr.mxu0 0.0
          %v2284 = vand.u32 %v249, 4294901760
          %v2285 = vsub.f32 %v249, %v2284
          %v2286 = vand.u32 %v2285, 4294901760
          %2287 = vmatpush1.msra.mxu0 %v2286
          %2288 = vmatprep.subr.mxu0 0.0
          %v2289 = vand.u32 %v250, 4294901760
          %v2290 = vsub.f32 %v250, %v2289
          %v2291 = vand.u32 %v2290, 4294901760
          %2292 = vmatpush1.msra.mxu0 %v2291
          %2293 = vmatprep.subr.mxu0 0.0
          %v2294 = vand.u32 %v251, 4294901760
          %v2295 = vsub.f32 %v251, %v2294
          %v2296 = vand.u32 %v2295, 4294901760
          %2297 = vmatpush1.msra.mxu0 %v2296
          %2298 = vmatprep.subr.mxu0 0.0
          %v2299 = vand.u32 %v252, 4294901760
          %v2300 = vsub.f32 %v252, %v2299
          %v2301 = vand.u32 %v2300, 4294901760
          %2302 = vmatpush1.msra.mxu0 %v2301
          %2303 = vmatprep.subr.mxu0 0.0
          %v2304 = vand.u32 %v253, 4294901760
          %v2305 = vsub.f32 %v253, %v2304
          %v2306 = vand.u32 %v2305, 4294901760
          %2307 = vmatpush1.msra.mxu0 %v2306
          %2308 = vmatprep.subr.mxu0 0.0
          %v2309 = vand.u32 %v254, 4294901760
          %v2310 = vsub.f32 %v254, %v2309
          %v2311 = vand.u32 %v2310, 4294901760
          %2312 = vmatpush1.msra.mxu0 %v2311
          %2313 = vmatprep.subr.mxu0 0.0
          %v2314 = vand.u32 %v255, 4294901760
          %v2315 = vsub.f32 %v255, %v2314
          %v2316 = vand.u32 %v2315, 4294901760
          %2317 = vmatpush1.msra.mxu0 %v2316
          %2318 = vmatprep.subr.mxu0 0.0
          %2319 = vmatpush1.msra.mxu0 0.0
          %2320 = vmatprep.subr.mxu0 0.0
          %2321 = vmatpush1.msra.mxu0 0.0
          %2322 = vmatprep.subr.mxu0 0.0
          %2323 = vmatpush1.msra.mxu0 0.0
          %2324 = vmatprep.subr.mxu0 0.0
          %2325 = vmatpush1.msra.mxu0 0.0
          %2326 = vmatprep.subr.mxu0 0.0
          %2327 = vmatpush1.msra.mxu0 0.0
          %2328 = vmatprep.subr.mxu0 0.0
          %2329 = vmatpush1.msra.mxu0 0.0
          %2330 = vmatprep.subr.mxu0 0.0
          %2331 = vmatpush1.msra.mxu0 0.0
          %2332 = vmatprep.subr.mxu0 0.0
          %2333 = vmatpush1.msra.mxu0 0.0
          %2334 = vmatprep.subr.mxu0 0.0
          %2335 = vmatpush1.msra.mxu0 0.0
          %2336 = vmatprep.subr.mxu0 0.0
          %2337 = vmatpush1.msra.mxu0 0.0
          %2338 = vmatprep.subr.mxu0 0.0
          %2339 = vmatpush1.msra.mxu0 0.0
          %2340 = vmatprep.subr.mxu0 0.0
          %2341 = vmatpush1.msra.mxu0 0.0
          %2342 = vmatprep.subr.mxu0 0.0
          %2343 = vmatpush1.msra.mxu0 0.0
          %2344 = vmatprep.subr.mxu0 0.0
          %2345 = vmatpush1.msra.mxu0 0.0
          %2346 = vmatprep.subr.mxu0 0.0
          %2347 = vmatpush1.msra.mxu0 0.0
          %2348 = vmatprep.subr.mxu0 0.0
          %2349 = vmatpush1.msra.mxu0 0.0
          %2350 = vmatprep.mubr.f32.mxu0 0.0
          %v2351 = vand.u32 %v1738, 4294901760
          %2352 = vmatmul.mubr.f32.gmra.mrb[0].mxu0 %v2351
          %v2353 = vpop.f32.mrb[0].mxu0
          %v2354 = vadd.f32 %v2219, %v2353
          %v2355 = vpop.f32.mrb[0].mxu0
          %2356 = vmatprep.mubr.f32.mxu0 0.0
          %v2357 = vand.u32 %v1739, 4294901760
          %2358 = vmatmul.mubr.f32.gmra.mrb[0].mxu0 %v2357
          %v2359 = vpop.f32.mrb[0].mxu0
          %v2360 = vadd.f32 %v2227, %v2359
          %v2361 = vpop.f32.mrb[0].mxu0
          %2362 = vmatprep.mubr.f32.mxu0 0.0
          %v2363 = vand.u32 %v1740, 4294901760
          %2364 = vmatmul.mubr.f32.gmra.mrb[0].mxu0 %v2363
          %v2365 = vpop.f32.mrb[0].mxu0
          %v2366 = vadd.f32 %v2235, %v2365
          %v2367 = vpop.f32.mrb[0].mxu0
          %2368 = vdwg.mxu0
          %2369 = vmatprep.subr.mxu0 0.0
          %v2370 = vand.u32 %v240, 4294901760
          %2371 = vmatpush1.msra.mxu0 %v2370
          %2372 = vmatprep.subr.mxu0 0.0
          %v2373 = vand.u32 %v241, 4294901760
          %2374 = vmatpush1.msra.mxu0 %v2373
          %2375 = vmatprep.subr.mxu0 0.0
          %v2376 = vand.u32 %v242, 4294901760
          %2377 = vmatpush1.msra.mxu0 %v2376
          %2378 = vmatprep.subr.mxu0 0.0
          %v2379 = vand.u32 %v243, 4294901760
          %2380 = vmatpush1.msra.mxu0 %v2379
          %2381 = vmatprep.subr.mxu0 0.0
          %v2382 = vand.u32 %v244, 4294901760
          %2383 = vmatpush1.msra.mxu0 %v2382
          %2384 = vmatprep.subr.mxu0 0.0
          %v2385 = vand.u32 %v245, 4294901760
          %2386 = vmatpush1.msra.mxu0 %v2385
          %2387 = vmatprep.subr.mxu0 0.0
          %v2388 = vand.u32 %v246, 4294901760
          %2389 = vmatpush1.msra.mxu0 %v2388
          %2390 = vmatprep.subr.mxu0 0.0
          %v2391 = vand.u32 %v247, 4294901760
          %2392 = vmatpush1.msra.mxu0 %v2391
          %2393 = vmatprep.subr.mxu0 0.0
          %v2394 = vand.u32 %v248, 4294901760
          %2395 = vmatpush1.msra.mxu0 %v2394
          %2396 = vmatprep.subr.mxu0 0.0
          %v2397 = vand.u32 %v249, 4294901760
          %2398 = vmatpush1.msra.mxu0 %v2397
          %2399 = vmatprep.subr.mxu0 0.0
          %v2400 = vand.u32 %v250, 4294901760
          %2401 = vmatpush1.msra.mxu0 %v2400
          %2402 = vmatprep.subr.mxu0 0.0
          %v2403 = vand.u32 %v251, 4294901760
          %2404 = vmatpush1.msra.mxu0 %v2403
          %2405 = vmatprep.subr.mxu0 0.0
          %v2406 = vand.u32 %v252, 4294901760
          %2407 = vmatpush1.msra.mxu0 %v2406
          %2408 = vmatprep.subr.mxu0 0.0
          %v2409 = vand.u32 %v253, 4294901760
          %2410 = vmatpush1.msra.mxu0 %v2409
          %2411 = vmatprep.subr.mxu0 0.0
          %v2412 = vand.u32 %v254, 4294901760
          %2413 = vmatpush1.msra.mxu0 %v2412
          %2414 = vmatprep.subr.mxu0 0.0
          %v2415 = vand.u32 %v255, 4294901760
          %2416 = vmatpush1.msra.mxu0 %v2415
          %2417 = vmatprep.subr.mxu0 0.0
          %2418 = vmatpush1.msra.mxu0 0.0
          %2419 = vmatprep.subr.mxu0 0.0
          %2420 = vmatpush1.msra.mxu0 0.0
          %2421 = vmatprep.subr.mxu0 0.0
          %2422 = vmatpush1.msra.mxu0 0.0
          %2423 = vmatprep.subr.mxu0 0.0
          %2424 = vmatpush1.msra.mxu0 0.0
          %2425 = vmatprep.subr.mxu0 0.0
          %2426 = vmatpush1.msra.mxu0 0.0
          %2427 = vmatprep.subr.mxu0 0.0
          %2428 = vmatpush1.msra.mxu0 0.0
          %2429 = vmatprep.subr.mxu0 0.0
          %2430 = vmatpush1.msra.mxu0 0.0
          %2431 = vmatprep.subr.mxu0 0.0
          %2432 = vmatpush1.msra.mxu0 0.0
          %2433 = vmatprep.subr.mxu0 0.0
          %2434 = vmatpush1.msra.mxu0 0.0
          %2435 = vmatprep.subr.mxu0 0.0
          %2436 = vmatpush1.msra.mxu0 0.0
          %2437 = vmatprep.subr.mxu0 0.0
          %2438 = vmatpush1.msra.mxu0 0.0
          %2439 = vmatprep.subr.mxu0 0.0
          %2440 = vmatpush1.msra.mxu0 0.0
          %2441 = vmatprep.subr.mxu0 0.0
          %2442 = vmatpush1.msra.mxu0 0.0
          %2443 = vmatprep.subr.mxu0 0.0
          %2444 = vmatpush1.msra.mxu0 0.0
          %2445 = vmatprep.subr.mxu0 0.0
          %2446 = vmatpush1.msra.mxu0 0.0
          %2447 = vmatprep.subr.mxu0 0.0
          %2448 = vmatpush1.msra.mxu0 0.0
          %2449 = vmatprep.mubr.f32.mxu0 0.0
          %v2450 = vand.u32 %v1738, 4294901760
          %2451 = vmatmul.mubr.f32.gmra.mrb[0].mxu0 %v2450
          %v2452 = vpop.f32.mrb[0].mxu0
          %v2453 = vadd.f32 %v2354, %v2452
          %v2454 = vpop.f32.mrb[0].mxu0
          %2455 = vmatprep.mubr.f32.mxu0 0.0
          %v2456 = vand.u32 %v1739, 4294901760
          %2457 = vmatmul.mubr.f32.gmra.mrb[0].mxu0 %v2456
          %v2458 = vpop.f32.mrb[0].mxu0
          %v2459 = vadd.f32 %v2360, %v2458
          %v2460 = vpop.f32.mrb[0].mxu0
          %2461 = vmatprep.mubr.f32.mxu0 0.0
          %v2462 = vand.u32 %v1740, 4294901760
          %2463 = vmatmul.mubr.f32.gmra.mrb[0].mxu0 %v2462
          %v2464 = vpop.f32.mrb[0].mxu0
          %v2465 = vadd.f32 %v2366, %v2464
          %v2466 = vpop.f32.mrb[0].mxu0
          %2467 = vdwg.mxu0
          %2471 = vrot.lane.b32.xlu0 %v2453, 64
          %v2472 = vpop.permute.xlu0 %2471
          %2473 = vrot.lane.b32.xlu0 %v2459, 64
          %v2474 = vpop.permute.xlu0 %2473
          %2475 = vrot.lane.b32.xlu0 %v2465, 64
          %v2476 = vpop.permute.xlu0 %2475
          %vm2480 = vcmask 785920
          %2481 = vst.msk [vmem:[#allocation2] sm:$0xff] %vm2480, %v2472
          %2482 = vst.msk [vmem:[#allocation2 + $0x8] sm:$0xff] %vm2480, %v2474
          %2483 = vst.msk [vmem:[#allocation2 + $0x10] sm:$0xff] %vm2480, %v2476
          %s2484 = scalar_lea.vmem %s223, 72
          %v2485 = vld [vmem:[%s2484] sm:$0xff]
          %v2486 = vld [vmem:[%s2484 + $0x8] sm:$0xff]
          %v2487 = vld [vmem:[%s2484 + $0x10] sm:$0xff]
          %2488 = vmatprep.subr.mxu0 0.0
          %v2489 = vand.u32 %v240, 4294901760
          %2490 = vmatpush1.msra.mxu0 %v2489
          %2491 = vmatprep.subr.mxu0 0.0
          %v2492 = vand.u32 %v241, 4294901760
          %2493 = vmatpush1.msra.mxu0 %v2492
          %2494 = vmatprep.subr.mxu0 0.0
          %v2495 = vand.u32 %v242, 4294901760
          %2496 = vmatpush1.msra.mxu0 %v2495
          %2497 = vmatprep.subr.mxu0 0.0
          %v2498 = vand.u32 %v243, 4294901760
          %2499 = vmatpush1.msra.mxu0 %v2498
          %2500 = vmatprep.subr.mxu0 0.0
          %v2501 = vand.u32 %v244, 4294901760
          %2502 = vmatpush1.msra.mxu0 %v2501
          %2503 = vmatprep.subr.mxu0 0.0
          %v2504 = vand.u32 %v245, 4294901760
          %2505 = vmatpush1.msra.mxu0 %v2504
          %2506 = vmatprep.subr.mxu0 0.0
          %v2507 = vand.u32 %v246, 4294901760
          %2508 = vmatpush1.msra.mxu0 %v2507
          %2509 = vmatprep.subr.mxu0 0.0
          %v2510 = vand.u32 %v247, 4294901760
          %2511 = vmatpush1.msra.mxu0 %v2510
          %2512 = vmatprep.subr.mxu0 0.0
          %v2513 = vand.u32 %v248, 4294901760
          %2514 = vmatpush1.msra.mxu0 %v2513
          %2515 = vmatprep.subr.mxu0 0.0
          %v2516 = vand.u32 %v249, 4294901760
          %2517 = vmatpush1.msra.mxu0 %v2516
          %2518 = vmatprep.subr.mxu0 0.0
          %v2519 = vand.u32 %v250, 4294901760
          %2520 = vmatpush1.msra.mxu0 %v2519
          %2521 = vmatprep.subr.mxu0 0.0
          %v2522 = vand.u32 %v251, 4294901760
          %2523 = vmatpush1.msra.mxu0 %v2522
          %2524 = vmatprep.subr.mxu0 0.0
          %v2525 = vand.u32 %v252, 4294901760
          %2526 = vmatpush1.msra.mxu0 %v2525
          %2527 = vmatprep.subr.mxu0 0.0
          %v2528 = vand.u32 %v253, 4294901760
          %2529 = vmatpush1.msra.mxu0 %v2528
          %2530 = vmatprep.subr.mxu0 0.0
          %v2531 = vand.u32 %v254, 4294901760
          %2532 = vmatpush1.msra.mxu0 %v2531
          %2533 = vmatprep.subr.mxu0 0.0
          %v2534 = vand.u32 %v255, 4294901760
          %2535 = vmatpush1.msra.mxu0 %v2534
          %2536 = vmatprep.subr.mxu0 0.0
          %2537 = vmatpush1.msra.mxu0 0.0
          %2538 = vmatprep.subr.mxu0 0.0
          %2539 = vmatpush1.msra.mxu0 0.0
          %2540 = vmatprep.subr.mxu0 0.0
          %2541 = vmatpush1.msra.mxu0 0.0
          %2542 = vmatprep.subr.mxu0 0.0
          %2543 = vmatpush1.msra.mxu0 0.0
          %2544 = vmatprep.subr.mxu0 0.0
          %2545 = vmatpush1.msra.mxu0 0.0
          %2546 = vmatprep.subr.mxu0 0.0
          %2547 = vmatpush1.msra.mxu0 0.0
          %2548 = vmatprep.subr.mxu0 0.0
          %2549 = vmatpush1.msra.mxu0 0.0
          %2550 = vmatprep.subr.mxu0 0.0
          %2551 = vmatpush1.msra.mxu0 0.0
          %2552 = vmatprep.subr.mxu0 0.0
          %2553 = vmatpush1.msra.mxu0 0.0
          %2554 = vmatprep.subr.mxu0 0.0
          %2555 = vmatpush1.msra.mxu0 0.0
          %2556 = vmatprep.subr.mxu0 0.0
          %2557 = vmatpush1.msra.mxu0 0.0
          %2558 = vmatprep.subr.mxu0 0.0
          %2559 = vmatpush1.msra.mxu0 0.0
          %2560 = vmatprep.subr.mxu0 0.0
          %2561 = vmatpush1.msra.mxu0 0.0
          %2562 = vmatprep.subr.mxu0 0.0
          %2563 = vmatpush1.msra.mxu0 0.0
          %2564 = vmatprep.subr.mxu0 0.0
          %2565 = vmatpush1.msra.mxu0 0.0
          %2566 = vmatprep.subr.mxu0 0.0
          %2567 = vmatpush1.msra.mxu0 0.0
          %2568 = vmatprep.mubr.f32.mxu0 0.0
          %v2569 = vand.u32 %v2485, 4294901760
          %v2570 = vsub.f32 %v2485, %v2569
          %v2571 = vand.u32 %v2570, 4294901760
          %v2572 = vsub.f32 %v2570, %v2571
          %v2573 = vand.u32 %v2572, 4294901760
          %2574 = vmatmul.mubr.f32.gmra.mrb[0].mxu0 %v2573
          %v2575 = vpop.f32.mrb[0].mxu0
          %v2576 = vadd.f32 0.0, %v2575
          %v2577 = vpop.f32.mrb[0].mxu0
          %2578 = vmatprep.mubr.f32.mxu0 0.0
          %v2579 = vand.u32 %v2486, 4294901760
          %v2580 = vsub.f32 %v2486, %v2579
          %v2581 = vand.u32 %v2580, 4294901760
          %v2582 = vsub.f32 %v2580, %v2581
          %v2583 = vand.u32 %v2582, 4294901760
          %2584 = vmatmul.mubr.f32.gmra.mrb[0].mxu0 %v2583
          %v2585 = vpop.f32.mrb[0].mxu0
          %v2586 = vadd.f32 0.0, %v2585
          %v2587 = vpop.f32.mrb[0].mxu0
          %2588 = vmatprep.mubr.f32.mxu0 0.0
          %v2589 = vand.u32 %v2487, 4294901760
          %v2590 = vsub.f32 %v2487, %v2589
          %v2591 = vand.u32 %v2590, 4294901760
          %v2592 = vsub.f32 %v2590, %v2591
          %v2593 = vand.u32 %v2592, 4294901760
          %2594 = vmatmul.mubr.f32.gmra.mrb[0].mxu0 %v2593
          %v2595 = vpop.f32.mrb[0].mxu0
          %v2596 = vadd.f32 0.0, %v2595
          %v2597 = vpop.f32.mrb[0].mxu0
          %2598 = vdwg.mxu0
          %2599 = vmatprep.subr.mxu0 0.0
          %v2600 = vand.u32 %v240, 4294901760
          %v2601 = vsub.f32 %v240, %v2600
          %v2602 = vand.u32 %v2601, 4294901760
          %v2603 = vsub.f32 %v2601, %v2602
          %v2604 = vand.u32 %v2603, 4294901760
          %2605 = vmatpush1.msra.mxu0 %v2604
          %2606 = vmatprep.subr.mxu0 0.0
          %v2607 = vand.u32 %v241, 4294901760
          %v2608 = vsub.f32 %v241, %v2607
          %v2609 = vand.u32 %v2608, 4294901760
          %v2610 = vsub.f32 %v2608, %v2609
          %v2611 = vand.u32 %v2610, 4294901760
          %2612 = vmatpush1.msra.mxu0 %v2611
          %2613 = vmatprep.subr.mxu0 0.0
          %v2614 = vand.u32 %v242, 4294901760
          %v2615 = vsub.f32 %v242, %v2614
          %v2616 = vand.u32 %v2615, 4294901760
          %v2617 = vsub.f32 %v2615, %v2616
          %v2618 = vand.u32 %v2617, 4294901760
          %2619 = vmatpush1.msra.mxu0 %v2618
          %2620 = vmatprep.subr.mxu0 0.0
          %v2621 = vand.u32 %v243, 4294901760
          %v2622 = vsub.f32 %v243, %v2621
          %v2623 = vand.u32 %v2622, 4294901760
          %v2624 = vsub.f32 %v2622, %v2623
          %v2625 = vand.u32 %v2624, 4294901760
          %2626 = vmatpush1.msra.mxu0 %v2625
          %2627 = vmatprep.subr.mxu0 0.0
          %v2628 = vand.u32 %v244, 4294901760
          %v2629 = vsub.f32 %v244, %v2628
          %v2630 = vand.u32 %v2629, 4294901760
          %v2631 = vsub.f32 %v2629, %v2630
          %v2632 = vand.u32 %v2631, 4294901760
          %2633 = vmatpush1.msra.mxu0 %v2632
          %2634 = vmatprep.subr.mxu0 0.0
          %v2635 = vand.u32 %v245, 4294901760
          %v2636 = vsub.f32 %v245, %v2635
          %v2637 = vand.u32 %v2636, 4294901760
          %v2638 = vsub.f32 %v2636, %v2637
          %v2639 = vand.u32 %v2638, 4294901760
          %2640 = vmatpush1.msra.mxu0 %v2639
          %2641 = vmatprep.subr.mxu0 0.0
          %v2642 = vand.u32 %v246, 4294901760
          %v2643 = vsub.f32 %v246, %v2642
          %v2644 = vand.u32 %v2643, 4294901760
          %v2645 = vsub.f32 %v2643, %v2644
          %v2646 = vand.u32 %v2645, 4294901760
          %2647 = vmatpush1.msra.mxu0 %v2646
          %2648 = vmatprep.subr.mxu0 0.0
          %v2649 = vand.u32 %v247, 4294901760
          %v2650 = vsub.f32 %v247, %v2649
          %v2651 = vand.u32 %v2650, 4294901760
          %v2652 = vsub.f32 %v2650, %v2651
          %v2653 = vand.u32 %v2652, 4294901760
          %2654 = vmatpush1.msra.mxu0 %v2653
          %2655 = vmatprep.subr.mxu0 0.0
          %v2656 = vand.u32 %v248, 4294901760
          %v2657 = vsub.f32 %v248, %v2656
          %v2658 = vand.u32 %v2657, 4294901760
          %v2659 = vsub.f32 %v2657, %v2658
          %v2660 = vand.u32 %v2659, 4294901760
          %2661 = vmatpush1.msra.mxu0 %v2660
          %2662 = vmatprep.subr.mxu0 0.0
          %v2663 = vand.u32 %v249, 4294901760
          %v2664 = vsub.f32 %v249, %v2663
          %v2665 = vand.u32 %v2664, 4294901760
          %v2666 = vsub.f32 %v2664, %v2665
          %v2667 = vand.u32 %v2666, 4294901760
          %2668 = vmatpush1.msra.mxu0 %v2667
          %2669 = vmatprep.subr.mxu0 0.0
          %v2670 = vand.u32 %v250, 4294901760
          %v2671 = vsub.f32 %v250, %v2670
          %v2672 = vand.u32 %v2671, 4294901760
          %v2673 = vsub.f32 %v2671, %v2672
          %v2674 = vand.u32 %v2673, 4294901760
          %2675 = vmatpush1.msra.mxu0 %v2674
          %2676 = vmatprep.subr.mxu0 0.0
          %v2677 = vand.u32 %v251, 4294901760
          %v2678 = vsub.f32 %v251, %v2677
          %v2679 = vand.u32 %v2678, 4294901760
          %v2680 = vsub.f32 %v2678, %v2679
          %v2681 = vand.u32 %v2680, 4294901760
          %2682 = vmatpush1.msra.mxu0 %v2681
          %2683 = vmatprep.subr.mxu0 0.0
          %v2684 = vand.u32 %v252, 4294901760
          %v2685 = vsub.f32 %v252, %v2684
          %v2686 = vand.u32 %v2685, 4294901760
          %v2687 = vsub.f32 %v2685, %v2686
          %v2688 = vand.u32 %v2687, 4294901760
          %2689 = vmatpush1.msra.mxu0 %v2688
          %2690 = vmatprep.subr.mxu0 0.0
          %v2691 = vand.u32 %v253, 4294901760
          %v2692 = vsub.f32 %v253, %v2691
          %v2693 = vand.u32 %v2692, 4294901760
          %v2694 = vsub.f32 %v2692, %v2693
          %v2695 = vand.u32 %v2694, 4294901760
          %2696 = vmatpush1.msra.mxu0 %v2695
          %2697 = vmatprep.subr.mxu0 0.0
          %v2698 = vand.u32 %v254, 4294901760
          %v2699 = vsub.f32 %v254, %v2698
          %v2700 = vand.u32 %v2699, 4294901760
          %v2701 = vsub.f32 %v2699, %v2700
          %v2702 = vand.u32 %v2701, 4294901760
          %2703 = vmatpush1.msra.mxu0 %v2702
          %2704 = vmatprep.subr.mxu0 0.0
          %v2705 = vand.u32 %v255, 4294901760
          %v2706 = vsub.f32 %v255, %v2705
          %v2707 = vand.u32 %v2706, 4294901760
          %v2708 = vsub.f32 %v2706, %v2707
          %v2709 = vand.u32 %v2708, 4294901760
          %2710 = vmatpush1.msra.mxu0 %v2709
          %2711 = vmatprep.subr.mxu0 0.0
          %2712 = vmatpush1.msra.mxu0 0.0
          %2713 = vmatprep.subr.mxu0 0.0
          %2714 = vmatpush1.msra.mxu0 0.0
          %2715 = vmatprep.subr.mxu0 0.0
          %2716 = vmatpush1.msra.mxu0 0.0
          %2717 = vmatprep.subr.mxu0 0.0
          %2718 = vmatpush1.msra.mxu0 0.0
          %2719 = vmatprep.subr.mxu0 0.0
          %2720 = vmatpush1.msra.mxu0 0.0
          %2721 = vmatprep.subr.mxu0 0.0
          %2722 = vmatpush1.msra.mxu0 0.0
          %2723 = vmatprep.subr.mxu0 0.0
          %2724 = vmatpush1.msra.mxu0 0.0
          %2725 = vmatprep.subr.mxu0 0.0
          %2726 = vmatpush1.msra.mxu0 0.0
          %2727 = vmatprep.subr.mxu0 0.0
          %2728 = vmatpush1.msra.mxu0 0.0
          %2729 = vmatprep.subr.mxu0 0.0
          %2730 = vmatpush1.msra.mxu0 0.0
          %2731 = vmatprep.subr.mxu0 0.0
          %2732 = vmatpush1.msra.mxu0 0.0
          %2733 = vmatprep.subr.mxu0 0.0
          %2734 = vmatpush1.msra.mxu0 0.0
          %2735 = vmatprep.subr.mxu0 0.0
          %2736 = vmatpush1.msra.mxu0 0.0
          %2737 = vmatprep.subr.mxu0 0.0
          %2738 = vmatpush1.msra.mxu0 0.0
          %2739 = vmatprep.subr.mxu0 0.0
          %2740 = vmatpush1.msra.mxu0 0.0
          %2741 = vmatprep.subr.mxu0 0.0
          %2742 = vmatpush1.msra.mxu0 0.0
          %2743 = vmatprep.mubr.f32.mxu0 0.0
          %v2744 = vand.u32 %v2485, 4294901760
          %2745 = vmatmul.mubr.f32.gmra.mrb[0].mxu0 %v2744
          %v2746 = vpop.f32.mrb[0].mxu0
          %v2747 = vadd.f32 %v2576, %v2746
          %v2748 = vpop.f32.mrb[0].mxu0
          %2749 = vmatprep.mubr.f32.mxu0 0.0
          %v2750 = vand.u32 %v2486, 4294901760
          %2751 = vmatmul.mubr.f32.gmra.mrb[0].mxu0 %v2750
          %v2752 = vpop.f32.mrb[0].mxu0
          %v2753 = vadd.f32 %v2586, %v2752
          %v2754 = vpop.f32.mrb[0].mxu0
          %2755 = vmatprep.mubr.f32.mxu0 0.0
          %v2756 = vand.u32 %v2487, 4294901760
          %2757 = vmatmul.mubr.f32.gmra.mrb[0].mxu0 %v2756
          %v2758 = vpop.f32.mrb[0].mxu0
          %v2759 = vadd.f32 %v2596, %v2758
          %v2760 = vpop.f32.mrb[0].mxu0
          %2761 = vdwg.mxu0
          %2762 = vmatprep.subr.mxu0 0.0
          %v2763 = vand.u32 %v240, 4294901760
          %v2764 = vsub.f32 %v240, %v2763
          %2765 = vmatpush1.msra.mxu0 %v2764
          %2766 = vmatprep.subr.mxu0 0.0
          %v2767 = vand.u32 %v241, 4294901760
          %v2768 = vsub.f32 %v241, %v2767
          %2769 = vmatpush1.msra.mxu0 %v2768
          %2770 = vmatprep.subr.mxu0 0.0
          %v2771 = vand.u32 %v242, 4294901760
          %v2772 = vsub.f32 %v242, %v2771
          %2773 = vmatpush1.msra.mxu0 %v2772
          %2774 = vmatprep.subr.mxu0 0.0
          %v2775 = vand.u32 %v243, 4294901760
          %v2776 = vsub.f32 %v243, %v2775
          %2777 = vmatpush1.msra.mxu0 %v2776
          %2778 = vmatprep.subr.mxu0 0.0
          %v2779 = vand.u32 %v244, 4294901760
          %v2780 = vsub.f32 %v244, %v2779
          %2781 = vmatpush1.msra.mxu0 %v2780
          %2782 = vmatprep.subr.mxu0 0.0
          %v2783 = vand.u32 %v245, 4294901760
          %v2784 = vsub.f32 %v245, %v2783
          %2785 = vmatpush1.msra.mxu0 %v2784
          %2786 = vmatprep.subr.mxu0 0.0
          %v2787 = vand.u32 %v246, 4294901760
          %v2788 = vsub.f32 %v246, %v2787
          %2789 = vmatpush1.msra.mxu0 %v2788
          %2790 = vmatprep.subr.mxu0 0.0
          %v2791 = vand.u32 %v247, 4294901760
          %v2792 = vsub.f32 %v247, %v2791
          %2793 = vmatpush1.msra.mxu0 %v2792
          %2794 = vmatprep.subr.mxu0 0.0
          %v2795 = vand.u32 %v248, 4294901760
          %v2796 = vsub.f32 %v248, %v2795
          %2797 = vmatpush1.msra.mxu0 %v2796
          %2798 = vmatprep.subr.mxu0 0.0
          %v2799 = vand.u32 %v249, 4294901760
          %v2800 = vsub.f32 %v249, %v2799
          %2801 = vmatpush1.msra.mxu0 %v2800
          %2802 = vmatprep.subr.mxu0 0.0
          %v2803 = vand.u32 %v250, 4294901760
          %v2804 = vsub.f32 %v250, %v2803
          %2805 = vmatpush1.msra.mxu0 %v2804
          %2806 = vmatprep.subr.mxu0 0.0
          %v2807 = vand.u32 %v251, 4294901760
          %v2808 = vsub.f32 %v251, %v2807
          %2809 = vmatpush1.msra.mxu0 %v2808
          %2810 = vmatprep.subr.mxu0 0.0
          %v2811 = vand.u32 %v252, 4294901760
          %v2812 = vsub.f32 %v252, %v2811
          %2813 = vmatpush1.msra.mxu0 %v2812
          %2814 = vmatprep.subr.mxu0 0.0
          %v2815 = vand.u32 %v253, 4294901760
          %v2816 = vsub.f32 %v253, %v2815
          %2817 = vmatpush1.msra.mxu0 %v2816
          %2818 = vmatprep.subr.mxu0 0.0
          %v2819 = vand.u32 %v254, 4294901760
          %v2820 = vsub.f32 %v254, %v2819
          %2821 = vmatpush1.msra.mxu0 %v2820
          %2822 = vmatprep.subr.mxu0 0.0
          %v2823 = vand.u32 %v255, 4294901760
          %v2824 = vsub.f32 %v255, %v2823
          %2825 = vmatpush1.msra.mxu0 %v2824
          %2826 = vmatprep.subr.mxu0 0.0
          %2827 = vmatpush1.msra.mxu0 0.0
          %2828 = vmatprep.subr.mxu0 0.0
          %2829 = vmatpush1.msra.mxu0 0.0
          %2830 = vmatprep.subr.mxu0 0.0
          %2831 = vmatpush1.msra.mxu0 0.0
          %2832 = vmatprep.subr.mxu0 0.0
          %2833 = vmatpush1.msra.mxu0 0.0
          %2834 = vmatprep.subr.mxu0 0.0
          %2835 = vmatpush1.msra.mxu0 0.0
          %2836 = vmatprep.subr.mxu0 0.0
          %2837 = vmatpush1.msra.mxu0 0.0
          %2838 = vmatprep.subr.mxu0 0.0
          %2839 = vmatpush1.msra.mxu0 0.0
          %2840 = vmatprep.subr.mxu0 0.0
          %2841 = vmatpush1.msra.mxu0 0.0
          %2842 = vmatprep.subr.mxu0 0.0
          %2843 = vmatpush1.msra.mxu0 0.0
          %2844 = vmatprep.subr.mxu0 0.0
          %2845 = vmatpush1.msra.mxu0 0.0
          %2846 = vmatprep.subr.mxu0 0.0
          %2847 = vmatpush1.msra.mxu0 0.0
          %2848 = vmatprep.subr.mxu0 0.0
          %2849 = vmatpush1.msra.mxu0 0.0
          %2850 = vmatprep.subr.mxu0 0.0
          %2851 = vmatpush1.msra.mxu0 0.0
          %2852 = vmatprep.subr.mxu0 0.0
          %2853 = vmatpush1.msra.mxu0 0.0
          %2854 = vmatprep.subr.mxu0 0.0
          %2855 = vmatpush1.msra.mxu0 0.0
          %2856 = vmatprep.subr.mxu0 0.0
          %2857 = vmatpush1.msra.mxu0 0.0
          %2858 = vmatprep.mubr.f32.mxu0 0.0
          %v2859 = vand.u32 %v2485, 4294901760
          %v2860 = vsub.f32 %v2485, %v2859
          %2861 = vmatmul.mubr.f32.gmra.mrb[0].mxu0 %v2860
          %v2862 = vpop.f32.mrb[0].mxu0
          %v2863 = vadd.f32 %v2747, %v2862
          %v2864 = vpop.f32.mrb[0].mxu0
          %2865 = vmatprep.mubr.f32.mxu0 0.0
          %v2866 = vand.u32 %v2486, 4294901760
          %v2867 = vsub.f32 %v2486, %v2866
          %2868 = vmatmul.mubr.f32.gmra.mrb[0].mxu0 %v2867
          %v2869 = vpop.f32.mrb[0].mxu0
          %v2870 = vadd.f32 %v2753, %v2869
          %v2871 = vpop.f32.mrb[0].mxu0
          %2872 = vmatprep.mubr.f32.mxu0 0.0
          %v2873 = vand.u32 %v2487, 4294901760
          %v2874 = vsub.f32 %v2487, %v2873
          %2875 = vmatmul.mubr.f32.gmra.mrb[0].mxu0 %v2874
          %v2876 = vpop.f32.mrb[0].mxu0
          %v2877 = vadd.f32 %v2759, %v2876
          %v2878 = vpop.f32.mrb[0].mxu0
          %2879 = vdwg.mxu0
          %2880 = vmatprep.subr.mxu0 0.0
          %v2881 = vand.u32 %v240, 4294901760
          %2882 = vmatpush1.msra.mxu0 %v2881
          %2883 = vmatprep.subr.mxu0 0.0
          %v2884 = vand.u32 %v241, 4294901760
          %2885 = vmatpush1.msra.mxu0 %v2884
          %2886 = vmatprep.subr.mxu0 0.0
          %v2887 = vand.u32 %v242, 4294901760
          %2888 = vmatpush1.msra.mxu0 %v2887
          %2889 = vmatprep.subr.mxu0 0.0
          %v2890 = vand.u32 %v243, 4294901760
          %2891 = vmatpush1.msra.mxu0 %v2890
          %2892 = vmatprep.subr.mxu0 0.0
          %v2893 = vand.u32 %v244, 4294901760
          %2894 = vmatpush1.msra.mxu0 %v2893
          %2895 = vmatprep.subr.mxu0 0.0
          %v2896 = vand.u32 %v245, 4294901760
          %2897 = vmatpush1.msra.mxu0 %v2896
          %2898 = vmatprep.subr.mxu0 0.0
          %v2899 = vand.u32 %v246, 4294901760
          %2900 = vmatpush1.msra.mxu0 %v2899
          %2901 = vmatprep.subr.mxu0 0.0
          %v2902 = vand.u32 %v247, 4294901760
          %2903 = vmatpush1.msra.mxu0 %v2902
          %2904 = vmatprep.subr.mxu0 0.0
          %v2905 = vand.u32 %v248, 4294901760
          %2906 = vmatpush1.msra.mxu0 %v2905
          %2907 = vmatprep.subr.mxu0 0.0
          %v2908 = vand.u32 %v249, 4294901760
          %2909 = vmatpush1.msra.mxu0 %v2908
          %2910 = vmatprep.subr.mxu0 0.0
          %v2911 = vand.u32 %v250, 4294901760
          %2912 = vmatpush1.msra.mxu0 %v2911
          %2913 = vmatprep.subr.mxu0 0.0
          %v2914 = vand.u32 %v251, 4294901760
          %2915 = vmatpush1.msra.mxu0 %v2914
          %2916 = vmatprep.subr.mxu0 0.0
          %v2917 = vand.u32 %v252, 4294901760
          %2918 = vmatpush1.msra.mxu0 %v2917
          %2919 = vmatprep.subr.mxu0 0.0
          %v2920 = vand.u32 %v253, 4294901760
          %2921 = vmatpush1.msra.mxu0 %v2920
          %2922 = vmatprep.subr.mxu0 0.0
          %v2923 = vand.u32 %v254, 4294901760
          %2924 = vmatpush1.msra.mxu0 %v2923
          %2925 = vmatprep.subr.mxu0 0.0
          %v2926 = vand.u32 %v255, 4294901760
          %2927 = vmatpush1.msra.mxu0 %v2926
          %2928 = vmatprep.subr.mxu0 0.0
          %2929 = vmatpush1.msra.mxu0 0.0
          %2930 = vmatprep.subr.mxu0 0.0
          %2931 = vmatpush1.msra.mxu0 0.0
          %2932 = vmatprep.subr.mxu0 0.0
          %2933 = vmatpush1.msra.mxu0 0.0
          %2934 = vmatprep.subr.mxu0 0.0
          %2935 = vmatpush1.msra.mxu0 0.0
          %2936 = vmatprep.subr.mxu0 0.0
          %2937 = vmatpush1.msra.mxu0 0.0
          %2938 = vmatprep.subr.mxu0 0.0
          %2939 = vmatpush1.msra.mxu0 0.0
          %2940 = vmatprep.subr.mxu0 0.0
          %2941 = vmatpush1.msra.mxu0 0.0
          %2942 = vmatprep.subr.mxu0 0.0
          %2943 = vmatpush1.msra.mxu0 0.0
          %2944 = vmatprep.subr.mxu0 0.0
          %2945 = vmatpush1.msra.mxu0 0.0
          %2946 = vmatprep.subr.mxu0 0.0
          %2947 = vmatpush1.msra.mxu0 0.0
          %2948 = vmatprep.subr.mxu0 0.0
          %2949 = vmatpush1.msra.mxu0 0.0
          %2950 = vmatprep.subr.mxu0 0.0
          %2951 = vmatpush1.msra.mxu0 0.0
          %2952 = vmatprep.subr.mxu0 0.0
          %2953 = vmatpush1.msra.mxu0 0.0
          %2954 = vmatprep.subr.mxu0 0.0
          %2955 = vmatpush1.msra.mxu0 0.0
          %2956 = vmatprep.subr.mxu0 0.0
          %2957 = vmatpush1.msra.mxu0 0.0
          %2958 = vmatprep.subr.mxu0 0.0
          %2959 = vmatpush1.msra.mxu0 0.0
          %2960 = vmatprep.mubr.f32.mxu0 0.0
          %v2961 = vand.u32 %v2485, 4294901760
          %v2962 = vsub.f32 %v2485, %v2961
          %v2963 = vand.u32 %v2962, 4294901760
          %2964 = vmatmul.mubr.f32.gmra.mrb[0].mxu0 %v2963
          %v2965 = vpop.f32.mrb[0].mxu0
          %v2966 = vadd.f32 %v2863, %v2965
          %v2967 = vpop.f32.mrb[0].mxu0
          %2968 = vmatprep.mubr.f32.mxu0 0.0
          %v2969 = vand.u32 %v2486, 4294901760
          %v2970 = vsub.f32 %v2486, %v2969
          %v2971 = vand.u32 %v2970, 4294901760
          %2972 = vmatmul.mubr.f32.gmra.mrb[0].mxu0 %v2971
          %v2973 = vpop.f32.mrb[0].mxu0
          %v2974 = vadd.f32 %v2870, %v2973
          %v2975 = vpop.f32.mrb[0].mxu0
          %2976 = vmatprep.mubr.f32.mxu0 0.0
          %v2977 = vand.u32 %v2487, 4294901760
          %v2978 = vsub.f32 %v2487, %v2977
          %v2979 = vand.u32 %v2978, 4294901760
          %2980 = vmatmul.mubr.f32.gmra.mrb[0].mxu0 %v2979
          %v2981 = vpop.f32.mrb[0].mxu0
          %v2982 = vadd.f32 %v2877, %v2981
          %v2983 = vpop.f32.mrb[0].mxu0
          %2984 = vdwg.mxu0
          %2985 = vmatprep.subr.mxu0 0.0
          %v2986 = vand.u32 %v240, 4294901760
          %v2987 = vsub.f32 %v240, %v2986
          %v2988 = vand.u32 %v2987, 4294901760
          %2989 = vmatpush1.msra.mxu0 %v2988
          %2990 = vmatprep.subr.mxu0 0.0
          %v2991 = vand.u32 %v241, 4294901760
          %v2992 = vsub.f32 %v241, %v2991
          %v2993 = vand.u32 %v2992, 4294901760
          %2994 = vmatpush1.msra.mxu0 %v2993
          %2995 = vmatprep.subr.mxu0 0.0
          %v2996 = vand.u32 %v242, 4294901760
          %v2997 = vsub.f32 %v242, %v2996
          %v2998 = vand.u32 %v2997, 4294901760
          %2999 = vmatpush1.msra.mxu0 %v2998
          %3000 = vmatprep.subr.mxu0 0.0
          %v3001 = vand.u32 %v243, 4294901760
          %v3002 = vsub.f32 %v243, %v3001
          %v3003 = vand.u32 %v3002, 4294901760
          %3004 = vmatpush1.msra.mxu0 %v3003
          %3005 = vmatprep.subr.mxu0 0.0
          %v3006 = vand.u32 %v244, 4294901760
          %v3007 = vsub.f32 %v244, %v3006
          %v3008 = vand.u32 %v3007, 4294901760
          %3009 = vmatpush1.msra.mxu0 %v3008
          %3010 = vmatprep.subr.mxu0 0.0
          %v3011 = vand.u32 %v245, 4294901760
          %v3012 = vsub.f32 %v245, %v3011
          %v3013 = vand.u32 %v3012, 4294901760
          %3014 = vmatpush1.msra.mxu0 %v3013
          %3015 = vmatprep.subr.mxu0 0.0
          %v3016 = vand.u32 %v246, 4294901760
          %v3017 = vsub.f32 %v246, %v3016
          %v3018 = vand.u32 %v3017, 4294901760
          %3019 = vmatpush1.msra.mxu0 %v3018
          %3020 = vmatprep.subr.mxu0 0.0
          %v3021 = vand.u32 %v247, 4294901760
          %v3022 = vsub.f32 %v247, %v3021
          %v3023 = vand.u32 %v3022, 4294901760
          %3024 = vmatpush1.msra.mxu0 %v3023
          %3025 = vmatprep.subr.mxu0 0.0
          %v3026 = vand.u32 %v248, 4294901760
          %v3027 = vsub.f32 %v248, %v3026
          %v3028 = vand.u32 %v3027, 4294901760
          %3029 = vmatpush1.msra.mxu0 %v3028
          %3030 = vmatprep.subr.mxu0 0.0
          %v3031 = vand.u32 %v249, 4294901760
          %v3032 = vsub.f32 %v249, %v3031
          %v3033 = vand.u32 %v3032, 4294901760
          %3034 = vmatpush1.msra.mxu0 %v3033
          %3035 = vmatprep.subr.mxu0 0.0
          %v3036 = vand.u32 %v250, 4294901760
          %v3037 = vsub.f32 %v250, %v3036
          %v3038 = vand.u32 %v3037, 4294901760
          %3039 = vmatpush1.msra.mxu0 %v3038
          %3040 = vmatprep.subr.mxu0 0.0
          %v3041 = vand.u32 %v251, 4294901760
          %v3042 = vsub.f32 %v251, %v3041
          %v3043 = vand.u32 %v3042, 4294901760
          %3044 = vmatpush1.msra.mxu0 %v3043
          %3045 = vmatprep.subr.mxu0 0.0
          %v3046 = vand.u32 %v252, 4294901760
          %v3047 = vsub.f32 %v252, %v3046
          %v3048 = vand.u32 %v3047, 4294901760
          %3049 = vmatpush1.msra.mxu0 %v3048
          %3050 = vmatprep.subr.mxu0 0.0
          %v3051 = vand.u32 %v253, 4294901760
          %v3052 = vsub.f32 %v253, %v3051
          %v3053 = vand.u32 %v3052, 4294901760
          %3054 = vmatpush1.msra.mxu0 %v3053
          %3055 = vmatprep.subr.mxu0 0.0
          %v3056 = vand.u32 %v254, 4294901760
          %v3057 = vsub.f32 %v254, %v3056
          %v3058 = vand.u32 %v3057, 4294901760
          %3059 = vmatpush1.msra.mxu0 %v3058
          %3060 = vmatprep.subr.mxu0 0.0
          %v3061 = vand.u32 %v255, 4294901760
          %v3062 = vsub.f32 %v255, %v3061
          %v3063 = vand.u32 %v3062, 4294901760
          %3064 = vmatpush1.msra.mxu0 %v3063
          %3065 = vmatprep.subr.mxu0 0.0
          %3066 = vmatpush1.msra.mxu0 0.0
          %3067 = vmatprep.subr.mxu0 0.0
          %3068 = vmatpush1.msra.mxu0 0.0
          %3069 = vmatprep.subr.mxu0 0.0
          %3070 = vmatpush1.msra.mxu0 0.0
          %3071 = vmatprep.subr.mxu0 0.0
          %3072 = vmatpush1.msra.mxu0 0.0
          %3073 = vmatprep.subr.mxu0 0.0
          %3074 = vmatpush1.msra.mxu0 0.0
          %3075 = vmatprep.subr.mxu0 0.0
          %3076 = vmatpush1.msra.mxu0 0.0
          %3077 = vmatprep.subr.mxu0 0.0
          %3078 = vmatpush1.msra.mxu0 0.0
          %3079 = vmatprep.subr.mxu0 0.0
          %3080 = vmatpush1.msra.mxu0 0.0
          %3081 = vmatprep.subr.mxu0 0.0
          %3082 = vmatpush1.msra.mxu0 0.0
          %3083 = vmatprep.subr.mxu0 0.0
          %3084 = vmatpush1.msra.mxu0 0.0
          %3085 = vmatprep.subr.mxu0 0.0
          %3086 = vmatpush1.msra.mxu0 0.0
          %3087 = vmatprep.subr.mxu0 0.0
          %3088 = vmatpush1.msra.mxu0 0.0
          %3089 = vmatprep.subr.mxu0 0.0
          %3090 = vmatpush1.msra.mxu0 0.0
          %3091 = vmatprep.subr.mxu0 0.0
          %3092 = vmatpush1.msra.mxu0 0.0
          %3093 = vmatprep.subr.mxu0 0.0
          %3094 = vmatpush1.msra.mxu0 0.0
          %3095 = vmatprep.subr.mxu0 0.0
          %3096 = vmatpush1.msra.mxu0 0.0
          %3097 = vmatprep.mubr.f32.mxu0 0.0
          %v3098 = vand.u32 %v2485, 4294901760
          %3099 = vmatmul.mubr.f32.gmra.mrb[0].mxu0 %v3098
          %v3100 = vpop.f32.mrb[0].mxu0
          %v3101 = vadd.f32 %v2966, %v3100
          %v3102 = vpop.f32.mrb[0].mxu0
          %3103 = vmatprep.mubr.f32.mxu0 0.0
          %v3104 = vand.u32 %v2486, 4294901760
          %3105 = vmatmul.mubr.f32.gmra.mrb[0].mxu0 %v3104
          %v3106 = vpop.f32.mrb[0].mxu0
          %v3107 = vadd.f32 %v2974, %v3106
          %v3108 = vpop.f32.mrb[0].mxu0
          %3109 = vmatprep.mubr.f32.mxu0 0.0
          %v3110 = vand.u32 %v2487, 4294901760
          %3111 = vmatmul.mubr.f32.gmra.mrb[0].mxu0 %v3110
          %v3112 = vpop.f32.mrb[0].mxu0
          %v3113 = vadd.f32 %v2982, %v3112
          %v3114 = vpop.f32.mrb[0].mxu0
          %3115 = vdwg.mxu0
          %3116 = vmatprep.subr.mxu0 0.0
          %v3117 = vand.u32 %v240, 4294901760
          %3118 = vmatpush1.msra.mxu0 %v3117
          %3119 = vmatprep.subr.mxu0 0.0
          %v3120 = vand.u32 %v241, 4294901760
          %3121 = vmatpush1.msra.mxu0 %v3120
          %3122 = vmatprep.subr.mxu0 0.0
          %v3123 = vand.u32 %v242, 4294901760
          %3124 = vmatpush1.msra.mxu0 %v3123
          %3125 = vmatprep.subr.mxu0 0.0
          %v3126 = vand.u32 %v243, 4294901760
          %3127 = vmatpush1.msra.mxu0 %v3126
          %3128 = vmatprep.subr.mxu0 0.0
          %v3129 = vand.u32 %v244, 4294901760
          %3130 = vmatpush1.msra.mxu0 %v3129
          %3131 = vmatprep.subr.mxu0 0.0
          %v3132 = vand.u32 %v245, 4294901760
          %3133 = vmatpush1.msra.mxu0 %v3132
          %3134 = vmatprep.subr.mxu0 0.0
          %v3135 = vand.u32 %v246, 4294901760
          %3136 = vmatpush1.msra.mxu0 %v3135
          %3137 = vmatprep.subr.mxu0 0.0
          %v3138 = vand.u32 %v247, 4294901760
          %3139 = vmatpush1.msra.mxu0 %v3138
          %3140 = vmatprep.subr.mxu0 0.0
          %v3141 = vand.u32 %v248, 4294901760
          %3142 = vmatpush1.msra.mxu0 %v3141
          %3143 = vmatprep.subr.mxu0 0.0
          %v3144 = vand.u32 %v249, 4294901760
          %3145 = vmatpush1.msra.mxu0 %v3144
          %3146 = vmatprep.subr.mxu0 0.0
          %v3147 = vand.u32 %v250, 4294901760
          %3148 = vmatpush1.msra.mxu0 %v3147
          %3149 = vmatprep.subr.mxu0 0.0
          %v3150 = vand.u32 %v251, 4294901760
          %3151 = vmatpush1.msra.mxu0 %v3150
          %3152 = vmatprep.subr.mxu0 0.0
          %v3153 = vand.u32 %v252, 4294901760
          %3154 = vmatpush1.msra.mxu0 %v3153
          %3155 = vmatprep.subr.mxu0 0.0
          %v3156 = vand.u32 %v253, 4294901760
          %3157 = vmatpush1.msra.mxu0 %v3156
          %3158 = vmatprep.subr.mxu0 0.0
          %v3159 = vand.u32 %v254, 4294901760
          %3160 = vmatpush1.msra.mxu0 %v3159
          %3161 = vmatprep.subr.mxu0 0.0
          %v3162 = vand.u32 %v255, 4294901760
          %3163 = vmatpush1.msra.mxu0 %v3162
          %3164 = vmatprep.subr.mxu0 0.0
          %3165 = vmatpush1.msra.mxu0 0.0
          %3166 = vmatprep.subr.mxu0 0.0
          %3167 = vmatpush1.msra.mxu0 0.0
          %3168 = vmatprep.subr.mxu0 0.0
          %3169 = vmatpush1.msra.mxu0 0.0
          %3170 = vmatprep.subr.mxu0 0.0
          %3171 = vmatpush1.msra.mxu0 0.0
          %3172 = vmatprep.subr.mxu0 0.0
          %3173 = vmatpush1.msra.mxu0 0.0
          %3174 = vmatprep.subr.mxu0 0.0
          %3175 = vmatpush1.msra.mxu0 0.0
          %3176 = vmatprep.subr.mxu0 0.0
          %3177 = vmatpush1.msra.mxu0 0.0
          %3178 = vmatprep.subr.mxu0 0.0
          %3179 = vmatpush1.msra.mxu0 0.0
          %3180 = vmatprep.subr.mxu0 0.0
          %3181 = vmatpush1.msra.mxu0 0.0
          %3182 = vmatprep.subr.mxu0 0.0
          %3183 = vmatpush1.msra.mxu0 0.0
          %3184 = vmatprep.subr.mxu0 0.0
          %3185 = vmatpush1.msra.mxu0 0.0
          %3186 = vmatprep.subr.mxu0 0.0
          %3187 = vmatpush1.msra.mxu0 0.0
          %3188 = vmatprep.subr.mxu0 0.0
          %3189 = vmatpush1.msra.mxu0 0.0
          %3190 = vmatprep.subr.mxu0 0.0
          %3191 = vmatpush1.msra.mxu0 0.0
          %3192 = vmatprep.subr.mxu0 0.0
          %3193 = vmatpush1.msra.mxu0 0.0
          %3194 = vmatprep.subr.mxu0 0.0
          %3195 = vmatpush1.msra.mxu0 0.0
          %3196 = vmatprep.mubr.f32.mxu0 0.0
          %v3197 = vand.u32 %v2485, 4294901760
          %3198 = vmatmul.mubr.f32.gmra.mrb[0].mxu0 %v3197
          %v3199 = vpop.f32.mrb[0].mxu0
          %v3200 = vadd.f32 %v3101, %v3199
          %v3201 = vpop.f32.mrb[0].mxu0
          %3202 = vmatprep.mubr.f32.mxu0 0.0
          %v3203 = vand.u32 %v2486, 4294901760
          %3204 = vmatmul.mubr.f32.gmra.mrb[0].mxu0 %v3203
          %v3205 = vpop.f32.mrb[0].mxu0
          %v3206 = vadd.f32 %v3107, %v3205
          %v3207 = vpop.f32.mrb[0].mxu0
          %3208 = vmatprep.mubr.f32.mxu0 0.0
          %v3209 = vand.u32 %v2487, 4294901760
          %3210 = vmatmul.mubr.f32.gmra.mrb[0].mxu0 %v3209
          %v3211 = vpop.f32.mrb[0].mxu0
          %v3212 = vadd.f32 %v3113, %v3211
          %v3213 = vpop.f32.mrb[0].mxu0
          %3214 = vdwg.mxu0
          %3218 = vrot.lane.b32.xlu0 %v3200, 96
          %v3219 = vpop.permute.xlu0 %3218
          %3220 = vrot.lane.b32.xlu0 %v3206, 96
          %v3221 = vpop.permute.xlu0 %3220
          %3222 = vrot.lane.b32.xlu0 %v3212, 96
          %v3223 = vpop.permute.xlu0 %3222
          %vm3227 = vcmask 1048320
          %3228 = vst.msk [vmem:[#allocation2] sm:$0xff] %vm3227, %v3219
          %3229 = vst.msk [vmem:[#allocation2 + $0x8] sm:$0xff] %vm3227, %v3221
          %3230 = vst.msk [vmem:[#allocation2 + $0x10] sm:$0xff] %vm3227, %v3223
        $region36: #{tpu_custom_call.1} parent=31 // pred_fallthru
          _
        %v3231 = vld [vmem:[#allocation2] sm:$0xff]
        %v3232 = vld [vmem:[#allocation2 + $0x8] sm:$0xff]
        %v3233 = vld [vmem:[#allocation2 + $0x10] sm:$0xff]
        %v3234 = vld [vmem:[%s233] sm:$0xff]
        %v3235 = vld [vmem:[%s233 + $0x8] sm:$0xff]
        %v3236 = vld [vmem:[%s233 + $0x10] sm:$0xff]
        %v3237 = vld [vmem:[%s233 + $0x18] sm:$0xff]
        %vm3238 = vcmask 195584
        %v3240 = vsel %vm3238, %v3234, 0
        %v3243 = vsel %vm3238, %v3235, 0
        %v3246 = vsel %vm3238, %v3236, 0
        %v3249 = vsel %vm3238, %v3237, 0
        %3251 = vmatprep.subr.mxu0 0.0
        %v3252 = vand.u32 %v3231, 4294901760
        %3253 = vmatpush1.msra.mxu0 %v3252
        %3254 = vmatprep.subr.mxu0 0.0
        %v3255 = vand.u32 %v3232, 4294901760
        %3256 = vmatpush1.msra.mxu0 %v3255
        %3257 = vmatprep.subr.mxu0 0.0
        %v3258 = vand.u32 %v3233, 4294901760
        %3259 = vmatpush1.msra.mxu0 %v3258
        %3260 = vmatprep.subr.mxu0 0.0
        %3261 = vmatpush1.msra.mxu0 0.0
        %3262 = vmatprep.subr.mxu0 0.0
        %3263 = vmatpush1.msra.mxu0 0.0
        %3264 = vmatprep.subr.mxu0 0.0
        %3265 = vmatpush1.msra.mxu0 0.0
        %3266 = vmatprep.subr.mxu0 0.0
        %3267 = vmatpush1.msra.mxu0 0.0
        %3268 = vmatprep.subr.mxu0 0.0
        %3269 = vmatpush1.msra.mxu0 0.0
        %3270 = vmatprep.subr.mxu0 0.0
        %3271 = vmatpush1.msra.mxu0 0.0
        %3272 = vmatprep.subr.mxu0 0.0
        %3273 = vmatpush1.msra.mxu0 0.0
        %3274 = vmatprep.subr.mxu0 0.0
        %3275 = vmatpush1.msra.mxu0 0.0
        %3276 = vmatprep.subr.mxu0 0.0
        %3277 = vmatpush1.msra.mxu0 0.0
        %3278 = vmatprep.subr.mxu0 0.0
        %3279 = vmatpush1.msra.mxu0 0.0
        %3280 = vmatprep.subr.mxu0 0.0
        %3281 = vmatpush1.msra.mxu0 0.0
        %3282 = vmatprep.subr.mxu0 0.0
        %3283 = vmatpush1.msra.mxu0 0.0
        %3284 = vmatprep.subr.mxu0 0.0
        %3285 = vmatpush1.msra.mxu0 0.0
        %3286 = vmatprep.subr.mxu0 0.0
        %3287 = vmatpush1.msra.mxu0 0.0
        %3288 = vmatprep.subr.mxu0 0.0
        %3289 = vmatpush1.msra.mxu0 0.0
        %3290 = vmatprep.subr.mxu0 0.0
        %3291 = vmatpush1.msra.mxu0 0.0
        %3292 = vmatprep.subr.mxu0 0.0
        %3293 = vmatpush1.msra.mxu0 0.0
        %3294 = vmatprep.subr.mxu0 0.0
        %3295 = vmatpush1.msra.mxu0 0.0
        %3296 = vmatprep.subr.mxu0 0.0
        %3297 = vmatpush1.msra.mxu0 0.0
        %3298 = vmatprep.subr.mxu0 0.0
        %3299 = vmatpush1.msra.mxu0 0.0
        %3300 = vmatprep.subr.mxu0 0.0
        %3301 = vmatpush1.msra.mxu0 0.0
        %3302 = vmatprep.subr.mxu0 0.0
        %3303 = vmatpush1.msra.mxu0 0.0
        %3304 = vmatprep.subr.mxu0 0.0
        %3305 = vmatpush1.msra.mxu0 0.0
        %3306 = vmatprep.subr.mxu0 0.0
        %3307 = vmatpush1.msra.mxu0 0.0
        %3308 = vmatprep.subr.mxu0 0.0
        %3309 = vmatpush1.msra.mxu0 0.0
        %3310 = vmatprep.subr.mxu0 0.0
        %3311 = vmatpush1.msra.mxu0 0.0
        %3312 = vmatprep.subr.mxu0 0.0
        %3313 = vmatpush1.msra.mxu0 0.0
        %3314 = vmatprep.subr.mxu0 0.0
        %3315 = vmatpush1.msra.mxu0 0.0
        %3316 = vmatprep.subr.mxu0 0.0
        %3317 = vmatpush1.msra.mxu0 0.0
        %3318 = vmatprep.mubr.f32.mxu0 0.0
        %v3319 = vand.u32 %v3240, 4294901760
        %v3320 = vsub.f32 %v3240, %v3319
        %v3321 = vand.u32 %v3320, 4294901760
        %v3322 = vsub.f32 %v3320, %v3321
        %v3323 = vand.u32 %v3322, 4294901760
        %3324 = vmatmul.mubr.f32.gmra.mrb[0].mxu0 %v3323
        %v3325 = vpop.f32.mrb[0].mxu0
        %v3326 = vadd.f32 0.0, %v3325
        %v3327 = vpop.f32.mrb[0].mxu0
        %3328 = vmatprep.mubr.f32.mxu0 0.0
        %v3329 = vand.u32 %v3243, 4294901760
        %v3330 = vsub.f32 %v3243, %v3329
        %v3331 = vand.u32 %v3330, 4294901760
        %v3332 = vsub.f32 %v3330, %v3331
        %v3333 = vand.u32 %v3332, 4294901760
        %3334 = vmatmul.mubr.f32.gmra.mrb[0].mxu0 %v3333
        %v3335 = vpop.f32.mrb[0].mxu0
        %v3336 = vadd.f32 0.0, %v3335
        %v3337 = vpop.f32.mrb[0].mxu0
        %3338 = vmatprep.mubr.f32.mxu0 0.0
        %v3339 = vand.u32 %v3246, 4294901760
        %v3340 = vsub.f32 %v3246, %v3339
        %v3341 = vand.u32 %v3340, 4294901760
        %v3342 = vsub.f32 %v3340, %v3341
        %v3343 = vand.u32 %v3342, 4294901760
        %3344 = vmatmul.mubr.f32.gmra.mrb[0].mxu0 %v3343
        %v3345 = vpop.f32.mrb[0].mxu0
        %v3346 = vadd.f32 0.0, %v3345
        %v3347 = vpop.f32.mrb[0].mxu0
        %3348 = vmatprep.mubr.f32.mxu0 0.0
        %v3349 = vand.u32 %v3249, 4294901760
        %v3350 = vsub.f32 %v3249, %v3349
        %v3351 = vand.u32 %v3350, 4294901760
        %v3352 = vsub.f32 %v3350, %v3351
        %v3353 = vand.u32 %v3352, 4294901760
        %3354 = vmatmul.mubr.f32.gmra.mrb[0].mxu0 %v3353
        %v3355 = vpop.f32.mrb[0].mxu0
        %v3356 = vadd.f32 0.0, %v3355
        %v3357 = vpop.f32.mrb[0].mxu0
        %3358 = vdwg.mxu0
        %3359 = vmatprep.subr.mxu0 0.0
        %v3360 = vand.u32 %v3231, 4294901760
        %v3361 = vsub.f32 %v3231, %v3360
        %v3362 = vand.u32 %v3361, 4294901760
        %v3363 = vsub.f32 %v3361, %v3362
        %v3364 = vand.u32 %v3363, 4294901760
        %3365 = vmatpush1.msra.mxu0 %v3364
        %3366 = vmatprep.subr.mxu0 0.0
        %v3367 = vand.u32 %v3232, 4294901760
        %v3368 = vsub.f32 %v3232, %v3367
        %v3369 = vand.u32 %v3368, 4294901760
        %v3370 = vsub.f32 %v3368, %v3369
        %v3371 = vand.u32 %v3370, 4294901760
        %3372 = vmatpush1.msra.mxu0 %v3371
        %3373 = vmatprep.subr.mxu0 0.0
        %v3374 = vand.u32 %v3233, 4294901760
        %v3375 = vsub.f32 %v3233, %v3374
        %v3376 = vand.u32 %v3375, 4294901760
        %v3377 = vsub.f32 %v3375, %v3376
        %v3378 = vand.u32 %v3377, 4294901760
        %3379 = vmatpush1.msra.mxu0 %v3378
        %3380 = vmatprep.subr.mxu0 0.0
        %3381 = vmatpush1.msra.mxu0 0.0
        %3382 = vmatprep.subr.mxu0 0.0
        %3383 = vmatpush1.msra.mxu0 0.0
        %3384 = vmatprep.subr.mxu0 0.0
        %3385 = vmatpush1.msra.mxu0 0.0
        %3386 = vmatprep.subr.mxu0 0.0
        %3387 = vmatpush1.msra.mxu0 0.0
        %3388 = vmatprep.subr.mxu0 0.0
        %3389 = vmatpush1.msra.mxu0 0.0
        %3390 = vmatprep.subr.mxu0 0.0
        %3391 = vmatpush1.msra.mxu0 0.0
        %3392 = vmatprep.subr.mxu0 0.0
        %3393 = vmatpush1.msra.mxu0 0.0
        %3394 = vmatprep.subr.mxu0 0.0
        %3395 = vmatpush1.msra.mxu0 0.0
        %3396 = vmatprep.subr.mxu0 0.0
        %3397 = vmatpush1.msra.mxu0 0.0
        %3398 = vmatprep.subr.mxu0 0.0
        %3399 = vmatpush1.msra.mxu0 0.0
        %3400 = vmatprep.subr.mxu0 0.0
        %3401 = vmatpush1.msra.mxu0 0.0
        %3402 = vmatprep.subr.mxu0 0.0
        %3403 = vmatpush1.msra.mxu0 0.0
        %3404 = vmatprep.subr.mxu0 0.0
        %3405 = vmatpush1.msra.mxu0 0.0
        %3406 = vmatprep.subr.mxu0 0.0
        %3407 = vmatpush1.msra.mxu0 0.0
        %3408 = vmatprep.subr.mxu0 0.0
        %3409 = vmatpush1.msra.mxu0 0.0
        %3410 = vmatprep.subr.mxu0 0.0
        %3411 = vmatpush1.msra.mxu0 0.0
        %3412 = vmatprep.subr.mxu0 0.0
        %3413 = vmatpush1.msra.mxu0 0.0
        %3414 = vmatprep.subr.mxu0 0.0
        %3415 = vmatpush1.msra.mxu0 0.0
        %3416 = vmatprep.subr.mxu0 0.0
        %3417 = vmatpush1.msra.mxu0 0.0
        %3418 = vmatprep.subr.mxu0 0.0
        %3419 = vmatpush1.msra.mxu0 0.0
        %3420 = vmatprep.subr.mxu0 0.0
        %3421 = vmatpush1.msra.mxu0 0.0
        %3422 = vmatprep.subr.mxu0 0.0
        %3423 = vmatpush1.msra.mxu0 0.0
        %3424 = vmatprep.subr.mxu0 0.0
        %3425 = vmatpush1.msra.mxu0 0.0
        %3426 = vmatprep.subr.mxu0 0.0
        %3427 = vmatpush1.msra.mxu0 0.0
        %3428 = vmatprep.subr.mxu0 0.0
        %3429 = vmatpush1.msra.mxu0 0.0
        %3430 = vmatprep.subr.mxu0 0.0
        %3431 = vmatpush1.msra.mxu0 0.0
        %3432 = vmatprep.subr.mxu0 0.0
        %3433 = vmatpush1.msra.mxu0 0.0
        %3434 = vmatprep.subr.mxu0 0.0
        %3435 = vmatpush1.msra.mxu0 0.0
        %3436 = vmatprep.subr.mxu0 0.0
        %3437 = vmatpush1.msra.mxu0 0.0
        %3438 = vmatprep.mubr.f32.mxu0 0.0
        %v3439 = vand.u32 %v3240, 4294901760
        %3440 = vmatmul.mubr.f32.gmra.mrb[0].mxu0 %v3439
        %v3441 = vpop.f32.mrb[0].mxu0
        %v3442 = vadd.f32 %v3326, %v3441
        %v3443 = vpop.f32.mrb[0].mxu0
        %3444 = vmatprep.mubr.f32.mxu0 0.0
        %v3445 = vand.u32 %v3243, 4294901760
        %3446 = vmatmul.mubr.f32.gmra.mrb[0].mxu0 %v3445
        %v3447 = vpop.f32.mrb[0].mxu0
        %v3448 = vadd.f32 %v3336, %v3447
        %v3449 = vpop.f32.mrb[0].mxu0
        %3450 = vmatprep.mubr.f32.mxu0 0.0
        %v3451 = vand.u32 %v3246, 4294901760
        %3452 = vmatmul.mubr.f32.gmra.mrb[0].mxu0 %v3451
        %v3453 = vpop.f32.mrb[0].mxu0
        %v3454 = vadd.f32 %v3346, %v3453
        %v3455 = vpop.f32.mrb[0].mxu0
        %3456 = vmatprep.mubr.f32.mxu0 0.0
        %v3457 = vand.u32 %v3249, 4294901760
        %3458 = vmatmul.mubr.f32.gmra.mrb[0].mxu0 %v3457
        %v3459 = vpop.f32.mrb[0].mxu0
        %v3460 = vadd.f32 %v3356, %v3459
        %v3461 = vpop.f32.mrb[0].mxu0
        %3462 = vdwg.mxu0
        %3463 = vmatprep.subr.mxu0 0.0
        %v3464 = vand.u32 %v3231, 4294901760
        %v3465 = vsub.f32 %v3231, %v3464
        %3466 = vmatpush1.msra.mxu0 %v3465
        %3467 = vmatprep.subr.mxu0 0.0
        %v3468 = vand.u32 %v3232, 4294901760
        %v3469 = vsub.f32 %v3232, %v3468
        %3470 = vmatpush1.msra.mxu0 %v3469
        %3471 = vmatprep.subr.mxu0 0.0
        %v3472 = vand.u32 %v3233, 4294901760
        %v3473 = vsub.f32 %v3233, %v3472
        %3474 = vmatpush1.msra.mxu0 %v3473
        %3475 = vmatprep.subr.mxu0 0.0
        %3476 = vmatpush1.msra.mxu0 0.0
        %3477 = vmatprep.subr.mxu0 0.0
        %3478 = vmatpush1.msra.mxu0 0.0
        %3479 = vmatprep.subr.mxu0 0.0
        %3480 = vmatpush1.msra.mxu0 0.0
        %3481 = vmatprep.subr.mxu0 0.0
        %3482 = vmatpush1.msra.mxu0 0.0
        %3483 = vmatprep.subr.mxu0 0.0
        %3484 = vmatpush1.msra.mxu0 0.0
        %3485 = vmatprep.subr.mxu0 0.0
        %3486 = vmatpush1.msra.mxu0 0.0
        %3487 = vmatprep.subr.mxu0 0.0
        %3488 = vmatpush1.msra.mxu0 0.0
        %3489 = vmatprep.subr.mxu0 0.0
        %3490 = vmatpush1.msra.mxu0 0.0
        %3491 = vmatprep.subr.mxu0 0.0
        %3492 = vmatpush1.msra.mxu0 0.0
        %3493 = vmatprep.subr.mxu0 0.0
        %3494 = vmatpush1.msra.mxu0 0.0
        %3495 = vmatprep.subr.mxu0 0.0
        %3496 = vmatpush1.msra.mxu0 0.0
        %3497 = vmatprep.subr.mxu0 0.0
        %3498 = vmatpush1.msra.mxu0 0.0
        %3499 = vmatprep.subr.mxu0 0.0
        %3500 = vmatpush1.msra.mxu0 0.0
        %3501 = vmatprep.subr.mxu0 0.0
        %3502 = vmatpush1.msra.mxu0 0.0
        %3503 = vmatprep.subr.mxu0 0.0
        %3504 = vmatpush1.msra.mxu0 0.0
        %3505 = vmatprep.subr.mxu0 0.0
        %3506 = vmatpush1.msra.mxu0 0.0
        %3507 = vmatprep.subr.mxu0 0.0
        %3508 = vmatpush1.msra.mxu0 0.0
        %3509 = vmatprep.subr.mxu0 0.0
        %3510 = vmatpush1.msra.mxu0 0.0
        %3511 = vmatprep.subr.mxu0 0.0
        %3512 = vmatpush1.msra.mxu0 0.0
        %3513 = vmatprep.subr.mxu0 0.0
        %3514 = vmatpush1.msra.mxu0 0.0
        %3515 = vmatprep.subr.mxu0 0.0
        %3516 = vmatpush1.msra.mxu0 0.0
        %3517 = vmatprep.subr.mxu0 0.0
        %3518 = vmatpush1.msra.mxu0 0.0
        %3519 = vmatprep.subr.mxu0 0.0
        %3520 = vmatpush1.msra.mxu0 0.0
        %3521 = vmatprep.subr.mxu0 0.0
        %3522 = vmatpush1.msra.mxu0 0.0
        %3523 = vmatprep.subr.mxu0 0.0
        %3524 = vmatpush1.msra.mxu0 0.0
        %3525 = vmatprep.subr.mxu0 0.0
        %3526 = vmatpush1.msra.mxu0 0.0
        %3527 = vmatprep.subr.mxu0 0.0
        %3528 = vmatpush1.msra.mxu0 0.0
        %3529 = vmatprep.subr.mxu0 0.0
        %3530 = vmatpush1.msra.mxu0 0.0
        %3531 = vmatprep.subr.mxu0 0.0
        %3532 = vmatpush1.msra.mxu0 0.0
        %3533 = vmatprep.mubr.f32.mxu0 0.0
        %v3534 = vand.u32 %v3240, 4294901760
        %v3535 = vsub.f32 %v3240, %v3534
        %3536 = vmatmul.mubr.f32.gmra.mrb[0].mxu0 %v3535
        %v3537 = vpop.f32.mrb[0].mxu0
        %v3538 = vadd.f32 %v3442, %v3537
        %v3539 = vpop.f32.mrb[0].mxu0
        %3540 = vmatprep.mubr.f32.mxu0 0.0
        %v3541 = vand.u32 %v3243, 4294901760
        %v3542 = vsub.f32 %v3243, %v3541
        %3543 = vmatmul.mubr.f32.gmra.mrb[0].mxu0 %v3542
        %v3544 = vpop.f32.mrb[0].mxu0
        %v3545 = vadd.f32 %v3448, %v3544
        %v3546 = vpop.f32.mrb[0].mxu0
        %3547 = vmatprep.mubr.f32.mxu0 0.0
        %v3548 = vand.u32 %v3246, 4294901760
        %v3549 = vsub.f32 %v3246, %v3548
        %3550 = vmatmul.mubr.f32.gmra.mrb[0].mxu0 %v3549
        %v3551 = vpop.f32.mrb[0].mxu0
        %v3552 = vadd.f32 %v3454, %v3551
        %v3553 = vpop.f32.mrb[0].mxu0
        %3554 = vmatprep.mubr.f32.mxu0 0.0
        %v3555 = vand.u32 %v3249, 4294901760
        %v3556 = vsub.f32 %v3249, %v3555
        %3557 = vmatmul.mubr.f32.gmra.mrb[0].mxu0 %v3556
        %v3558 = vpop.f32.mrb[0].mxu0
        %v3559 = vadd.f32 %v3460, %v3558
        %v3560 = vpop.f32.mrb[0].mxu0
        %3561 = vdwg.mxu0
        %3562 = vmatprep.subr.mxu0 0.0
        %v3563 = vand.u32 %v3231, 4294901760
        %3564 = vmatpush1.msra.mxu0 %v3563
        %3565 = vmatprep.subr.mxu0 0.0
        %v3566 = vand.u32 %v3232, 4294901760
        %3567 = vmatpush1.msra.mxu0 %v3566
        %3568 = vmatprep.subr.mxu0 0.0
        %v3569 = vand.u32 %v3233, 4294901760
        %3570 = vmatpush1.msra.mxu0 %v3569
        %3571 = vmatprep.subr.mxu0 0.0
        %3572 = vmatpush1.msra.mxu0 0.0
        %3573 = vmatprep.subr.mxu0 0.0
        %3574 = vmatpush1.msra.mxu0 0.0
        %3575 = vmatprep.subr.mxu0 0.0
        %3576 = vmatpush1.msra.mxu0 0.0
        %3577 = vmatprep.subr.mxu0 0.0
        %3578 = vmatpush1.msra.mxu0 0.0
        %3579 = vmatprep.subr.mxu0 0.0
        %3580 = vmatpush1.msra.mxu0 0.0
        %3581 = vmatprep.subr.mxu0 0.0
        %3582 = vmatpush1.msra.mxu0 0.0
        %3583 = vmatprep.subr.mxu0 0.0
        %3584 = vmatpush1.msra.mxu0 0.0
        %3585 = vmatprep.subr.mxu0 0.0
        %3586 = vmatpush1.msra.mxu0 0.0
        %3587 = vmatprep.subr.mxu0 0.0
        %3588 = vmatpush1.msra.mxu0 0.0
        %3589 = vmatprep.subr.mxu0 0.0
        %3590 = vmatpush1.msra.mxu0 0.0
        %3591 = vmatprep.subr.mxu0 0.0
        %3592 = vmatpush1.msra.mxu0 0.0
        %3593 = vmatprep.subr.mxu0 0.0
        %3594 = vmatpush1.msra.mxu0 0.0
        %3595 = vmatprep.subr.mxu0 0.0
        %3596 = vmatpush1.msra.mxu0 0.0
        %3597 = vmatprep.subr.mxu0 0.0
        %3598 = vmatpush1.msra.mxu0 0.0
        %3599 = vmatprep.subr.mxu0 0.0
        %3600 = vmatpush1.msra.mxu0 0.0
        %3601 = vmatprep.subr.mxu0 0.0
        %3602 = vmatpush1.msra.mxu0 0.0
        %3603 = vmatprep.subr.mxu0 0.0
        %3604 = vmatpush1.msra.mxu0 0.0
        %3605 = vmatprep.subr.mxu0 0.0
        %3606 = vmatpush1.msra.mxu0 0.0
        %3607 = vmatprep.subr.mxu0 0.0
        %3608 = vmatpush1.msra.mxu0 0.0
        %3609 = vmatprep.subr.mxu0 0.0
        %3610 = vmatpush1.msra.mxu0 0.0
        %3611 = vmatprep.subr.mxu0 0.0
        %3612 = vmatpush1.msra.mxu0 0.0
        %3613 = vmatprep.subr.mxu0 0.0
        %3614 = vmatpush1.msra.mxu0 0.0
        %3615 = vmatprep.subr.mxu0 0.0
        %3616 = vmatpush1.msra.mxu0 0.0
        %3617 = vmatprep.subr.mxu0 0.0
        %3618 = vmatpush1.msra.mxu0 0.0
        %3619 = vmatprep.subr.mxu0 0.0
        %3620 = vmatpush1.msra.mxu0 0.0
        %3621 = vmatprep.subr.mxu0 0.0
        %3622 = vmatpush1.msra.mxu0 0.0
        %3623 = vmatprep.subr.mxu0 0.0
        %3624 = vmatpush1.msra.mxu0 0.0
        %3625 = vmatprep.subr.mxu0 0.0
        %3626 = vmatpush1.msra.mxu0 0.0
        %3627 = vmatprep.subr.mxu0 0.0
        %3628 = vmatpush1.msra.mxu0 0.0
        %3629 = vmatprep.mubr.f32.mxu0 0.0
        %v3630 = vand.u32 %v3240, 4294901760
        %v3631 = vsub.f32 %v3240, %v3630
        %v3632 = vand.u32 %v3631, 4294901760
        %3633 = vmatmul.mubr.f32.gmra.mrb[0].mxu0 %v3632
        %v3634 = vpop.f32.mrb[0].mxu0
        %v3635 = vadd.f32 %v3538, %v3634
        %v3636 = vpop.f32.mrb[0].mxu0
        %3637 = vmatprep.mubr.f32.mxu0 0.0
        %v3638 = vand.u32 %v3243, 4294901760
        %v3639 = vsub.f32 %v3243, %v3638
        %v3640 = vand.u32 %v3639, 4294901760
        %3641 = vmatmul.mubr.f32.gmra.mrb[0].mxu0 %v3640
        %v3642 = vpop.f32.mrb[0].mxu0
        %v3643 = vadd.f32 %v3545, %v3642
        %v3644 = vpop.f32.mrb[0].mxu0
        %3645 = vmatprep.mubr.f32.mxu0 0.0
        %v3646 = vand.u32 %v3246, 4294901760
        %v3647 = vsub.f32 %v3246, %v3646
        %v3648 = vand.u32 %v3647, 4294901760
        %3649 = vmatmul.mubr.f32.gmra.mrb[0].mxu0 %v3648
        %v3650 = vpop.f32.mrb[0].mxu0
        %v3651 = vadd.f32 %v3552, %v3650
        %v3652 = vpop.f32.mrb[0].mxu0
        %3653 = vmatprep.mubr.f32.mxu0 0.0
        %v3654 = vand.u32 %v3249, 4294901760
        %v3655 = vsub.f32 %v3249, %v3654
        %v3656 = vand.u32 %v3655, 4294901760
        %3657 = vmatmul.mubr.f32.gmra.mrb[0].mxu0 %v3656
        %v3658 = vpop.f32.mrb[0].mxu0
        %v3659 = vadd.f32 %v3559, %v3658
        %v3660 = vpop.f32.mrb[0].mxu0
        %3661 = vdwg.mxu0
        %3662 = vmatprep.subr.mxu0 0.0
        %v3663 = vand.u32 %v3231, 4294901760
        %v3664 = vsub.f32 %v3231, %v3663
        %v3665 = vand.u32 %v3664, 4294901760
        %3666 = vmatpush1.msra.mxu0 %v3665
        %3667 = vmatprep.subr.mxu0 0.0
        %v3668 = vand.u32 %v3232, 4294901760
        %v3669 = vsub.f32 %v3232, %v3668
        %v3670 = vand.u32 %v3669, 4294901760
        %3671 = vmatpush1.msra.mxu0 %v3670
        %3672 = vmatprep.subr.mxu0 0.0
        %v3673 = vand.u32 %v3233, 4294901760
        %v3674 = vsub.f32 %v3233, %v3673
        %v3675 = vand.u32 %v3674, 4294901760
        %3676 = vmatpush1.msra.mxu0 %v3675
        %3677 = vmatprep.subr.mxu0 0.0
        %3678 = vmatpush1.msra.mxu0 0.0
        %3679 = vmatprep.subr.mxu0 0.0
        %3680 = vmatpush1.msra.mxu0 0.0
        %3681 = vmatprep.subr.mxu0 0.0
        %3682 = vmatpush1.msra.mxu0 0.0
        %3683 = vmatprep.subr.mxu0 0.0
        %3684 = vmatpush1.msra.mxu0 0.0
        %3685 = vmatprep.subr.mxu0 0.0
        %3686 = vmatpush1.msra.mxu0 0.0
        %3687 = vmatprep.subr.mxu0 0.0
        %3688 = vmatpush1.msra.mxu0 0.0
        %3689 = vmatprep.subr.mxu0 0.0
        %3690 = vmatpush1.msra.mxu0 0.0
        %3691 = vmatprep.subr.mxu0 0.0
        %3692 = vmatpush1.msra.mxu0 0.0
        %3693 = vmatprep.subr.mxu0 0.0
        %3694 = vmatpush1.msra.mxu0 0.0
        %3695 = vmatprep.subr.mxu0 0.0
        %3696 = vmatpush1.msra.mxu0 0.0
        %3697 = vmatprep.subr.mxu0 0.0
        %3698 = vmatpush1.msra.mxu0 0.0
        %3699 = vmatprep.subr.mxu0 0.0
        %3700 = vmatpush1.msra.mxu0 0.0
        %3701 = vmatprep.subr.mxu0 0.0
        %3702 = vmatpush1.msra.mxu0 0.0
        %3703 = vmatprep.subr.mxu0 0.0
        %3704 = vmatpush1.msra.mxu0 0.0
        %3705 = vmatprep.subr.mxu0 0.0
        %3706 = vmatpush1.msra.mxu0 0.0
        %3707 = vmatprep.subr.mxu0 0.0
        %3708 = vmatpush1.msra.mxu0 0.0
        %3709 = vmatprep.subr.mxu0 0.0
        %3710 = vmatpush1.msra.mxu0 0.0
        %3711 = vmatprep.subr.mxu0 0.0
        %3712 = vmatpush1.msra.mxu0 0.0
        %3713 = vmatprep.subr.mxu0 0.0
        %3714 = vmatpush1.msra.mxu0 0.0
        %3715 = vmatprep.subr.mxu0 0.0
        %3716 = vmatpush1.msra.mxu0 0.0
        %3717 = vmatprep.subr.mxu0 0.0
        %3718 = vmatpush1.msra.mxu0 0.0
        %3719 = vmatprep.subr.mxu0 0.0
        %3720 = vmatpush1.msra.mxu0 0.0
        %3721 = vmatprep.subr.mxu0 0.0
        %3722 = vmatpush1.msra.mxu0 0.0
        %3723 = vmatprep.subr.mxu0 0.0
        %3724 = vmatpush1.msra.mxu0 0.0
        %3725 = vmatprep.subr.mxu0 0.0
        %3726 = vmatpush1.msra.mxu0 0.0
        %3727 = vmatprep.subr.mxu0 0.0
        %3728 = vmatpush1.msra.mxu0 0.0
        %3729 = vmatprep.subr.mxu0 0.0
        %3730 = vmatpush1.msra.mxu0 0.0
        %3731 = vmatprep.subr.mxu0 0.0
        %3732 = vmatpush1.msra.mxu0 0.0
        %3733 = vmatprep.subr.mxu0 0.0
        %3734 = vmatpush1.msra.mxu0 0.0
        %3735 = vmatprep.mubr.f32.mxu0 0.0
        %v3736 = vand.u32 %v3240, 4294901760
        %3737 = vmatmul.mubr.f32.gmra.mrb[0].mxu0 %v3736
        %v3738 = vpop.f32.mrb[0].mxu0
        %v3739 = vadd.f32 %v3635, %v3738
        %v3740 = vpop.f32.mrb[0].mxu0
        %3741 = vmatprep.mubr.f32.mxu0 0.0
        %v3742 = vand.u32 %v3243, 4294901760
        %3743 = vmatmul.mubr.f32.gmra.mrb[0].mxu0 %v3742
        %v3744 = vpop.f32.mrb[0].mxu0
        %v3745 = vadd.f32 %v3643, %v3744
        %v3746 = vpop.f32.mrb[0].mxu0
        %3747 = vmatprep.mubr.f32.mxu0 0.0
        %v3748 = vand.u32 %v3246, 4294901760
        %3749 = vmatmul.mubr.f32.gmra.mrb[0].mxu0 %v3748
        %v3750 = vpop.f32.mrb[0].mxu0
        %v3751 = vadd.f32 %v3651, %v3750
        %v3752 = vpop.f32.mrb[0].mxu0
        %3753 = vmatprep.mubr.f32.mxu0 0.0
        %v3754 = vand.u32 %v3249, 4294901760
        %3755 = vmatmul.mubr.f32.gmra.mrb[0].mxu0 %v3754
        %v3756 = vpop.f32.mrb[0].mxu0
        %v3757 = vadd.f32 %v3659, %v3756
        %v3758 = vpop.f32.mrb[0].mxu0
        %3759 = vdwg.mxu0
        %3760 = vmatprep.subr.mxu0 0.0
        %v3761 = vand.u32 %v3231, 4294901760
        %3762 = vmatpush1.msra.mxu0 %v3761
        %3763 = vmatprep.subr.mxu0 0.0
        %v3764 = vand.u32 %v3232, 4294901760
        %3765 = vmatpush1.msra.mxu0 %v3764
        %3766 = vmatprep.subr.mxu0 0.0
        %v3767 = vand.u32 %v3233, 4294901760
        %3768 = vmatpush1.msra.mxu0 %v3767
        %3769 = vmatprep.subr.mxu0 0.0
        %3770 = vmatpush1.msra.mxu0 0.0
        %3771 = vmatprep.subr.mxu0 0.0
        %3772 = vmatpush1.msra.mxu0 0.0
        %3773 = vmatprep.subr.mxu0 0.0
        %3774 = vmatpush1.msra.mxu0 0.0
        %3775 = vmatprep.subr.mxu0 0.0
        %3776 = vmatpush1.msra.mxu0 0.0
        %3777 = vmatprep.subr.mxu0 0.0
        %3778 = vmatpush1.msra.mxu0 0.0
        %3779 = vmatprep.subr.mxu0 0.0
        %3780 = vmatpush1.msra.mxu0 0.0
        %3781 = vmatprep.subr.mxu0 0.0
        %3782 = vmatpush1.msra.mxu0 0.0
        %3783 = vmatprep.subr.mxu0 0.0
        %3784 = vmatpush1.msra.mxu0 0.0
        %3785 = vmatprep.subr.mxu0 0.0
        %3786 = vmatpush1.msra.mxu0 0.0
        %3787 = vmatprep.subr.mxu0 0.0
        %3788 = vmatpush1.msra.mxu0 0.0
        %3789 = vmatprep.subr.mxu0 0.0
        %3790 = vmatpush1.msra.mxu0 0.0
        %3791 = vmatprep.subr.mxu0 0.0
        %3792 = vmatpush1.msra.mxu0 0.0
        %3793 = vmatprep.subr.mxu0 0.0
        %3794 = vmatpush1.msra.mxu0 0.0
        %3795 = vmatprep.subr.mxu0 0.0
        %3796 = vmatpush1.msra.mxu0 0.0
        %3797 = vmatprep.subr.mxu0 0.0
        %3798 = vmatpush1.msra.mxu0 0.0
        %3799 = vmatprep.subr.mxu0 0.0
        %3800 = vmatpush1.msra.mxu0 0.0
        %3801 = vmatprep.subr.mxu0 0.0
        %3802 = vmatpush1.msra.mxu0 0.0
        %3803 = vmatprep.subr.mxu0 0.0
        %3804 = vmatpush1.msra.mxu0 0.0
        %3805 = vmatprep.subr.mxu0 0.0
        %3806 = vmatpush1.msra.mxu0 0.0
        %3807 = vmatprep.subr.mxu0 0.0
        %3808 = vmatpush1.msra.mxu0 0.0
        %3809 = vmatprep.subr.mxu0 0.0
        %3810 = vmatpush1.msra.mxu0 0.0
        %3811 = vmatprep.subr.mxu0 0.0
        %3812 = vmatpush1.msra.mxu0 0.0
        %3813 = vmatprep.subr.mxu0 0.0
        %3814 = vmatpush1.msra.mxu0 0.0
        %3815 = vmatprep.subr.mxu0 0.0
        %3816 = vmatpush1.msra.mxu0 0.0
        %3817 = vmatprep.subr.mxu0 0.0
        %3818 = vmatpush1.msra.mxu0 0.0
        %3819 = vmatprep.subr.mxu0 0.0
        %3820 = vmatpush1.msra.mxu0 0.0
        %3821 = vmatprep.subr.mxu0 0.0
        %3822 = vmatpush1.msra.mxu0 0.0
        %3823 = vmatprep.subr.mxu0 0.0
        %3824 = vmatpush1.msra.mxu0 0.0
        %3825 = vmatprep.subr.mxu0 0.0
        %3826 = vmatpush1.msra.mxu0 0.0
        %3827 = vmatprep.mubr.f32.mxu0 0.0
        %v3828 = vand.u32 %v3240, 4294901760
        %3829 = vmatmul.mubr.f32.gmra.mrb[0].mxu0 %v3828
        %v3830 = vpop.f32.mrb[0].mxu0
        %v3831 = vadd.f32 %v3739, %v3830
        %v3832 = vpop.f32.mrb[0].mxu0
        %3833 = vmatprep.mubr.f32.mxu0 0.0
        %v3834 = vand.u32 %v3243, 4294901760
        %3835 = vmatmul.mubr.f32.gmra.mrb[0].mxu0 %v3834
        %v3836 = vpop.f32.mrb[0].mxu0
        %v3837 = vadd.f32 %v3745, %v3836
        %v3838 = vpop.f32.mrb[0].mxu0
        %3839 = vmatprep.mubr.f32.mxu0 0.0
        %v3840 = vand.u32 %v3246, 4294901760
        %3841 = vmatmul.mubr.f32.gmra.mrb[0].mxu0 %v3840
        %v3842 = vpop.f32.mrb[0].mxu0
        %v3843 = vadd.f32 %v3751, %v3842
        %v3844 = vpop.f32.mrb[0].mxu0
        %3845 = vmatprep.mubr.f32.mxu0 0.0
        %v3846 = vand.u32 %v3249, 4294901760
        %3847 = vmatmul.mubr.f32.gmra.mrb[0].mxu0 %v3846
        %v3848 = vpop.f32.mrb[0].mxu0
        %v3849 = vadd.f32 %v3757, %v3848
        %v3850 = vpop.f32.mrb[0].mxu0
        %3851 = vdwg.mxu0
        %vm3852 = vcmask 261120
        %3853 = vst.msk [vmem:[%s217] sm:$0xff] %vm3852, %v3831
        %3854 = vst.msk [vmem:[%s217 + $0x8] sm:$0xff] %vm3852, %v3837
        %3855 = vst.msk [vmem:[%s217 + $0x10] sm:$0xff] %vm3852, %v3843
        %3856 = vst.msk [vmem:[%s217 + $0x18] sm:$0xff] %vm3852, %v3849
        %3861 = vrot.lane.b32.xlu0 %v3831, 96
        %v3862 = vpop.permute.xlu0 %3861
        %3863 = vrot.lane.b32.xlu0 %v3837, 96
        %v3864 = vpop.permute.xlu0 %3863
        %3865 = vrot.lane.b32.xlu0 %v3843, 96
        %v3866 = vpop.permute.xlu0 %3865
        %3867 = vrot.lane.b32.xlu0 %v3849, 96
        %v3868 = vpop.permute.xlu0 %3867
        %s3873 = scalar_lea.vmem %s217, 32 [#allocation3]
        %3874 = vst.msk [vmem:[%s3873] sm:$0xff] %vm3852, %v3862
        %3875 = vst.msk [vmem:[%s3873 + $0x8] sm:$0xff] %vm3852, %v3864
        %3876 = vst.msk [vmem:[%s3873 + $0x10] sm:$0xff] %vm3852, %v3866
        %3877 = vst.msk [vmem:[%s3873 + $0x18] sm:$0xff] %vm3852, %v3868
        %3878 = vrot.lane.b32.xlu0 %v3831, 64
        %v3879 = vpop.permute.xlu0 %3878
        %3880 = vrot.lane.b32.xlu0 %v3837, 64
        %v3881 = vpop.permute.xlu0 %3880
        %3882 = vrot.lane.b32.xlu0 %v3843, 64
        %v3883 = vpop.permute.xlu0 %3882
        %3884 = vrot.lane.b32.xlu0 %v3849, 64
        %v3885 = vpop.permute.xlu0 %3884
        %s3890 = scalar_lea.vmem %s217, 64 [#allocation3]
        %3891 = vst.msk [vmem:[%s3890] sm:$0xff] %vm3852, %v3879
        %3892 = vst.msk [vmem:[%s3890 + $0x8] sm:$0xff] %vm3852, %v3881
        %3893 = vst.msk [vmem:[%s3890 + $0x10] sm:$0xff] %vm3852, %v3883
        %3894 = vst.msk [vmem:[%s3890 + $0x18] sm:$0xff] %vm3852, %v3885
        %3895 = vrot.lane.b32.xlu0 %v3831, 32
        %v3896 = vpop.permute.xlu0 %3895
        %3897 = vrot.lane.b32.xlu0 %v3837, 32
        %v3898 = vpop.permute.xlu0 %3897
        %3899 = vrot.lane.b32.xlu0 %v3843, 32
        %v3900 = vpop.permute.xlu0 %3899
        %3901 = vrot.lane.b32.xlu0 %v3849, 32
        %v3902 = vpop.permute.xlu0 %3901
        %s3907 = scalar_lea.vmem %s217, 96 [#allocation3]
        %3908 = vst.msk [vmem:[%s3907] sm:$0xff] %vm3852, %v3896
        %3909 = vst.msk [vmem:[%s3907 + $0x8] sm:$0xff] %vm3852, %v3898
        %3910 = vst.msk [vmem:[%s3907 + $0x10] sm:$0xff] %vm3852, %v3900
        %3911 = vst.msk [vmem:[%s3907 + $0x18] sm:$0xff] %vm3852, %v3902
        %s3912 = sand.u32 %s126, 1
        %s3913 = scalar_lea.sflag [#allocation4], %s3912
        %s3914 = sand.u32 %s126, 1
        %s3915 = smul.addr %s3914, 128
        %s3916 = scalar_lea.vmem [#allocation3], %s3915
        // Predicated region
        $region37: #{tpu_custom_call.1} parent=31 // pred_check
          %p3917 = pneg %p136
        $region38: #{tpu_custom_call.1} parent=31 // pred_check_branch
          %3919 = sbr.rel (%p3917) target = $region40
        $region39: #{tpu_custom_call.1} parent=31 // pred_region
          %s3920 = smul.u32 4, %s22
          %s3921 = smul.u32 4, %s24
          %s3923 = ssub.s32 2048, 2048
          %3924 = vsyncadd %s3913, %s3923
          %s3925 = sadd.s32 %s23, %s3921
          %s3926 = smul.addr %s3920, 4
          %s3927 = sadd.s32 %s3925, %s3926
          %s3928 = smul.addr %s3927, 128
          %s3929 = scalar_lea.hbm %s3, %s3928
          %s3930 = sshll.u32 %s3916, 4
          %s3931 = int_to_ptr.vmem [resolvable:$true] %s3930
          %3936 = dma.vmem_to_hbm [thread:$0]  %s3931, 2048, %s3929, %s3913, 128, 128, 8
        $region40: #{tpu_custom_call.1} parent=31 // pred_fallthru
          _
      $region32: #{tpu_custom_call.1} parent=5 // pred_fallthru
        _
      %p3937 = scmp.le.s32.totalorder 2, %s12
      // Predicated region
      $region41: #{tpu_custom_call.1} parent=5 // pred_check
        %p3938 = pneg %p3937
      $region42: #{tpu_custom_call.1} parent=5 // pred_check_branch
        %3940 = sbr.rel (%p3938) target = $region44
      $region43: #{tpu_custom_call.1} parent=5 // pred_region
        %s3941 = ssub.s32 %s12, 2
        // Predicated region
        $region45: #{tpu_custom_call.1} parent=43 // pred_check
          %p3942 = pneg %p142
        $region46: #{tpu_custom_call.1} parent=43 // pred_check_branch
          %3944 = sbr.rel (%p3942) target = $region48
        $region47: #{tpu_custom_call.1} parent=43 // pred_region
          %s3945 = sand.u32 %s127, 1
          %s3946 = scalar_lea.sflag [#allocation4], %s3945
          %s3947 = sand.u32 %s127, 1
          %s3948 = smul.addr %s3947, 128
          %s3949 = scalar_lea.vmem [#allocation3], %s3948
          %3950 = dma.done %s3946, 2048
        $region48: #{tpu_custom_call.1} parent=43 // pred_fallthru
          _
      $region44: #{tpu_custom_call.1} parent=5 // pred_fallthru
        _
    $region6: #{tpu_custom_call.1} parent=1 // loop_footer
      %s16 = sadd.s32 1, %s12
    $region7: #{tpu_custom_call.1} parent=1 // loop_footer_branch
      %11 = sbr.rel target = $region3
    $region8: #{tpu_custom_call.1} parent=1 // loop_exit
      _
    %3951 = vsyncpa [#allocation4], 1
    %s3952 = scalar_lea.sflag [#allocation4], 1
    %3953 = vsyncpa %s3952, 1

</llo_original>
